<compile_context>
chip_gen: v7x
topology: tpu7x:2x2x1
jax: 0.10.0
libtpu: 0.0.40
codegen_flags: <defaults>
</compile_context>

<pallas_src>
import math
from functools import partial

import jax
import jax.numpy as jnp
from jax.experimental import pallas as pl
from jax.experimental.pallas import tpu as pltpu


def _mha_kernel(num_head, d_k,
                q_ref, k_in_ref, v_in_ref, mask_ref,
                wq_ref, bq_ref, wkv_ref, bkv_ref, wo_ref, bo_ref,
                o_ref,
                k_heads, v_heads, q_heads, ctx_ref):
    """One (batch, query-tile) grid step.

    Grid = (B, T1 // TQ) with the t axis innermost / "arbitrary".  The K/V
    projection runs only at t == 0 and is cached head-major in persistent
    VMEM scratch, so query tiles t > 0 reuse it.
    """
    D = num_head * d_k
    cdt = q_ref.dtype

    # ---- K/V projection: once per batch element, cached across query tiles.
    @pl.when(pl.program_id(1) == 0)
    def _():
        k_full = (jnp.dot(k_in_ref[0], wkv_ref[:, :D],
                          preferred_element_type=jnp.float32)
                  + bkv_ref[:, :D]).astype(cdt)                      # (T2, D)
        v_full = (jnp.dot(v_in_ref[0], wkv_ref[:, D:],
                          preferred_element_type=jnp.float32)
                  + bkv_ref[:, D:]).astype(cdt)                      # (T2, D)
        # One-time head-major relayout of the cached K/V (paid once per batch
        # element instead of once per query tile / per head matmul).
        for h in range(num_head):
            lo = h * d_k
            k_heads[h] = k_full[:, lo:lo + d_k]
            v_heads[h] = v_full[:, lo:lo + d_k]

    # ---- Q projection (1/sqrt(d_k) already folded into Wq / bq).
    q = (jnp.dot(q_ref[0], wq_ref[...], preferred_element_type=jnp.float32)
         + bq_ref[...]).astype(cdt)                                  # (TQ, D)
    for h in range(num_head):
        q_heads[h] = q[:, h * d_k:(h + 1) * d_k]

    # ---- Mask processed once per step (shared by every head).
    keep = mask_ref[0].astype(jnp.int32) != 0                        # (M, T2)
    neg_bias = jnp.where(keep, 0.0, -1e30).astype(jnp.float32)

    # ---- Attention, batched over heads: one MXU stream per matmul.
    q3 = q_heads[...]                                                # (H, TQ, d_k)
    k3 = k_heads[...]                                                # (H, T2, d_k)
    v3 = v_heads[...]                                                # (H, T2, d_k)
    scores = jnp.einsum("hqd,hkd->hqk", q3, k3,
                        preferred_element_type=jnp.float32)          # (H, TQ, T2)
    scores = scores + neg_bias[None]
    s_max = jnp.max(scores, axis=-1, keepdims=True)
    e = jnp.exp(scores - s_max)
    denom = jnp.sum(e, axis=-1, keepdims=True)
    attn = e / denom                                                 # exact reciprocal
    attn = jnp.where(keep[None], attn, 0.0)                          # masked_fill(mask, 0.0)
    ctx3 = jnp.einsum("hqk,hkd->hqd", attn.astype(cdt), v3,
                      preferred_element_type=jnp.float32)            # (H, TQ, d_k)

    # ---- Concatenate heads into a (TQ, D) slab, then output projection.
    for h in range(num_head):
        ctx_ref[:, h * d_k:(h + 1) * d_k] = ctx3[h]
    out = (jnp.dot(ctx_ref[...].astype(cdt), wo_ref[...],
                   preferred_element_type=jnp.float32) + bo_ref[...])
    o_ref[0] = out.astype(o_ref.dtype)


def _pick_tq(t1, target=128):
    """Largest query-tile <= target that divides T1 and is a multiple of 8.

    Falls back to the full T1 (a single block, always legal) if no aligned
    divisor exists (e.g. prime T1).
    """
    if t1 <= target:
        return t1
    for step in (128, 8):                         # prefer 128-aligned tiles
        start = (min(target, t1) // step) * step
        for tq in range(start, step - 1, -step):
            if tq > 0 and t1 % tq == 0:
                return tq
    return t1


def multi_headed_attention(query, key, value, mask, params, num_head, *, max_tq=128):
    """Pallas MultiHeadedAttention forward (dropout = identity / eval mode).

    query: (B, T1, D); key/value: (B, T2, D); mask: None, (B, 1, T2) or
    (B, T1, T2) with nonzero = keep.  params = (wq, bq, wk, bk, wv, bv, wo, bo),
    w*: (D, D) laid out (in, out), b*: (1, D).
    """
    B, T1, D = query.shape
    T2 = key.shape[1]
    assert value.shape[1] == T2 and value.shape[2] == D
    assert D % num_head == 0
    d_k = D // num_head
    cdt = query.dtype

    if mask is None:
        mask = jnp.ones((B, 1, T2), jnp.int8)
    M = mask.shape[1]
    assert M in (1, T1)

    wq, bq, wk, bk, wv, bv, wo, bo = params
    scale = 1.0 / math.sqrt(d_k)
    # Fold the score scale into the Q projection; run weights at compute dtype,
    # keep biases f32 (dot accumulation is f32).
    wq_s = (wq * scale).astype(cdt)
    bq_s = (bq * scale).astype(jnp.float32)
    wkv = jnp.concatenate([wk, wv], axis=1).astype(cdt)              # (D, 2D)
    bkv = jnp.concatenate([bk, bv], axis=1).astype(jnp.float32)      # (1, 2D)
    wo_c = wo.astype(cdt)
    bo_f = bo.astype(jnp.float32)

    tq = _pick_tq(T1, max_tq)
    grid = (B, T1 // tq)

    # int8 mask whenever the mask block tiling is safely aligned for a packed
    # dtype (always true for padding masks and production 32-aligned tiles);
    # otherwise fall back to int32.
    use_i8 = (M == 1) or (tq == T1) or (tq % 32 == 0)
    mask_arr = (mask != 0).astype(jnp.int8 if use_i8 else jnp.int32)

    q_spec = pl.BlockSpec((1, tq, D), lambda b, t: (b, t, 0))
    kv_spec = pl.BlockSpec((1, T2, D), lambda b, t: (b, 0, 0))
    if M == 1:
        mask_spec = pl.BlockSpec((1, 1, T2), lambda b, t: (b, 0, 0))
    else:
        mask_spec = pl.BlockSpec((1, tq, T2), lambda b, t: (b, t, 0))
    out_spec = pl.BlockSpec((1, tq, D), lambda b, t: (b, t, 0))

    scratch = [
        pltpu.VMEM((num_head, T2, d_k), cdt),      # cached K, head-major (persists over t)
        pltpu.VMEM((num_head, T2, d_k), cdt),      # cached V, head-major (persists over t)
        pltpu.VMEM((num_head, tq, d_k), cdt),      # per-step head-major Q
        pltpu.VMEM((tq, D), jnp.float32),          # head-concat slab
    ]
    cparams = pltpu.CompilerParams(
        # b parallel (megacore on v7x); t MUST be arbitrary so the KV cache
        # scratch is valid across query tiles.
        dimension_semantics=("parallel", "arbitrary"),
        vmem_limit_bytes=64 * 1024 * 1024,
    )

    kernel = partial(_mha_kernel, num_head, d_k)
    out_shape = jax.ShapeDtypeStruct((B, T1, D), query.dtype)

    def _run(single_buffer_weights):
        if single_buffer_weights:
            wspec = lambda s: pl.BlockSpec(s, lambda b, t: (0, 0),
                                           pipeline_mode=pl.Buffered(1))
        else:
            wspec = lambda s: pl.BlockSpec(s, lambda b, t: (0, 0))
        out = pl.pallas_call(
            kernel,
            out_shape=out_shape,
            grid_spec=pltpu.PrefetchScalarGridSpec(
                num_scalar_prefetch=0,
                grid=grid,
                in_specs=[
                    q_spec, kv_spec, kv_spec, mask_spec,
                    wspec((D, D)), wspec((1, D)),            # Wq (scaled), bq
                    wspec((D, 2 * D)), wspec((1, 2 * D)),    # packed W_kv, b_kv
                    wspec((D, D)), wspec((1, D)),            # Wo, bo
                ],
                out_specs=out_spec,
                scratch_shapes=scratch,
            ),
            compiler_params=cparams,
        )(query, key, value, mask_arr, wq_s, bq_s, wkv, bkv, wo_c, bo_f)
        return jax.block_until_ready(out)

    try:
        # Constant-index weights: single-buffered (halves their VMEM residency).
        return _run(True)
    except Exception:
        # Fallback for jax versions / backends without pl.Buffered(1) support.
        return _run(False)


def _reference_mha(query, key, value, mask, params, num_head):
    """Plain-JAX reference mirroring the PyTorch forward (eval-mode dropout)."""
    wq, bq, wk, bk, wv, bv, wo, bo = params
    B, T1, D = query.shape
    d_k = D // num_head
    q = (query @ wq + bq).reshape(B, T1, num_head, d_k).transpose(0, 2, 1, 3)
    k = (key @ wk + bk).reshape(B, -1, num_head, d_k).transpose(0, 2, 1, 3)
    v = (value @ wv + bv).reshape(B, -1, num_head, d_k).transpose(0, 2, 1, 3)
    scores = jnp.einsum("bhqd,bhkd->bhqk", q, k) / math.sqrt(d_k)
    m = (mask[:, None, :, :] == 0)
    scores = jnp.where(m, -1e30, scores)
    attn = jax.nn.softmax(scores, axis=-1)
    attn = jnp.where(m, 0.0, attn)
    x = jnp.einsum("bhqk,bhkd->bhqd", attn, v)
    x = x.transpose(0, 2, 1, 3).reshape(B, T1, D)
    return x @ wo + bo


if __name__ == "__main__":
    # Small shapes consistent with the module: batch=2, feat_dim=32, heads=4.
    B, D, H = 2, 32, 4
    T1, T2 = 64, 16          # T1 tiled with tq=32 -> 2 query tiles per batch
    f32 = jnp.float32

    rng = jax.random.PRNGKey(0)
    ks = jax.random.split(rng, 12)

    x = jax.random.normal(ks[0], (B, T1, D), f32)        # self-attention input
    q_in = jax.random.normal(ks[1], (B, T1, D), f32)     # cross-attention query
    mem = jax.random.normal(ks[2], (B, T2, D), f32)      # encoder memory (key==value)
    v_other = jax.random.normal(ks[3], (B, T2, D), f32)  # distinct value tensor

    bound = 1.0 / math.sqrt(D)
    init_w = lambda k: jax.random.uniform(k, (D, D), f32, minval=-bound, maxval=bound)
    init_b = lambda k: jax.random.uniform(k, (1, D), f32, minval=-bound, maxval=bound)
    params = (init_w(ks[4]), init_b(ks[5]), init_w(ks[6]), init_b(ks[7]),
              init_w(ks[8]), init_b(ks[9]), init_w(ks[10]), init_b(ks[11]))

    # Masks (nonzero = keep): cross-attention padding mask and a banded
    # (B, T1, T1) self-attention mask with per-batch padding.
    pad_mask = jnp.ones((B, 1, T2), jnp.int32).at[1, 0, T2 - 5:].set(0)
    band = jnp.tril(jnp.ones((T1, T1), jnp.int32), k=1)[None, :, :]
    self_pad = jnp.ones((B, 1, T1), jnp.int32).at[1, 0, T1 - 7:].set(0)
    self_mask = (band * self_pad).astype(jnp.int32)               # (B, T1, T1)

    # Test 1: self-attention, f32, (B, T1, T1) mask, query axis tiled (tq=32)
    # so the cached K/V projection is reused across query tiles.
    out1 = jax.block_until_ready(
        multi_headed_attention(x, x, x, self_mask, params, H, max_tq=32))
    ref1 = _reference_mha(x, x, x, self_mask, params, H)
    assert out1.shape == (B, T1, D)
    assert jnp.allclose(out1, ref1, atol=1e-2, rtol=1e-2), "self-attn f32 mismatch"

    # Test 2: wenet-style cross-attention, bf16 compute, (B, 1, T2) padding mask,
    # query axis tiled.
    q_bf = q_in.astype(jnp.bfloat16)
    mem_bf = mem.astype(jnp.bfloat16)
    out2 = jax.block_until_ready(
        multi_headed_attention(q_bf, mem_bf, mem_bf, pad_mask, params, H, max_tq=32))
    ref2 = _reference_mha(q_in, mem, mem, pad_mask, params, H)
    assert out2.dtype == jnp.bfloat16
    assert jnp.allclose(out2.astype(f32), ref2, atol=8e-2, rtol=8e-2), \
        "cross-attn bf16 mismatch"

    # Test 3: distinct key / value tensors, f32, mask=None path, untiled query axis.
    out3 = jax.block_until_ready(
        multi_headed_attention(q_in, mem, v_other, None, params, H))
    ref3 = _reference_mha(q_in, mem, v_other, jnp.ones((B, 1, T2), jnp.int32),
                          params, H)
    assert jnp.allclose(out3, ref3, atol=1e-2, rtol=1e-2), "k!=v / mask=None mismatch"

    print("KERNEL_OK")
</pallas_src>

<mosaic_0001>
module attributes {stable_mosaic.version = 11 : i64} {
  func.func @_mha_kernel(%arg0: i32, %arg1: i32, %arg2: memref<1x32x32xf32, #tpu.memory_space<vmem>>, %arg3: memref<1x64x32xf32, #tpu.memory_space<vmem>>, %arg4: memref<1x64x32xf32, #tpu.memory_space<vmem>>, %arg5: memref<1x32x64xi8, #tpu.memory_space<vmem>>, %arg6: memref<32x32xf32, #tpu.memory_space<vmem>>, %arg7: memref<1x32xf32, #tpu.memory_space<vmem>>, %arg8: memref<32x64xf32, #tpu.memory_space<vmem>>, %arg9: memref<1x64xf32, #tpu.memory_space<vmem>>, %arg10: memref<32x32xf32, #tpu.memory_space<vmem>>, %arg11: memref<1x32xf32, #tpu.memory_space<vmem>>, %arg12: memref<1x32x32xf32, #tpu.memory_space<vmem>>, %arg13: memref<4x64x8xf32, #tpu.memory_space<vmem>>, %arg14: memref<4x64x8xf32, #tpu.memory_space<vmem>>, %arg15: memref<4x32x8xf32, #tpu.memory_space<vmem>>, %arg16: memref<32x32xf32, #tpu.memory_space<vmem>>) attributes {dimension_semantics = [#tpu.dimension_semantics<parallel>, #tpu.dimension_semantics<arbitrary>], iteration_bounds = array<i64: 2, 2>, scalar_prefetch = 0 : i64, scratch_operands = 4 : i64, tpu.core_type = #tpu.core_type<tc>, window_params = [{transform_indices = @transform_0, window_bounds = array<i64: 1, 32, 32>}, {transform_indices = @transform_1, window_bounds = array<i64: 1, 64, 32>}, {transform_indices = @transform_2, window_bounds = array<i64: 1, 64, 32>}, {transform_indices = @transform_3, window_bounds = array<i64: 1, 32, 64>}, {pipeline_mode = #tpu.pipeline_mode<synchronous>, transform_indices = @transform_4, window_bounds = array<i64: 32, 32>}, {pipeline_mode = #tpu.pipeline_mode<synchronous>, transform_indices = @transform_5, window_bounds = array<i64: 1, 32>}, {pipeline_mode = #tpu.pipeline_mode<synchronous>, transform_indices = @transform_6, window_bounds = array<i64: 32, 64>}, {pipeline_mode = #tpu.pipeline_mode<synchronous>, transform_indices = @transform_7, window_bounds = array<i64: 1, 64>}, {pipeline_mode = #tpu.pipeline_mode<synchronous>, transform_indices = @transform_8, window_bounds = array<i64: 32, 32>}, {pipeline_mode = #tpu.pipeline_mode<synchronous>, transform_indices = @transform_9, window_bounds = array<i64: 1, 32>}, {transform_indices = @transform_10, window_bounds = array<i64: 1, 32, 32>}]} {
    %c0_i32 = arith.constant 0 : i32
    %0 = arith.cmpi eq, %arg1, %c0_i32 : i32
    %1 = arith.extui %0 : i1 to i32
    %c0_i32_0 = arith.constant 0 : i32
    %2 = arith.cmpi ne, %1, %c0_i32_0 : i32
    scf.if %2 {
      %c0_51 = arith.constant 0 : index
      %c0_52 = arith.constant 0 : index
      %c0_53 = arith.constant 0 : index
      %77 = vector.load %arg3[%c0_51, %c0_52, %c0_53] : memref<1x64x32xf32, #tpu.memory_space<vmem>>, vector<1x64x32xf32>
      %78 = vector.shape_cast %77 : vector<1x64x32xf32> to vector<64x32xf32>
      %c0_54 = arith.constant 0 : index
      %c0_55 = arith.constant 0 : index
      %79 = vector.load %arg8[%c0_54, %c0_55] : memref<32x64xf32, #tpu.memory_space<vmem>>, vector<32x32xf32>
      %cst_56 = arith.constant dense<0.000000e+00> : vector<64x32xf32>
      %80 = tpu.matmul %78, %79, %cst_56 {dimension_numbers = #tpu.dot_dimension_numbers<[1], [0], [0], [1], [0, 0, 1, 1], [], []>} : vector<64x32xf32>, vector<32x32xf32>, vector<64x32xf32> -> vector<64x32xf32>
      %c0_57 = arith.constant 0 : index
      %c0_58 = arith.constant 0 : index
      %81 = vector.load %arg9[%c0_57, %c0_58] : memref<1x64xf32, #tpu.memory_space<vmem>>, vector<1x32xf32>
      %82 = vector.broadcast %81 : vector<1x32xf32> to vector<64x32xf32>
      %83 = arith.addf %80, %82 : vector<64x32xf32>
      %c0_59 = arith.constant 0 : index
      %c0_60 = arith.constant 0 : index
      %c0_61 = arith.constant 0 : index
      %84 = vector.load %arg4[%c0_59, %c0_60, %c0_61] : memref<1x64x32xf32, #tpu.memory_space<vmem>>, vector<1x64x32xf32>
      %85 = vector.shape_cast %84 : vector<1x64x32xf32> to vector<64x32xf32>
      %c0_62 = arith.constant 0 : index
      %c32 = arith.constant 32 : index
      %86 = vector.load %arg8[%c0_62, %c32] : memref<32x64xf32, #tpu.memory_space<vmem>>, vector<32x32xf32>
      %cst_63 = arith.constant dense<0.000000e+00> : vector<64x32xf32>
      %87 = tpu.matmul %85, %86, %cst_63 {dimension_numbers = #tpu.dot_dimension_numbers<[1], [0], [0], [1], [0, 0, 1, 1], [], []>} : vector<64x32xf32>, vector<32x32xf32>, vector<64x32xf32> -> vector<64x32xf32>
      %c0_64 = arith.constant 0 : index
      %c32_65 = arith.constant 32 : index
      %88 = vector.load %arg9[%c0_64, %c32_65] : memref<1x64xf32, #tpu.memory_space<vmem>>, vector<1x32xf32>
      %89 = vector.broadcast %88 : vector<1x32xf32> to vector<64x32xf32>
      %90 = arith.addf %87, %89 : vector<64x32xf32>
      %91 = vector.extract_strided_slice %83 {offsets = [0, 0], sizes = [64, 8], strides = [1, 1]} : vector<64x32xf32> to vector<64x8xf32>
      %c0_66 = arith.constant 0 : index
      %c0_67 = arith.constant 0 : index
      %c0_68 = arith.constant 0 : index
      %92 = vector.load %arg13[%c0_66, %c0_67, %c0_68] : memref<4x64x8xf32, #tpu.memory_space<vmem>>, vector<1x64x8xf32>
      %93 = vector.shape_cast %92 : vector<1x64x8xf32> to vector<64x8xf32>
      %94 = vector.shape_cast %91 : vector<64x8xf32> to vector<1x64x8xf32>
      tpu.vector_store %arg13[%c0_66, %c0_67, %c0_68], %94 {strides = array<i32>} : memref<4x64x8xf32, #tpu.memory_space<vmem>>, vector<1x64x8xf32>,
      %95 = vector.extract_strided_slice %90 {offsets = [0, 0], sizes = [64, 8], strides = [1, 1]} : vector<64x32xf32> to vector<64x8xf32>
      %c0_69 = arith.constant 0 : index
      %c0_70 = arith.constant 0 : index
      %c0_71 = arith.constant 0 : index
      %96 = vector.load %arg14[%c0_69, %c0_70, %c0_71] : memref<4x64x8xf32, #tpu.memory_space<vmem>>, vector<1x64x8xf32>
      %97 = vector.shape_cast %96 : vector<1x64x8xf32> to vector<64x8xf32>
      %98 = vector.shape_cast %95 : vector<64x8xf32> to vector<1x64x8xf32>
      tpu.vector_store %arg14[%c0_69, %c0_70, %c0_71], %98 {strides = array<i32>} : memref<4x64x8xf32, #tpu.memory_space<vmem>>, vector<1x64x8xf32>,
      %99 = vector.extract_strided_slice %83 {offsets = [0, 8], sizes = [64, 8], strides = [1, 1]} : vector<64x32xf32> to vector<64x8xf32>
      %c1_72 = arith.constant 1 : index
      %c0_73 = arith.constant 0 : index
      %c0_74 = arith.constant 0 : index
      %100 = vector.load %arg13[%c1_72, %c0_73, %c0_74] : memref<4x64x8xf32, #tpu.memory_space<vmem>>, vector<1x64x8xf32>
      %101 = vector.shape_cast %100 : vector<1x64x8xf32> to vector<64x8xf32>
      %102 = vector.shape_cast %99 : vector<64x8xf32> to vector<1x64x8xf32>
      tpu.vector_store %arg13[%c1_72, %c0_73, %c0_74], %102 {strides = array<i32>} : memref<4x64x8xf32, #tpu.memory_space<vmem>>, vector<1x64x8xf32>,
      %103 = vector.extract_strided_slice %90 {offsets = [0, 8], sizes = [64, 8], strides = [1, 1]} : vector<64x32xf32> to vector<64x8xf32>
      %c1_75 = arith.constant 1 : index
      %c0_76 = arith.constant 0 : index
      %c0_77 = arith.constant 0 : index
      %104 = vector.load %arg14[%c1_75, %c0_76, %c0_77] : memref<4x64x8xf32, #tpu.memory_space<vmem>>, vector<1x64x8xf32>
      %105 = vector.shape_cast %104 : vector<1x64x8xf32> to vector<64x8xf32>
      %106 = vector.shape_cast %103 : vector<64x8xf32> to vector<1x64x8xf32>
      tpu.vector_store %arg14[%c1_75, %c0_76, %c0_77], %106 {strides = array<i32>} : memref<4x64x8xf32, #tpu.memory_space<vmem>>, vector<1x64x8xf32>,
      %107 = vector.extract_strided_slice %83 {offsets = [0, 16], sizes = [64, 8], strides = [1, 1]} : vector<64x32xf32> to vector<64x8xf32>
      %c2_78 = arith.constant 2 : index
      %c0_79 = arith.constant 0 : index
      %c0_80 = arith.constant 0 : index
      %108 = vector.load %arg13[%c2_78, %c0_79, %c0_80] : memref<4x64x8xf32, #tpu.memory_space<vmem>>, vector<1x64x8xf32>
      %109 = vector.shape_cast %108 : vector<1x64x8xf32> to vector<64x8xf32>
      %110 = vector.shape_cast %107 : vector<64x8xf32> to vector<1x64x8xf32>
      tpu.vector_store %arg13[%c2_78, %c0_79, %c0_80], %110 {strides = array<i32>} : memref<4x64x8xf32, #tpu.memory_space<vmem>>, vector<1x64x8xf32>,
      %111 = vector.extract_strided_slice %90 {offsets = [0, 16], sizes = [64, 8], strides = [1, 1]} : vector<64x32xf32> to vector<64x8xf32>
      %c2_81 = arith.constant 2 : index
      %c0_82 = arith.constant 0 : index
      %c0_83 = arith.constant 0 : index
      %112 = vector.load %arg14[%c2_81, %c0_82, %c0_83] : memref<4x64x8xf32, #tpu.memory_space<vmem>>, vector<1x64x8xf32>
      %113 = vector.shape_cast %112 : vector<1x64x8xf32> to vector<64x8xf32>
      %114 = vector.shape_cast %111 : vector<64x8xf32> to vector<1x64x8xf32>
      tpu.vector_store %arg14[%c2_81, %c0_82, %c0_83], %114 {strides = array<i32>} : memref<4x64x8xf32, #tpu.memory_space<vmem>>, vector<1x64x8xf32>,
      %115 = vector.extract_strided_slice %83 {offsets = [0, 24], sizes = [64, 8], strides = [1, 1]} : vector<64x32xf32> to vector<64x8xf32>
      %c3_84 = arith.constant 3 : index
      %c0_85 = arith.constant 0 : index
      %c0_86 = arith.constant 0 : index
      %116 = vector.load %arg13[%c3_84, %c0_85, %c0_86] : memref<4x64x8xf32, #tpu.memory_space<vmem>>, vector<1x64x8xf32>
      %117 = vector.shape_cast %116 : vector<1x64x8xf32> to vector<64x8xf32>
      %118 = vector.shape_cast %115 : vector<64x8xf32> to vector<1x64x8xf32>
      tpu.vector_store %arg13[%c3_84, %c0_85, %c0_86], %118 {strides = array<i32>} : memref<4x64x8xf32, #tpu.memory_space<vmem>>, vector<1x64x8xf32>,
      %119 = vector.extract_strided_slice %90 {offsets = [0, 24], sizes = [64, 8], strides = [1, 1]} : vector<64x32xf32> to vector<64x8xf32>
      %c3_87 = arith.constant 3 : index
      %c0_88 = arith.constant 0 : index
      %c0_89 = arith.constant 0 : index
      %120 = vector.load %arg14[%c3_87, %c0_88, %c0_89] : memref<4x64x8xf32, #tpu.memory_space<vmem>>, vector<1x64x8xf32>
      %121 = vector.shape_cast %120 : vector<1x64x8xf32> to vector<64x8xf32>
      %122 = vector.shape_cast %119 : vector<64x8xf32> to vector<1x64x8xf32>
      tpu.vector_store %arg14[%c3_87, %c0_88, %c0_89], %122 {strides = array<i32>} : memref<4x64x8xf32, #tpu.memory_space<vmem>>, vector<1x64x8xf32>,
    } else {
    }
    %c0 = arith.constant 0 : index
    %c0_1 = arith.constant 0 : index
    %c0_2 = arith.constant 0 : index
    %3 = vector.load %arg2[%c0, %c0_1, %c0_2] : memref<1x32x32xf32, #tpu.memory_space<vmem>>, vector<1x32x32xf32>
    %4 = vector.shape_cast %3 : vector<1x32x32xf32> to vector<32x32xf32>
    %c0_3 = arith.constant 0 : index
    %c0_4 = arith.constant 0 : index
    %5 = vector.load %arg6[%c0_3, %c0_4] : memref<32x32xf32, #tpu.memory_space<vmem>>, vector<32x32xf32>
    %cst = arith.constant dense<0.000000e+00> : vector<32x32xf32>
    %6 = tpu.matmul %4, %5, %cst {dimension_numbers = #tpu.dot_dimension_numbers<[1], [0], [0], [1], [0, 0, 1, 1], [], []>} : vector<32x32xf32>, vector<32x32xf32>, vector<32x32xf32> -> vector<32x32xf32>
    %c0_5 = arith.constant 0 : index
    %c0_6 = arith.constant 0 : index
    %7 = vector.load %arg7[%c0_5, %c0_6] : memref<1x32xf32, #tpu.memory_space<vmem>>, vector<1x32xf32>
    %8 = vector.broadcast %7 : vector<1x32xf32> to vector<32x32xf32>
    %9 = arith.addf %6, %8 : vector<32x32xf32>
    %10 = vector.extract_strided_slice %9 {offsets = [0, 0], sizes = [32, 8], strides = [1, 1]} : vector<32x32xf32> to vector<32x8xf32>
    %c0_7 = arith.constant 0 : index
    %c0_8 = arith.constant 0 : index
    %c0_9 = arith.constant 0 : index
    %11 = vector.load %arg15[%c0_7, %c0_8, %c0_9] : memref<4x32x8xf32, #tpu.memory_space<vmem>>, vector<1x32x8xf32>
    %12 = vector.shape_cast %11 : vector<1x32x8xf32> to vector<32x8xf32>
    %13 = vector.shape_cast %10 : vector<32x8xf32> to vector<1x32x8xf32>
    tpu.vector_store %arg15[%c0_7, %c0_8, %c0_9], %13 {strides = array<i32>} : memref<4x32x8xf32, #tpu.memory_space<vmem>>, vector<1x32x8xf32>,
    %14 = vector.extract_strided_slice %9 {offsets = [0, 8], sizes = [32, 8], strides = [1, 1]} : vector<32x32xf32> to vector<32x8xf32>
    %c1 = arith.constant 1 : index
    %c0_10 = arith.constant 0 : index
    %c0_11 = arith.constant 0 : index
    %15 = vector.load %arg15[%c1, %c0_10, %c0_11] : memref<4x32x8xf32, #tpu.memory_space<vmem>>, vector<1x32x8xf32>
    %16 = vector.shape_cast %15 : vector<1x32x8xf32> to vector<32x8xf32>
    %17 = vector.shape_cast %14 : vector<32x8xf32> to vector<1x32x8xf32>
    tpu.vector_store %arg15[%c1, %c0_10, %c0_11], %17 {strides = array<i32>} : memref<4x32x8xf32, #tpu.memory_space<vmem>>, vector<1x32x8xf32>,
    %18 = vector.extract_strided_slice %9 {offsets = [0, 16], sizes = [32, 8], strides = [1, 1]} : vector<32x32xf32> to vector<32x8xf32>
    %c2 = arith.constant 2 : index
    %c0_12 = arith.constant 0 : index
    %c0_13 = arith.constant 0 : index
    %19 = vector.load %arg15[%c2, %c0_12, %c0_13] : memref<4x32x8xf32, #tpu.memory_space<vmem>>, vector<1x32x8xf32>
    %20 = vector.shape_cast %19 : vector<1x32x8xf32> to vector<32x8xf32>
    %21 = vector.shape_cast %18 : vector<32x8xf32> to vector<1x32x8xf32>
    tpu.vector_store %arg15[%c2, %c0_12, %c0_13], %21 {strides = array<i32>} : memref<4x32x8xf32, #tpu.memory_space<vmem>>, vector<1x32x8xf32>,
    %22 = vector.extract_strided_slice %9 {offsets = [0, 24], sizes = [32, 8], strides = [1, 1]} : vector<32x32xf32> to vector<32x8xf32>
    %c3 = arith.constant 3 : index
    %c0_14 = arith.constant 0 : index
    %c0_15 = arith.constant 0 : index
    %23 = vector.load %arg15[%c3, %c0_14, %c0_15] : memref<4x32x8xf32, #tpu.memory_space<vmem>>, vector<1x32x8xf32>
    %24 = vector.shape_cast %23 : vector<1x32x8xf32> to vector<32x8xf32>
    %25 = vector.shape_cast %22 : vector<32x8xf32> to vector<1x32x8xf32>
    tpu.vector_store %arg15[%c3, %c0_14, %c0_15], %25 {strides = array<i32>} : memref<4x32x8xf32, #tpu.memory_space<vmem>>, vector<1x32x8xf32>,
    %c0_16 = arith.constant 0 : index
    %c0_17 = arith.constant 0 : index
    %c0_18 = arith.constant 0 : index
    %26 = vector.load %arg5[%c0_16, %c0_17, %c0_18] : memref<1x32x64xi8, #tpu.memory_space<vmem>>, vector<1x32x64xi8>
    %27 = vector.shape_cast %26 : vector<1x32x64xi8> to vector<32x64xi8>
    %28 = arith.extsi %27 : vector<32x64xi8> to vector<32x64xi32>
    %c0_i32_19 = arith.constant 0 : i32
    %29 = vector.broadcast %c0_i32_19 : i32 to vector<32x64xi32>
    %30 = arith.cmpi ne, %28, %29 : vector<32x64xi32>
    %cst_20 = arith.constant 0.000000e+00 : f32
    %cst_21 = arith.constant -1.000000e+30 : f32
    %31 = vector.broadcast %cst_20 : f32 to vector<32x64xf32>
    %32 = vector.broadcast %cst_21 : f32 to vector<32x64xf32>
    %33 = arith.select %30, %31, %32 : vector<32x64xi1>, vector<32x64xf32>
    %c0_22 = arith.constant 0 : index
    %c0_23 = arith.constant 0 : index
    %c0_24 = arith.constant 0 : index
    %34 = vector.load %arg15[%c0_22, %c0_23, %c0_24] : memref<4x32x8xf32, #tpu.memory_space<vmem>>, vector<4x32x8xf32>
    %c0_25 = arith.constant 0 : index
    %c0_26 = arith.constant 0 : index
    %c0_27 = arith.constant 0 : index
    %35 = vector.load %arg13[%c0_25, %c0_26, %c0_27] : memref<4x64x8xf32, #tpu.memory_space<vmem>>, vector<4x64x8xf32>
    %c0_28 = arith.constant 0 : index
    %c0_29 = arith.constant 0 : index
    %c0_30 = arith.constant 0 : index
    %36 = vector.load %arg14[%c0_28, %c0_29, %c0_30] : memref<4x64x8xf32, #tpu.memory_space<vmem>>, vector<4x64x8xf32>
    "tpu.trace_start"() <{level = 10 : i32, message = "hqd,hkd->hqk"}> : () -> ()
    %cst_31 = arith.constant dense<0.000000e+00> : vector<4x32x64xf32>
    %37 = tpu.matmul %34, %35, %cst_31 {dimension_numbers = #tpu.dot_dimension_numbers<[2], [2], [1], [1], [0, 0, 0, 1, 1, 1], [0], [0]>} : vector<4x32x8xf32>, vector<4x64x8xf32>, vector<4x32x64xf32> -> vector<4x32x64xf32>
    "tpu.trace_stop"() : () -> ()
    %38 = vector.shape_cast %33 : vector<32x64xf32> to vector<1x32x64xf32>
    %39 = vector.broadcast %38 : vector<1x32x64xf32> to vector<4x32x64xf32>
    %40 = arith.addf %37, %39 : vector<4x32x64xf32>
    %cst_32 = arith.constant dense<0xFF800000> : vector<4x32xf32>
    %41 = vector.multi_reduction <maximumf>, %40, %cst_32 [2] : vector<4x32x64xf32> to vector<4x32xf32>
    %42 = vector.shape_cast %41 : vector<4x32xf32> to vector<4x32x1xf32>
    %43 = vector.broadcast %42 : vector<4x32x1xf32> to vector<4x32x64xf32>
    %44 = arith.subf %40, %43 : vector<4x32x64xf32>
    %45 = math.exp %44 : vector<4x32x64xf32>
    %cst_33 = arith.constant dense<0.000000e+00> : vector<4x32xf32>
    %46 = vector.multi_reduction <add>, %45, %cst_33 [2] : vector<4x32x64xf32> to vector<4x32xf32>
    %47 = vector.shape_cast %46 : vector<4x32xf32> to vector<4x32x1xf32>
    %48 = vector.broadcast %47 : vector<4x32x1xf32> to vector<4x32x64xf32>
    %49 = arith.divf %45, %48 : vector<4x32x64xf32>
    %50 = vector.shape_cast %30 : vector<32x64xi1> to vector<1x32x64xi1>
    %cst_34 = arith.constant 0.000000e+00 : f32
    %51 = vector.shape_cast %50 : vector<1x32x64xi1> to vector<1x32x64xi1>
    %52 = vector.broadcast %51 : vector<1x32x64xi1> to vector<4x32x64xi1>
    %53 = vector.broadcast %cst_34 : f32 to vector<4x32x64xf32>
    %54 = arith.select %52, %49, %53 : vector<4x32x64xi1>, vector<4x32x64xf32>
    "tpu.trace_start"() <{level = 10 : i32, message = "hqk,hkd->hqd"}> : () -> ()
    %cst_35 = arith.constant dense<0.000000e+00> : vector<4x32x8xf32>
    %55 = tpu.matmul %54, %36, %cst_35 {dimension_numbers = #tpu.dot_dimension_numbers<[2], [1], [1], [2], [0, 0, 0, 1, 1, 2], [0], [0]>} : vector<4x32x64xf32>, vector<4x64x8xf32>, vector<4x32x8xf32> -> vector<4x32x8xf32>
    "tpu.trace_stop"() : () -> ()
    %56 = vector.extract_strided_slice %55 {offsets = [0, 0, 0], sizes = [1, 32, 8], strides = [1, 1, 1]} : vector<4x32x8xf32> to vector<1x32x8xf32>
    %57 = vector.shape_cast %56 : vector<1x32x8xf32> to vector<32x8xf32>
    %c0_36 = arith.constant 0 : index
    %c0_37 = arith.constant 0 : index
    %58 = vector.load %arg16[%c0_36, %c0_37] : memref<32x32xf32, #tpu.memory_space<vmem>>, vector<32x8xf32>
    tpu.vector_store %arg16[%c0_36, %c0_37], %57 {strides = array<i32>} : memref<32x32xf32, #tpu.memory_space<vmem>>, vector<32x8xf32>,
    %59 = vector.extract_strided_slice %55 {offsets = [1, 0, 0], sizes = [1, 32, 8], strides = [1, 1, 1]} : vector<4x32x8xf32> to vector<1x32x8xf32>
    %60 = vector.shape_cast %59 : vector<1x32x8xf32> to vector<32x8xf32>
    %c0_38 = arith.constant 0 : index
    %c8 = arith.constant 8 : index
    %61 = vector.load %arg16[%c0_38, %c8] : memref<32x32xf32, #tpu.memory_space<vmem>>, vector<32x8xf32>
    tpu.vector_store %arg16[%c0_38, %c8], %60 {strides = array<i32>} : memref<32x32xf32, #tpu.memory_space<vmem>>, vector<32x8xf32>,
    %62 = vector.extract_strided_slice %55 {offsets = [2, 0, 0], sizes = [1, 32, 8], strides = [1, 1, 1]} : vector<4x32x8xf32> to vector<1x32x8xf32>
    %63 = vector.shape_cast %62 : vector<1x32x8xf32> to vector<32x8xf32>
    %c0_39 = arith.constant 0 : index
    %c16 = arith.constant 16 : index
    %64 = vector.load %arg16[%c0_39, %c16] : memref<32x32xf32, #tpu.memory_space<vmem>>, vector<32x8xf32>
    tpu.vector_store %arg16[%c0_39, %c16], %63 {strides = array<i32>} : memref<32x32xf32, #tpu.memory_space<vmem>>, vector<32x8xf32>,
    %65 = vector.extract_strided_slice %55 {offsets = [3, 0, 0], sizes = [1, 32, 8], strides = [1, 1, 1]} : vector<4x32x8xf32> to vector<1x32x8xf32>
    %66 = vector.shape_cast %65 : vector<1x32x8xf32> to vector<32x8xf32>
    %c0_40 = arith.constant 0 : index
    %c24 = arith.constant 24 : index
    %67 = vector.load %arg16[%c0_40, %c24] : memref<32x32xf32, #tpu.memory_space<vmem>>, vector<32x8xf32>
    tpu.vector_store %arg16[%c0_40, %c24], %66 {strides = array<i32>} : memref<32x32xf32, #tpu.memory_space<vmem>>, vector<32x8xf32>,
    %c0_41 = arith.constant 0 : index
    %c0_42 = arith.constant 0 : index
    %68 = vector.load %arg16[%c0_41, %c0_42] : memref<32x32xf32, #tpu.memory_space<vmem>>, vector<32x32xf32>
    %c0_43 = arith.constant 0 : index
    %c0_44 = arith.constant 0 : index
    %69 = vector.load %arg10[%c0_43, %c0_44] : memref<32x32xf32, #tpu.memory_space<vmem>>, vector<32x32xf32>
    %cst_45 = arith.constant dense<0.000000e+00> : vector<32x32xf32>
    %70 = tpu.matmul %68, %69, %cst_45 {dimension_numbers = #tpu.dot_dimension_numbers<[1], [0], [0], [1], [0, 0, 1, 1], [], []>} : vector<32x32xf32>, vector<32x32xf32>, vector<32x32xf32> -> vector<32x32xf32>
    %c0_46 = arith.constant 0 : index
    %c0_47 = arith.constant 0 : index
    %71 = vector.load %arg11[%c0_46, %c0_47] : memref<1x32xf32, #tpu.memory_space<vmem>>, vector<1x32xf32>
    %72 = vector.broadcast %71 : vector<1x32xf32> to vector<32x32xf32>
    %73 = arith.addf %70, %72 : vector<32x32xf32>
    %c0_48 = arith.constant 0 : index
    %c0_49 = arith.constant 0 : index
    %c0_50 = arith.constant 0 : index
    %74 = vector.load %arg12[%c0_48, %c0_49, %c0_50] : memref<1x32x32xf32, #tpu.memory_space<vmem>>, vector<1x32x32xf32>
    %75 = vector.shape_cast %74 : vector<1x32x32xf32> to vector<32x32xf32>
    %76 = vector.shape_cast %73 : vector<32x32xf32> to vector<1x32x32xf32>
    tpu.vector_store %arg12[%c0_48, %c0_49, %c0_50], %76 {strides = array<i32>} : memref<1x32x32xf32, #tpu.memory_space<vmem>>, vector<1x32x32xf32>,
    return
  }
  func.func @transform_0(%arg0: i32, %arg1: i32) -> (i32, i32, i32) {
    %c0_i32 = arith.constant 0 : i32
    %c0_i32_0 = arith.constant 0 : i32
    return %arg0, %arg1, %c0_i32 : i32, i32, i32
  }
  func.func @transform_1(%arg0: i32, %arg1: i32) -> (i32, i32, i32) {
    %c0_i32 = arith.constant 0 : i32
    %c0_i32_0 = arith.constant 0 : i32
    %c0_i32_1 = arith.constant 0 : i32
    return %arg0, %c0_i32, %c0_i32_0 : i32, i32, i32
  }
  func.func @transform_2(%arg0: i32, %arg1: i32) -> (i32, i32, i32) {
    %c0_i32 = arith.constant 0 : i32
    %c0_i32_0 = arith.constant 0 : i32
    %c0_i32_1 = arith.constant 0 : i32
    return %arg0, %c0_i32, %c0_i32_0 : i32, i32, i32
  }
  func.func @transform_3(%arg0: i32, %arg1: i32) -> (i32, i32, i32) {
    %c0_i32 = arith.constant 0 : i32
    %c0_i32_0 = arith.constant 0 : i32
    return %arg0, %arg1, %c0_i32 : i32, i32, i32
  }
  func.func @transform_4(%arg0: i32, %arg1: i32) -> (i32, i32) {
    %c0_i32 = arith.constant 0 : i32
    %c0_i32_0 = arith.constant 0 : i32
    %c0_i32_1 = arith.constant 0 : i32
    return %c0_i32, %c0_i32_0 : i32, i32
  }
  func.func @transform_5(%arg0: i32, %arg1: i32) -> (i32, i32) {
    %c0_i32 = arith.constant 0 : i32
    %c0_i32_0 = arith.constant 0 : i32
    %c0_i32_1 = arith.constant 0 : i32
    return %c0_i32, %c0_i32_0 : i32, i32
  }
  func.func @transform_6(%arg0: i32, %arg1: i32) -> (i32, i32) {
    %c0_i32 = arith.constant 0 : i32
    %c0_i32_0 = arith.constant 0 : i32
    %c0_i32_1 = arith.constant 0 : i32
    return %c0_i32, %c0_i32_0 : i32, i32
  }
  func.func @transform_7(%arg0: i32, %arg1: i32) -> (i32, i32) {
    %c0_i32 = arith.constant 0 : i32
    %c0_i32_0 = arith.constant 0 : i32
    %c0_i32_1 = arith.constant 0 : i32
    return %c0_i32, %c0_i32_0 : i32, i32
  }
  func.func @transform_8(%arg0: i32, %arg1: i32) -> (i32, i32) {
    %c0_i32 = arith.constant 0 : i32
    %c0_i32_0 = arith.constant 0 : i32
    %c0_i32_1 = arith.constant 0 : i32
    return %c0_i32, %c0_i32_0 : i32, i32
  }
  func.func @transform_9(%arg0: i32, %arg1: i32) -> (i32, i32) {
    %c0_i32 = arith.constant 0 : i32
    %c0_i32_0 = arith.constant 0 : i32
    %c0_i32_1 = arith.constant 0 : i32
    return %c0_i32, %c0_i32_0 : i32, i32
  }
  func.func @transform_10(%arg0: i32, %arg1: i32) -> (i32, i32, i32) {
    %c0_i32 = arith.constant 0 : i32
    %c0_i32_0 = arith.constant 0 : i32
    return %arg0, %arg1, %c0_i32 : i32, i32, i32
  }
}

module attributes {stable_mosaic.version = 11 : i64} {
  func.func @_mha_kernel(%arg0: i32, %arg1: i32, %arg2: memref<1x32x32xf32, #tpu.memory_space<vmem>>, %arg3: memref<1x64x32xf32, #tpu.memory_space<vmem>>, %arg4: memref<1x64x32xf32, #tpu.memory_space<vmem>>, %arg5: memref<1x32x64xi8, #tpu.memory_space<vmem>>, %arg6: memref<32x32xf32, #tpu.memory_space<vmem>>, %arg7: memref<1x32xf32, #tpu.memory_space<vmem>>, %arg8: memref<32x64xf32, #tpu.memory_space<vmem>>, %arg9: memref<1x64xf32, #tpu.memory_space<vmem>>, %arg10: memref<32x32xf32, #tpu.memory_space<vmem>>, %arg11: memref<1x32xf32, #tpu.memory_space<vmem>>, %arg12: memref<1x32x32xf32, #tpu.memory_space<vmem>>, %arg13: memref<4x64x8xf32, #tpu.memory_space<vmem>>, %arg14: memref<4x64x8xf32, #tpu.memory_space<vmem>>, %arg15: memref<4x32x8xf32, #tpu.memory_space<vmem>>, %arg16: memref<32x32xf32, #tpu.memory_space<vmem>>) attributes {dimension_semantics = [#tpu.dimension_semantics<parallel>, #tpu.dimension_semantics<arbitrary>], iteration_bounds = array<i64: 2, 2>, scalar_prefetch = 0 : i64, scratch_operands = 4 : i64, tpu.core_type = #tpu.core_type<tc>, window_params = [{transform_indices = @transform_0, window_bounds = array<i64: 1, 32, 32>}, {transform_indices = @transform_1, window_bounds = array<i64: 1, 64, 32>}, {transform_indices = @transform_2, window_bounds = array<i64: 1, 64, 32>}, {transform_indices = @transform_3, window_bounds = array<i64: 1, 32, 64>}, {pipeline_mode = #tpu.pipeline_mode<synchronous>, transform_indices = @transform_4, window_bounds = array<i64: 32, 32>}, {pipeline_mode = #tpu.pipeline_mode<synchronous>, transform_indices = @transform_5, window_bounds = array<i64: 1, 32>}, {pipeline_mode = #tpu.pipeline_mode<synchronous>, transform_indices = @transform_6, window_bounds = array<i64: 32, 64>}, {pipeline_mode = #tpu.pipeline_mode<synchronous>, transform_indices = @transform_7, window_bounds = array<i64: 1, 64>}, {pipeline_mode = #tpu.pipeline_mode<synchronous>, transform_indices = @transform_8, window_bounds = array<i64: 32, 32>}, {pipeline_mode = #tpu.pipeline_mode<synchronous>, transform_indices = @transform_9, window_bounds = array<i64: 1, 32>}, {transform_indices = @transform_10, window_bounds = array<i64: 1, 32, 32>}]} {
    %c0_i32 = arith.constant 0 : i32
    %0 = arith.cmpi eq, %arg1, %c0_i32 : i32
    %1 = arith.extui %0 : i1 to i32
    %c0_i32_0 = arith.constant 0 : i32
    %2 = arith.cmpi ne, %1, %c0_i32_0 : i32
    scf.if %2 {
      %c0_51 = arith.constant 0 : index
      %c0_52 = arith.constant 0 : index
      %c0_53 = arith.constant 0 : index
      %77 = vector.load %arg3[%c0_51, %c0_52, %c0_53] : memref<1x64x32xf32, #tpu.memory_space<vmem>>, vector<1x64x32xf32>
      %78 = vector.shape_cast %77 : vector<1x64x32xf32> to vector<64x32xf32>
      %c0_54 = arith.constant 0 : index
      %c0_55 = arith.constant 0 : index
      %79 = vector.load %arg8[%c0_54, %c0_55] : memref<32x64xf32, #tpu.memory_space<vmem>>, vector<32x32xf32>
      %cst_56 = arith.constant dense<0.000000e+00> : vector<64x32xf32>
      %80 = tpu.matmul %78, %79, %cst_56 {dimension_numbers = #tpu.dot_dimension_numbers<[1], [0], [0], [1], [0, 0, 1, 1], [], []>} : vector<64x32xf32>, vector<32x32xf32>, vector<64x32xf32> -> vector<64x32xf32>
      %c0_57 = arith.constant 0 : index
      %c0_58 = arith.constant 0 : index
      %81 = vector.load %arg9[%c0_57, %c0_58] : memref<1x64xf32, #tpu.memory_space<vmem>>, vector<1x32xf32>
      %82 = vector.broadcast %81 : vector<1x32xf32> to vector<64x32xf32>
      %83 = arith.addf %80, %82 : vector<64x32xf32>
      %c0_59 = arith.constant 0 : index
      %c0_60 = arith.constant 0 : index
      %c0_61 = arith.constant 0 : index
      %84 = vector.load %arg4[%c0_59, %c0_60, %c0_61] : memref<1x64x32xf32, #tpu.memory_space<vmem>>, vector<1x64x32xf32>
      %85 = vector.shape_cast %84 : vector<1x64x32xf32> to vector<64x32xf32>
      %c0_62 = arith.constant 0 : index
      %c32 = arith.constant 32 : index
      %86 = vector.load %arg8[%c0_62, %c32] : memref<32x64xf32, #tpu.memory_space<vmem>>, vector<32x32xf32>
      %cst_63 = arith.constant dense<0.000000e+00> : vector<64x32xf32>
      %87 = tpu.matmul %85, %86, %cst_63 {dimension_numbers = #tpu.dot_dimension_numbers<[1], [0], [0], [1], [0, 0, 1, 1], [], []>} : vector<64x32xf32>, vector<32x32xf32>, vector<64x32xf32> -> vector<64x32xf32>
      %c0_64 = arith.constant 0 : index
      %c32_65 = arith.constant 32 : index
      %88 = vector.load %arg9[%c0_64, %c32_65] : memref<1x64xf32, #tpu.memory_space<vmem>>, vector<1x32xf32>
      %89 = vector.broadcast %88 : vector<1x32xf32> to vector<64x32xf32>
      %90 = arith.addf %87, %89 : vector<64x32xf32>
      %91 = vector.extract_strided_slice %83 {offsets = [0, 0], sizes = [64, 8], strides = [1, 1]} : vector<64x32xf32> to vector<64x8xf32>
      %c0_66 = arith.constant 0 : index
      %c0_67 = arith.constant 0 : index
      %c0_68 = arith.constant 0 : index
      %92 = vector.load %arg13[%c0_66, %c0_67, %c0_68] : memref<4x64x8xf32, #tpu.memory_space<vmem>>, vector<1x64x8xf32>
      %93 = vector.shape_cast %92 : vector<1x64x8xf32> to vector<64x8xf32>
      %94 = vector.shape_cast %91 : vector<64x8xf32> to vector<1x64x8xf32>
      tpu.vector_store %arg13[%c0_66, %c0_67, %c0_68], %94 {strides = array<i32>} : memref<4x64x8xf32, #tpu.memory_space<vmem>>, vector<1x64x8xf32>,
      %95 = vector.extract_strided_slice %90 {offsets = [0, 0], sizes = [64, 8], strides = [1, 1]} : vector<64x32xf32> to vector<64x8xf32>
      %c0_69 = arith.constant 0 : index
      %c0_70 = arith.constant 0 : index
      %c0_71 = arith.constant 0 : index
      %96 = vector.load %arg14[%c0_69, %c0_70, %c0_71] : memref<4x64x8xf32, #tpu.memory_space<vmem>>, vector<1x64x8xf32>
      %97 = vector.shape_cast %96 : vector<1x64x8xf32> to vector<64x8xf32>
      %98 = vector.shape_cast %95 : vector<64x8xf32> to vector<1x64x8xf32>
      tpu.vector_store %arg14[%c0_69, %c0_70, %c0_71], %98 {strides = array<i32>} : memref<4x64x8xf32, #tpu.memory_space<vmem>>, vector<1x64x8xf32>,
      %99 = vector.extract_strided_slice %83 {offsets = [0, 8], sizes = [64, 8], strides = [1, 1]} : vector<64x32xf32> to vector<64x8xf32>
      %c1_72 = arith.constant 1 : index
      %c0_73 = arith.constant 0 : index
      %c0_74 = arith.constant 0 : index
      %100 = vector.load %arg13[%c1_72, %c0_73, %c0_74] : memref<4x64x8xf32, #tpu.memory_space<vmem>>, vector<1x64x8xf32>
      %101 = vector.shape_cast %100 : vector<1x64x8xf32> to vector<64x8xf32>
      %102 = vector.shape_cast %99 : vector<64x8xf32> to vector<1x64x8xf32>
      tpu.vector_store %arg13[%c1_72, %c0_73, %c0_74], %102 {strides = array<i32>} : memref<4x64x8xf32, #tpu.memory_space<vmem>>, vector<1x64x8xf32>,
      %103 = vector.extract_strided_slice %90 {offsets = [0, 8], sizes = [64, 8], strides = [1, 1]} : vector<64x32xf32> to vector<64x8xf32>
      %c1_75 = arith.constant 1 : index
      %c0_76 = arith.constant 0 : index
      %c0_77 = arith.constant 0 : index
      %104 = vector.load %arg14[%c1_75, %c0_76, %c0_77] : memref<4x64x8xf32, #tpu.memory_space<vmem>>, vector<1x64x8xf32>
      %105 = vector.shape_cast %104 : vector<1x64x8xf32> to vector<64x8xf32>
      %106 = vector.shape_cast %103 : vector<64x8xf32> to vector<1x64x8xf32>
      tpu.vector_store %arg14[%c1_75, %c0_76, %c0_77], %106 {strides = array<i32>} : memref<4x64x8xf32, #tpu.memory_space<vmem>>, vector<1x64x8xf32>,
      %107 = vector.extract_strided_slice %83 {offsets = [0, 16], sizes = [64, 8], strides = [1, 1]} : vector<64x32xf32> to vector<64x8xf32>
      %c2_78 = arith.constant 2 : index
      %c0_79 = arith.constant 0 : index
      %c0_80 = arith.constant 0 : index
      %108 = vector.load %arg13[%c2_78, %c0_79, %c0_80] : memref<4x64x8xf32, #tpu.memory_space<vmem>>, vector<1x64x8xf32>
      %109 = vector.shape_cast %108 : vector<1x64x8xf32> to vector<64x8xf32>
      %110 = vector.shape_cast %107 : vector<64x8xf32> to vector<1x64x8xf32>
      tpu.vector_store %arg13[%c2_78, %c0_79, %c0_80], %110 {strides = array<i32>} : memref<4x64x8xf32, #tpu.memory_space<vmem>>, vector<1x64x8xf32>,
      %111 = vector.extract_strided_slice %90 {offsets = [0, 16], sizes = [64, 8], strides = [1, 1]} : vector<64x32xf32> to vector<64x8xf32>
      %c2_81 = arith.constant 2 : index
      %c0_82 = arith.constant 0 : index
      %c0_83 = arith.constant 0 : index
      %112 = vector.load %arg14[%c2_81, %c0_82, %c0_83] : memref<4x64x8xf32, #tpu.memory_space<vmem>>, vector<1x64x8xf32>
      %113 = vector.shape_cast %112 : vector<1x64x8xf32> to vector<64x8xf32>
      %114 = vector.shape_cast %111 : vector<64x8xf32> to vector<1x64x8xf32>
      tpu.vector_store %arg14[%c2_81, %c0_82, %c0_83], %114 {strides = array<i32>} : memref<4x64x8xf32, #tpu.memory_space<vmem>>, vector<1x64x8xf32>,
      %115 = vector.extract_strided_slice %83 {offsets = [0, 24], sizes = [64, 8], strides = [1, 1]} : vector<64x32xf32> to vector<64x8xf32>
      %c3_84 = arith.constant 3 : index
      %c0_85 = arith.constant 0 : index
      %c0_86 = arith.constant 0 : index
      %116 = vector.load %arg13[%c3_84, %c0_85, %c0_86] : memref<4x64x8xf32, #tpu.memory_space<vmem>>, vector<1x64x8xf32>
      %117 = vector.shape_cast %116 : vector<1x64x8xf32> to vector<64x8xf32>
      %118 = vector.shape_cast %115 : vector<64x8xf32> to vector<1x64x8xf32>
      tpu.vector_store %arg13[%c3_84, %c0_85, %c0_86], %118 {strides = array<i32>} : memref<4x64x8xf32, #tpu.memory_space<vmem>>, vector<1x64x8xf32>,
      %119 = vector.extract_strided_slice %90 {offsets = [0, 24], sizes = [64, 8], strides = [1, 1]} : vector<64x32xf32> to vector<64x8xf32>
      %c3_87 = arith.constant 3 : index
      %c0_88 = arith.constant 0 : index
      %c0_89 = arith.constant 0 : index
      %120 = vector.load %arg14[%c3_87, %c0_88, %c0_89] : memref<4x64x8xf32, #tpu.memory_space<vmem>>, vector<1x64x8xf32>
      %121 = vector.shape_cast %120 : vector<1x64x8xf32> to vector<64x8xf32>
      %122 = vector.shape_cast %119 : vector<64x8xf32> to vector<1x64x8xf32>
      tpu.vector_store %arg14[%c3_87, %c0_88, %c0_89], %122 {strides = array<i32>} : memref<4x64x8xf32, #tpu.memory_space<vmem>>, vector<1x64x8xf32>,
    } else {
    }
    %c0 = arith.constant 0 : index
    %c0_1 = arith.constant 0 : index
    %c0_2 = arith.constant 0 : index
    %3 = vector.load %arg2[%c0, %c0_1, %c0_2] : memref<1x32x32xf32, #tpu.memory_space<vmem>>, vector<1x32x32xf32>
    %4 = vector.shape_cast %3 : vector<1x32x32xf32> to vector<32x32xf32>
    %c0_3 = arith.constant 0 : index
    %c0_4 = arith.constant 0 : index
    %5 = vector.load %arg6[%c0_3, %c0_4] : memref<32x32xf32, #tpu.memory_space<vmem>>, vector<32x32xf32>
    %cst = arith.constant dense<0.000000e+00> : vector<32x32xf32>
    %6 = tpu.matmul %4, %5, %cst {dimension_numbers = #tpu.dot_dimension_numbers<[1], [0], [0], [1], [0, 0, 1, 1], [], []>} : vector<32x32xf32>, vector<32x32xf32>, vector<32x32xf32> -> vector<32x32xf32>
    %c0_5 = arith.constant 0 : index
    %c0_6 = arith.constant 0 : index
    %7 = vector.load %arg7[%c0_5, %c0_6] : memref<1x32xf32, #tpu.memory_space<vmem>>, vector<1x32xf32>
    %8 = vector.broadcast %7 : vector<1x32xf32> to vector<32x32xf32>
    %9 = arith.addf %6, %8 : vector<32x32xf32>
    %10 = vector.extract_strided_slice %9 {offsets = [0, 0], sizes = [32, 8], strides = [1, 1]} : vector<32x32xf32> to vector<32x8xf32>
    %c0_7 = arith.constant 0 : index
    %c0_8 = arith.constant 0 : index
    %c0_9 = arith.constant 0 : index
    %11 = vector.load %arg15[%c0_7, %c0_8, %c0_9] : memref<4x32x8xf32, #tpu.memory_space<vmem>>, vector<1x32x8xf32>
    %12 = vector.shape_cast %11 : vector<1x32x8xf32> to vector<32x8xf32>
    %13 = vector.shape_cast %10 : vector<32x8xf32> to vector<1x32x8xf32>
    tpu.vector_store %arg15[%c0_7, %c0_8, %c0_9], %13 {strides = array<i32>} : memref<4x32x8xf32, #tpu.memory_space<vmem>>, vector<1x32x8xf32>,
    %14 = vector.extract_strided_slice %9 {offsets = [0, 8], sizes = [32, 8], strides = [1, 1]} : vector<32x32xf32> to vector<32x8xf32>
    %c1 = arith.constant 1 : index
    %c0_10 = arith.constant 0 : index
    %c0_11 = arith.constant 0 : index
    %15 = vector.load %arg15[%c1, %c0_10, %c0_11] : memref<4x32x8xf32, #tpu.memory_space<vmem>>, vector<1x32x8xf32>
    %16 = vector.shape_cast %15 : vector<1x32x8xf32> to vector<32x8xf32>
    %17 = vector.shape_cast %14 : vector<32x8xf32> to vector<1x32x8xf32>
    tpu.vector_store %arg15[%c1, %c0_10, %c0_11], %17 {strides = array<i32>} : memref<4x32x8xf32, #tpu.memory_space<vmem>>, vector<1x32x8xf32>,
    %18 = vector.extract_strided_slice %9 {offsets = [0, 16], sizes = [32, 8], strides = [1, 1]} : vector<32x32xf32> to vector<32x8xf32>
    %c2 = arith.constant 2 : index
    %c0_12 = arith.constant 0 : index
    %c0_13 = arith.constant 0 : index
    %19 = vector.load %arg15[%c2, %c0_12, %c0_13] : memref<4x32x8xf32, #tpu.memory_space<vmem>>, vector<1x32x8xf32>
    %20 = vector.shape_cast %19 : vector<1x32x8xf32> to vector<32x8xf32>
    %21 = vector.shape_cast %18 : vector<32x8xf32> to vector<1x32x8xf32>
    tpu.vector_store %arg15[%c2, %c0_12, %c0_13], %21 {strides = array<i32>} : memref<4x32x8xf32, #tpu.memory_space<vmem>>, vector<1x32x8xf32>,
    %22 = vector.extract_strided_slice %9 {offsets = [0, 24], sizes = [32, 8], strides = [1, 1]} : vector<32x32xf32> to vector<32x8xf32>
    %c3 = arith.constant 3 : index
    %c0_14 = arith.constant 0 : index
    %c0_15 = arith.constant 0 : index
    %23 = vector.load %arg15[%c3, %c0_14, %c0_15] : memref<4x32x8xf32, #tpu.memory_space<vmem>>, vector<1x32x8xf32>
    %24 = vector.shape_cast %23 : vector<1x32x8xf32> to vector<32x8xf32>
    %25 = vector.shape_cast %22 : vector<32x8xf32> to vector<1x32x8xf32>
    tpu.vector_store %arg15[%c3, %c0_14, %c0_15], %25 {strides = array<i32>} : memref<4x32x8xf32, #tpu.memory_space<vmem>>, vector<1x32x8xf32>,
    %c0_16 = arith.constant 0 : index
    %c0_17 = arith.constant 0 : index
    %c0_18 = arith.constant 0 : index
    %26 = vector.load %arg5[%c0_16, %c0_17, %c0_18] : memref<1x32x64xi8, #tpu.memory_space<vmem>>, vector<1x32x64xi8>
    %27 = vector.shape_cast %26 : vector<1x32x64xi8> to vector<32x64xi8>
    %28 = arith.extsi %27 : vector<32x64xi8> to vector<32x64xi32>
    %c0_i32_19 = arith.constant 0 : i32
    %29 = vector.broadcast %c0_i32_19 : i32 to vector<32x64xi32>
    %30 = arith.cmpi ne, %28, %29 : vector<32x64xi32>
    %cst_20 = arith.constant 0.000000e+00 : f32
    %cst_21 = arith.constant -1.000000e+30 : f32
    %31 = vector.broadcast %cst_20 : f32 to vector<32x64xf32>
    %32 = vector.broadcast %cst_21 : f32 to vector<32x64xf32>
    %33 = arith.select %30, %31, %32 : vector<32x64xi1>, vector<32x64xf32>
    %c0_22 = arith.constant 0 : index
    %c0_23 = arith.constant 0 : index
    %c0_24 = arith.constant 0 : index
    %34 = vector.load %arg15[%c0_22, %c0_23, %c0_24] : memref<4x32x8xf32, #tpu.memory_space<vmem>>, vector<4x32x8xf32>
    %c0_25 = arith.constant 0 : index
    %c0_26 = arith.constant 0 : index
    %c0_27 = arith.constant 0 : index
    %35 = vector.load %arg13[%c0_25, %c0_26, %c0_27] : memref<4x64x8xf32, #tpu.memory_space<vmem>>, vector<4x64x8xf32>
    %c0_28 = arith.constant 0 : index
    %c0_29 = arith.constant 0 : index
    %c0_30 = arith.constant 0 : index
    %36 = vector.load %arg14[%c0_28, %c0_29, %c0_30] : memref<4x64x8xf32, #tpu.memory_space<vmem>>, vector<4x64x8xf32>
    "tpu.trace_start"() <{level = 10 : i32, message = "hqd,hkd->hqk"}> : () -> ()
    %cst_31 = arith.constant dense<0.000000e+00> : vector<4x32x64xf32>
    %37 = tpu.matmul %34, %35, %cst_31 {dimension_numbers = #tpu.dot_dimension_numbers<[2], [2], [1], [1], [0, 0, 0, 1, 1, 1], [0], [0]>} : vector<4x32x8xf32>, vector<4x64x8xf32>, vector<4x32x64xf32> -> vector<4x32x64xf32>
    "tpu.trace_stop"() : () -> ()
    %38 = vector.shape_cast %33 : vector<32x64xf32> to vector<1x32x64xf32>
    %39 = vector.broadcast %38 : vector<1x32x64xf32> to vector<4x32x64xf32>
    %40 = arith.addf %37, %39 : vector<4x32x64xf32>
    %cst_32 = arith.constant dense<0xFF800000> : vector<4x32xf32>
    %41 = vector.multi_reduction <maximumf>, %40, %cst_32 [2] : vector<4x32x64xf32> to vector<4x32xf32>
    %42 = vector.shape_cast %41 : vector<4x32xf32> to vector<4x32x1xf32>
    %43 = vector.broadcast %42 : vector<4x32x1xf32> to vector<4x32x64xf32>
    %44 = arith.subf %40, %43 : vector<4x32x64xf32>
    %45 = math.exp %44 : vector<4x32x64xf32>
    %cst_33 = arith.constant dense<0.000000e+00> : vector<4x32xf32>
    %46 = vector.multi_reduction <add>, %45, %cst_33 [2] : vector<4x32x64xf32> to vector<4x32xf32>
    %47 = vector.shape_cast %46 : vector<4x32xf32> to vector<4x32x1xf32>
    %48 = vector.broadcast %47 : vector<4x32x1xf32> to vector<4x32x64xf32>
    %49 = arith.divf %45, %48 : vector<4x32x64xf32>
    %50 = vector.shape_cast %30 : vector<32x64xi1> to vector<1x32x64xi1>
    %cst_34 = arith.constant 0.000000e+00 : f32
    %51 = vector.shape_cast %50 : vector<1x32x64xi1> to vector<1x32x64xi1>
    %52 = vector.broadcast %51 : vector<1x32x64xi1> to vector<4x32x64xi1>
    %53 = vector.broadcast %cst_34 : f32 to vector<4x32x64xf32>
    %54 = arith.select %52, %49, %53 : vector<4x32x64xi1>, vector<4x32x64xf32>
    "tpu.trace_start"() <{level = 10 : i32, message = "hqk,hkd->hqd"}> : () -> ()
    %cst_35 = arith.constant dense<0.000000e+00> : vector<4x32x8xf32>
    %55 = tpu.matmul %54, %36, %cst_35 {dimension_numbers = #tpu.dot_dimension_numbers<[2], [1], [1], [2], [0, 0, 0, 1, 1, 2], [0], [0]>} : vector<4x32x64xf32>, vector<4x64x8xf32>, vector<4x32x8xf32> -> vector<4x32x8xf32>
    "tpu.trace_stop"() : () -> ()
    %56 = vector.extract_strided_slice %55 {offsets = [0, 0, 0], sizes = [1, 32, 8], strides = [1, 1, 1]} : vector<4x32x8xf32> to vector<1x32x8xf32>
    %57 = vector.shape_cast %56 : vector<1x32x8xf32> to vector<32x8xf32>
    %c0_36 = arith.constant 0 : index
    %c0_37 = arith.constant 0 : index
    %58 = vector.load %arg16[%c0_36, %c0_37] : memref<32x32xf32, #tpu.memory_space<vmem>>, vector<32x8xf32>
    tpu.vector_store %arg16[%c0_36, %c0_37], %57 {strides = array<i32>} : memref<32x32xf32, #tpu.memory_space<vmem>>, vector<32x8xf32>,
    %59 = vector.extract_strided_slice %55 {offsets = [1, 0, 0], sizes = [1, 32, 8], strides = [1, 1, 1]} : vector<4x32x8xf32> to vector<1x32x8xf32>
    %60 = vector.shape_cast %59 : vector<1x32x8xf32> to vector<32x8xf32>
    %c0_38 = arith.constant 0 : index
    %c8 = arith.constant 8 : index
    %61 = vector.load %arg16[%c0_38, %c8] : memref<32x32xf32, #tpu.memory_space<vmem>>, vector<32x8xf32>
    tpu.vector_store %arg16[%c0_38, %c8], %60 {strides = array<i32>} : memref<32x32xf32, #tpu.memory_space<vmem>>, vector<32x8xf32>,
    %62 = vector.extract_strided_slice %55 {offsets = [2, 0, 0], sizes = [1, 32, 8], strides = [1, 1, 1]} : vector<4x32x8xf32> to vector<1x32x8xf32>
    %63 = vector.shape_cast %62 : vector<1x32x8xf32> to vector<32x8xf32>
    %c0_39 = arith.constant 0 : index
    %c16 = arith.constant 16 : index
    %64 = vector.load %arg16[%c0_39, %c16] : memref<32x32xf32, #tpu.memory_space<vmem>>, vector<32x8xf32>
    tpu.vector_store %arg16[%c0_39, %c16], %63 {strides = array<i32>} : memref<32x32xf32, #tpu.memory_space<vmem>>, vector<32x8xf32>,
    %65 = vector.extract_strided_slice %55 {offsets = [3, 0, 0], sizes = [1, 32, 8], strides = [1, 1, 1]} : vector<4x32x8xf32> to vector<1x32x8xf32>
    %66 = vector.shape_cast %65 : vector<1x32x8xf32> to vector<32x8xf32>
    %c0_40 = arith.constant 0 : index
    %c24 = arith.constant 24 : index
    %67 = vector.load %arg16[%c0_40, %c24] : memref<32x32xf32, #tpu.memory_space<vmem>>, vector<32x8xf32>
    tpu.vector_store %arg16[%c0_40, %c24], %66 {strides = array<i32>} : memref<32x32xf32, #tpu.memory_space<vmem>>, vector<32x8xf32>,
    %c0_41 = arith.constant 0 : index
    %c0_42 = arith.constant 0 : index
    %68 = vector.load %arg16[%c0_41, %c0_42] : memref<32x32xf32, #tpu.memory_space<vmem>>, vector<32x32xf32>
    %c0_43 = arith.constant 0 : index
    %c0_44 = arith.constant 0 : index
    %69 = vector.load %arg10[%c0_43, %c0_44] : memref<32x32xf32, #tpu.memory_space<vmem>>, vector<32x32xf32>
    %cst_45 = arith.constant dense<0.000000e+00> : vector<32x32xf32>
    %70 = tpu.matmul %68, %69, %cst_45 {dimension_numbers = #tpu.dot_dimension_numbers<[1], [0], [0], [1], [0, 0, 1, 1], [], []>} : vector<32x32xf32>, vector<32x32xf32>, vector<32x32xf32> -> vector<32x32xf32>
    %c0_46 = arith.constant 0 : index
    %c0_47 = arith.constant 0 : index
    %71 = vector.load %arg11[%c0_46, %c0_47] : memref<1x32xf32, #tpu.memory_space<vmem>>, vector<1x32xf32>
    %72 = vector.broadcast %71 : vector<1x32xf32> to vector<32x32xf32>
    %73 = arith.addf %70, %72 : vector<32x32xf32>
    %c0_48 = arith.constant 0 : index
    %c0_49 = arith.constant 0 : index
    %c0_50 = arith.constant 0 : index
    %74 = vector.load %arg12[%c0_48, %c0_49, %c0_50] : memref<1x32x32xf32, #tpu.memory_space<vmem>>, vector<1x32x32xf32>
    %75 = vector.shape_cast %74 : vector<1x32x32xf32> to vector<32x32xf32>
    %76 = vector.shape_cast %73 : vector<32x32xf32> to vector<1x32x32xf32>
    tpu.vector_store %arg12[%c0_48, %c0_49, %c0_50], %76 {strides = array<i32>} : memref<1x32x32xf32, #tpu.memory_space<vmem>>, vector<1x32x32xf32>,
    return
  }
  func.func @transform_0(%arg0: i32, %arg1: i32) -> (i32, i32, i32) {
    %c0_i32 = arith.constant 0 : i32
    %c0_i32_0 = arith.constant 0 : i32
    return %arg0, %arg1, %c0_i32 : i32, i32, i32
  }
  func.func @transform_1(%arg0: i32, %arg1: i32) -> (i32, i32, i32) {
    %c0_i32 = arith.constant 0 : i32
    %c0_i32_0 = arith.constant 0 : i32
    %c0_i32_1 = arith.constant 0 : i32
    return %arg0, %c0_i32, %c0_i32_0 : i32, i32, i32
  }
  func.func @transform_2(%arg0: i32, %arg1: i32) -> (i32, i32, i32) {
    %c0_i32 = arith.constant 0 : i32
    %c0_i32_0 = arith.constant 0 : i32
    %c0_i32_1 = arith.constant 0 : i32
    return %arg0, %c0_i32, %c0_i32_0 : i32, i32, i32
  }
  func.func @transform_3(%arg0: i32, %arg1: i32) -> (i32, i32, i32) {
    %c0_i32 = arith.constant 0 : i32
    %c0_i32_0 = arith.constant 0 : i32
    return %arg0, %arg1, %c0_i32 : i32, i32, i32
  }
  func.func @transform_4(%arg0: i32, %arg1: i32) -> (i32, i32) {
    %c0_i32 = arith.constant 0 : i32
    %c0_i32_0 = arith.constant 0 : i32
    %c0_i32_1 = arith.constant 0 : i32
    return %c0_i32, %c0_i32_0 : i32, i32
  }
  func.func @transform_5(%arg0: i32, %arg1: i32) -> (i32, i32) {
    %c0_i32 = arith.constant 0 : i32
    %c0_i32_0 = arith.constant 0 : i32
    %c0_i32_1 = arith.constant 0 : i32
    return %c0_i32, %c0_i32_0 : i32, i32
  }
  func.func @transform_6(%arg0: i32, %arg1: i32) -> (i32, i32) {
    %c0_i32 = arith.constant 0 : i32
    %c0_i32_0 = arith.constant 0 : i32
    %c0_i32_1 = arith.constant 0 : i32
    return %c0_i32, %c0_i32_0 : i32, i32
  }
  func.func @transform_7(%arg0: i32, %arg1: i32) -> (i32, i32) {
    %c0_i32 = arith.constant 0 : i32
    %c0_i32_0 = arith.constant 0 : i32
    %c0_i32_1 = arith.constant 0 : i32
    return %c0_i32, %c0_i32_0 : i32, i32
  }
  func.func @transform_8(%arg0: i32, %arg1: i32) -> (i32, i32) {
    %c0_i32 = arith.constant 0 : i32
    %c0_i32_0 = arith.constant 0 : i32
    %c0_i32_1 = arith.constant 0 : i32
    return %c0_i32, %c0_i32_0 : i32, i32
  }
  func.func @transform_9(%arg0: i32, %arg1: i32) -> (i32, i32) {
    %c0_i32 = arith.constant 0 : i32
    %c0_i32_0 = arith.constant 0 : i32
    %c0_i32_1 = arith.constant 0 : i32
    return %c0_i32, %c0_i32_0 : i32, i32
  }
  func.func @transform_10(%arg0: i32, %arg1: i32) -> (i32, i32, i32) {
    %c0_i32 = arith.constant 0 : i32
    %c0_i32_0 = arith.constant 0 : i32
    return %arg0, %arg1, %c0_i32 : i32, i32, i32
  }
}

</mosaic_0001>

<llo_original>
// kernel: tpu_custom_call.1
$region0: #{tpu_custom_call.1}
  #allocation0 [shape = 'u32[]', space=smem, size = 0x4, offset = 0x4, fixed_abs, tag = 'smem constant byte address 0x4 - core index']
  #allocation1 [shape = 'u32[144,128]{1,0:T(1,128)}', space=vmem, size = 0x12000, scoped, tag = 'internal scratch']
  #allocation2 [shape = 'f32[4,64,8]{2,1,0:T(8,128)}', space=vmem, size = 0x20000, scoped, tag = 'scratch operand']
  #allocation3 [shape = 'f32[4,64,8]{2,1,0:T(8,128)}', space=vmem, size = 0x20000, scoped, tag = 'scratch operand']
  #allocation4 [shape = 'f32[4,32,8]{2,1,0:T(8,128)}', space=vmem, size = 0x10000, scoped, tag = 'scratch operand']
  #allocation5 [shape = 'f32[32,32]{1,0:T(8,128)}', space=vmem, size = 0x4000, scoped, tag = 'scratch operand']
  %s0 = inlined_call_operand.hbm [shape: f32[2,64,32], index: 0, kind: input, shape index: {}]
  %s1 = inlined_call_operand.hbm [shape: f32[2,64,32], index: 1, kind: input, shape index: {}]
  %s2 = inlined_call_operand.hbm [shape: f32[2,64,32], index: 2, kind: input, shape index: {}]
  %s3 = inlined_call_operand.hbm [shape: s8[2,64,64], index: 3, kind: input, shape index: {}]
  %s4 = inlined_call_operand.hbm [shape: f32[32,32], index: 4, kind: input, shape index: {}]
  %s5 = inlined_call_operand.hbm [shape: f32[1,32], index: 5, kind: input, shape index: {}]
  %s6 = inlined_call_operand.hbm [shape: f32[32,64], index: 6, kind: input, shape index: {}]
  %s7 = inlined_call_operand.hbm [shape: f32[1,64], index: 7, kind: input, shape index: {}]
  %s8 = inlined_call_operand.hbm [shape: f32[32,32], index: 8, kind: input, shape index: {}]
  %s9 = inlined_call_operand.hbm [shape: f32[1,32], index: 9, kind: input, shape index: {}]
  %s10 = inlined_call_operand.hbm [shape: f32[2,64,32], index: 10, kind: output, shape index: {}]
  %s11 = sld [smem:[#allocation0]]
  $region117: #{tpu_custom_call.1} parent=0
    _
  %s13 = ssub.s32 1, %s11
  %s14 = scalar_select 0, %s13, %s11
  $region1: #{tpu_custom_call.1} parent=0
    #allocation6 [shape = 'u8[32768]{0}', space=vmem, size = 0x8000, scoped, tag = 'input window, operand 0']
    #allocation7 [shape = 's32[2]{0}', space=sflag, size = 0x8, scoped, tag = 'scoped memory for tpu_custom_call.1']
    #allocation8 [shape = 's32[2]{0}', space=sflag, size = 0x8, scoped, tag = 'scoped memory for tpu_custom_call.1']
    #allocation9 [shape = 'u8[65536]{0}', space=vmem, size = 0x10000, scoped, tag = 'input window, operand 1']
    #allocation10 [shape = 's32[2]{0}', space=sflag, size = 0x8, scoped, tag = 'scoped memory for tpu_custom_call.1']
    #allocation11 [shape = 'u8[65536]{0}', space=vmem, size = 0x10000, scoped, tag = 'input window, operand 2']
    #allocation12 [shape = 'u8[8192]{0}', space=vmem, size = 0x2000, scoped, tag = 'input window, operand 3']
    #allocation13 [shape = 's32[2]{0}', space=sflag, size = 0x8, scoped, tag = 'scoped memory for tpu_custom_call.1']
    #allocation14 [shape = 'u8[16384]{0}', space=vmem, size = 0x4000, scoped, tag = 'input window, operand 4, single buffered']
    #allocation15 [shape = 'u8[512]{0}', space=vmem, size = 0x400, scoped, tag = 'input window, operand 5, single buffered']
    #allocation16 [shape = 's32[1]{0}', space=sflag, size = 0x4, scoped, tag = 'scoped memory for tpu_custom_call.1']
    #allocation17 [shape = 'u8[16384]{0}', space=vmem, size = 0x4000, scoped, tag = 'input window, operand 6, single buffered']
    #allocation18 [shape = 'u8[512]{0}', space=vmem, size = 0x400, scoped, tag = 'input window, operand 7, single buffered']
    #allocation19 [shape = 's32[1]{0}', space=sflag, size = 0x4, scoped, tag = 'scoped memory for tpu_custom_call.1']
    #allocation20 [shape = 'u8[16384]{0}', space=vmem, size = 0x4000, scoped, tag = 'input window, operand 8, single buffered']
    #allocation21 [shape = 'u8[512]{0}', space=vmem, size = 0x400, scoped, tag = 'input window, operand 9, single buffered']
    #allocation22 [shape = 's32[1]{0}', space=sflag, size = 0x4, scoped, tag = 'scoped memory for tpu_custom_call.1']
    #allocation23 [shape = 'u8[32768]{0}', space=vmem, size = 0x8000, scoped, tag = 'output window, operand 0']
    %15 = vsyncpa [#allocation7], 0
    %s16 = scalar_lea.sflag [#allocation7], 1
    %17 = vsyncpa %s16, 0
    %18 = vsyncpa [#allocation10], 0
    %s19 = scalar_lea.sflag [#allocation10], 1
    %20 = vsyncpa %s19, 0
    %21 = vsyncpa [#allocation13], 0
    %s22 = scalar_lea.sflag [#allocation13], 1
    %23 = vsyncpa %s22, 0
    %24 = vsyncpa [#allocation16], 0
    %25 = vsyncpa [#allocation19], 0
    %26 = vsyncpa [#allocation22], 0
    %27 = vsyncpa [#allocation8], 0
    %s28 = scalar_lea.sflag [#allocation8], 1
    %29 = vsyncpa %s28, 0
    loop: start=0, step=1, limit=6
    $region2: #{tpu_custom_call.1} parent=1 // loop_pre_header
      _
    $region3: #{tpu_custom_call.1} parent=1 // loop_header
      %s31 = sphi 0, %s35
      %p32 = scmp.ge.s32.totalorder %s31, 6
      %s38 = sphi 0, %s50
      %s39 = sphi 0, %s46
      %s40 = sphi 0, %s38
      %s41 = sphi 0, %s39
      %s42 = sphi 0, %s40
      %s43 = sphi 0, %s41
      %s55 = sphi 0, %s57
      %s58 = sphi 0, %s55
      %s59 = sphi 0, %s58
      %s75 = sphi 0, %s59
      %s81 = sphi 0, %s83
      %s84 = sphi 0, %s81
      %s85 = sphi 0, %s84
      %s101 = sphi 0, %s85
      %s107 = sphi 0, %s109
      %s110 = sphi 0, %s107
      %s111 = sphi 0, %s110
      %s127 = sphi 0, %s111
      %s135 = sphi 0, %s137
      %s138 = sphi 0, %s135
      %s139 = sphi 0, %s138
      %s155 = sphi 0, %s139
      %s159 = sphi 0, %s159
      %s161 = sphi 0, %s159
      %s162 = sphi 0, %s161
      %s176 = sphi 0, %s162
      %s180 = sphi 0, %s180
      %s182 = sphi 0, %s180
      %s183 = sphi 0, %s182
      %s197 = sphi 0, %s183
      %s201 = sphi 0, %s201
      %s203 = sphi 0, %s201
      %s204 = sphi 0, %s203
      %s218 = sphi 0, %s204
      %s222 = sphi 0, %s222
      %s224 = sphi 0, %s222
      %s225 = sphi 0, %s224
      %s239 = sphi 0, %s225
      %s243 = sphi 0, %s243
      %s245 = sphi 0, %s243
      %s246 = sphi 0, %s245
      %s260 = sphi 0, %s246
      %s264 = sphi 0, %s264
      %s266 = sphi 0, %s264
      %s267 = sphi 0, %s266
      %s281 = sphi 0, %s267
      %s289 = sphi 0, %s291
      %s292 = sphi 0, %s289
      %s293 = sphi 0, %s292
      %s309 = sphi 0, %s293
    $region4: #{tpu_custom_call.1} parent=1 // loop_header_branch
      %34 = sbr.rel (%p32) target = $region8
    $region5: #{tpu_custom_call.1} parent=1 // loop_body
      %s36 = ssub.s32 %s31, 1
      %s37 = ssub.s32 %s31, 2
      %s44 = sadd.s32 1, %s39
      %p45 = scmp.ge.s32.totalorder %s44, 2
      %s46 = scalar_select %p45, 0, %s44
      %s47 = sadd.s32 1, %s38
      %s48 = scalar_select %p45, %s47, %s38
      %p49 = scmp.ge.s32.totalorder %s48, 2
      %s50 = scalar_select %p49, 0, %s48
      %s51 = ssub.s32 %s38, %s50
      %s52 = ssub.s32 %s39, %s46
      %s53 = sor.u32 %s51, %s52
      %p54 = scmp.eq.s32.totalorder %s53, 0
      %s56 = sadd.s32 %s55, 1
      %s57 = scalar_select %p54, %s55, %s56
      %p60 = pneg %p54
      %p61 = scmp.eq.s32.totalorder %s31, 3
      %p62 = por %p60, %p61
      %p63 = scmp.ne.s32.totalorder %s55, %s58
      %p64 = scmp.eq.s32.totalorder %s31, 0
      %p65 = por %p63, %p64
      %p66 = scmp.ne.s32.totalorder %s55, %s58
      %p67 = scmp.eq.s32.totalorder %s36, 3
      %p68 = por %p66, %p67
      %p69 = scmp.ne.s32.totalorder %s58, %s59
      %p70 = scmp.eq.s32.totalorder %s36, 0
      %p71 = por %p69, %p70
      %p72 = scmp.ne.s32.totalorder %s58, %s59
      %p73 = scmp.eq.s32.totalorder %s37, 3
      %p74 = por %p72, %p73
      %p76 = scmp.ne.s32.totalorder %s59, %s75
      %p77 = scmp.eq.s32.totalorder %s37, 0
      %p78 = por %p76, %p77
      %s79 = ssub.s32 %s38, %s50
      %p80 = scmp.eq.s32.totalorder %s79, 0
      %s82 = sadd.s32 %s81, 1
      %s83 = scalar_select %p80, %s81, %s82
      %p86 = pneg %p80
      %p87 = scmp.eq.s32.totalorder %s31, 3
      %p88 = por %p86, %p87
      %p89 = scmp.ne.s32.totalorder %s81, %s84
      %p90 = scmp.eq.s32.totalorder %s31, 0
      %p91 = por %p89, %p90
      %p92 = scmp.ne.s32.totalorder %s81, %s84
      %p93 = scmp.eq.s32.totalorder %s36, 3
      %p94 = por %p92, %p93
      %p95 = scmp.ne.s32.totalorder %s84, %s85
      %p96 = scmp.eq.s32.totalorder %s36, 0
      %p97 = por %p95, %p96
      %p98 = scmp.ne.s32.totalorder %s84, %s85
      %p99 = scmp.eq.s32.totalorder %s37, 3
      %p100 = por %p98, %p99
      %p102 = scmp.ne.s32.totalorder %s85, %s101
      %p103 = scmp.eq.s32.totalorder %s37, 0
      %p104 = por %p102, %p103
      %s105 = ssub.s32 %s38, %s50
      %p106 = scmp.eq.s32.totalorder %s105, 0
      %s108 = sadd.s32 %s107, 1
      %s109 = scalar_select %p106, %s107, %s108
      %p112 = pneg %p106
      %p113 = scmp.eq.s32.totalorder %s31, 3
      %p114 = por %p112, %p113
      %p115 = scmp.ne.s32.totalorder %s107, %s110
      %p116 = scmp.eq.s32.totalorder %s31, 0
      %p117 = por %p115, %p116
      %p118 = scmp.ne.s32.totalorder %s107, %s110
      %p119 = scmp.eq.s32.totalorder %s36, 3
      %p120 = por %p118, %p119
      %p121 = scmp.ne.s32.totalorder %s110, %s111
      %p122 = scmp.eq.s32.totalorder %s36, 0
      %p123 = por %p121, %p122
      %p124 = scmp.ne.s32.totalorder %s110, %s111
      %p125 = scmp.eq.s32.totalorder %s37, 3
      %p126 = por %p124, %p125
      %p128 = scmp.ne.s32.totalorder %s111, %s127
      %p129 = scmp.eq.s32.totalorder %s37, 0
      %p130 = por %p128, %p129
      %s131 = ssub.s32 %s38, %s50
      %s132 = ssub.s32 %s39, %s46
      %s133 = sor.u32 %s131, %s132
      %p134 = scmp.eq.s32.totalorder %s133, 0
      %s136 = sadd.s32 %s135, 1
      %s137 = scalar_select %p134, %s135, %s136
      %p140 = pneg %p134
      %p141 = scmp.eq.s32.totalorder %s31, 3
      %p142 = por %p140, %p141
      %p143 = scmp.ne.s32.totalorder %s135, %s138
      %p144 = scmp.eq.s32.totalorder %s31, 0
      %p145 = por %p143, %p144
      %p146 = scmp.ne.s32.totalorder %s135, %s138
      %p147 = scmp.eq.s32.totalorder %s36, 3
      %p148 = por %p146, %p147
      %p149 = scmp.ne.s32.totalorder %s138, %s139
      %p150 = scmp.eq.s32.totalorder %s36, 0
      %p151 = por %p149, %p150
      %p152 = scmp.ne.s32.totalorder %s138, %s139
      %p153 = scmp.eq.s32.totalorder %s37, 3
      %p154 = por %p152, %p153
      %p156 = scmp.ne.s32.totalorder %s139, %s155
      %p157 = scmp.eq.s32.totalorder %s37, 0
      %p158 = por %p156, %p157
      %s160 = sadd.s32 %s159, 1
      %p163 = scmp.eq.s32.totalorder %s31, 3
      %p164 = scmp.ne.s32.totalorder %s159, %s161
      %p165 = scmp.eq.s32.totalorder %s31, 0
      %p166 = por %p164, %p165
      %p167 = scmp.ne.s32.totalorder %s159, %s161
      %p168 = scmp.eq.s32.totalorder %s36, 3
      %p169 = por %p167, %p168
      %p170 = scmp.ne.s32.totalorder %s161, %s162
      %p171 = scmp.eq.s32.totalorder %s36, 0
      %p172 = por %p170, %p171
      %p173 = scmp.ne.s32.totalorder %s161, %s162
      %p174 = scmp.eq.s32.totalorder %s37, 3
      %p175 = por %p173, %p174
      %p177 = scmp.ne.s32.totalorder %s162, %s176
      %p178 = scmp.eq.s32.totalorder %s37, 0
      %p179 = por %p177, %p178
      %s181 = sadd.s32 %s180, 1
      %p184 = scmp.eq.s32.totalorder %s31, 3
      %p185 = scmp.ne.s32.totalorder %s180, %s182
      %p186 = scmp.eq.s32.totalorder %s31, 0
      %p187 = por %p185, %p186
      %p188 = scmp.ne.s32.totalorder %s180, %s182
      %p189 = scmp.eq.s32.totalorder %s36, 3
      %p190 = por %p188, %p189
      %p191 = scmp.ne.s32.totalorder %s182, %s183
      %p192 = scmp.eq.s32.totalorder %s36, 0
      %p193 = por %p191, %p192
      %p194 = scmp.ne.s32.totalorder %s182, %s183
      %p195 = scmp.eq.s32.totalorder %s37, 3
      %p196 = por %p194, %p195
      %p198 = scmp.ne.s32.totalorder %s183, %s197
      %p199 = scmp.eq.s32.totalorder %s37, 0
      %p200 = por %p198, %p199
      %s202 = sadd.s32 %s201, 1
      %p205 = scmp.eq.s32.totalorder %s31, 3
      %p206 = scmp.ne.s32.totalorder %s201, %s203
      %p207 = scmp.eq.s32.totalorder %s31, 0
      %p208 = por %p206, %p207
      %p209 = scmp.ne.s32.totalorder %s201, %s203
      %p210 = scmp.eq.s32.totalorder %s36, 3
      %p211 = por %p209, %p210
      %p212 = scmp.ne.s32.totalorder %s203, %s204
      %p213 = scmp.eq.s32.totalorder %s36, 0
      %p214 = por %p212, %p213
      %p215 = scmp.ne.s32.totalorder %s203, %s204
      %p216 = scmp.eq.s32.totalorder %s37, 3
      %p217 = por %p215, %p216
      %p219 = scmp.ne.s32.totalorder %s204, %s218
      %p220 = scmp.eq.s32.totalorder %s37, 0
      %p221 = por %p219, %p220
      %s223 = sadd.s32 %s222, 1
      %p226 = scmp.eq.s32.totalorder %s31, 3
      %p227 = scmp.ne.s32.totalorder %s222, %s224
      %p228 = scmp.eq.s32.totalorder %s31, 0
      %p229 = por %p227, %p228
      %p230 = scmp.ne.s32.totalorder %s222, %s224
      %p231 = scmp.eq.s32.totalorder %s36, 3
      %p232 = por %p230, %p231
      %p233 = scmp.ne.s32.totalorder %s224, %s225
      %p234 = scmp.eq.s32.totalorder %s36, 0
      %p235 = por %p233, %p234
      %p236 = scmp.ne.s32.totalorder %s224, %s225
      %p237 = scmp.eq.s32.totalorder %s37, 3
      %p238 = por %p236, %p237
      %p240 = scmp.ne.s32.totalorder %s225, %s239
      %p241 = scmp.eq.s32.totalorder %s37, 0
      %p242 = por %p240, %p241
      %s244 = sadd.s32 %s243, 1
      %p247 = scmp.eq.s32.totalorder %s31, 3
      %p248 = scmp.ne.s32.totalorder %s243, %s245
      %p249 = scmp.eq.s32.totalorder %s31, 0
      %p250 = por %p248, %p249
      %p251 = scmp.ne.s32.totalorder %s243, %s245
      %p252 = scmp.eq.s32.totalorder %s36, 3
      %p253 = por %p251, %p252
      %p254 = scmp.ne.s32.totalorder %s245, %s246
      %p255 = scmp.eq.s32.totalorder %s36, 0
      %p256 = por %p254, %p255
      %p257 = scmp.ne.s32.totalorder %s245, %s246
      %p258 = scmp.eq.s32.totalorder %s37, 3
      %p259 = por %p257, %p258
      %p261 = scmp.ne.s32.totalorder %s246, %s260
      %p262 = scmp.eq.s32.totalorder %s37, 0
      %p263 = por %p261, %p262
      %s265 = sadd.s32 %s264, 1
      %p268 = scmp.eq.s32.totalorder %s31, 3
      %p269 = scmp.ne.s32.totalorder %s264, %s266
      %p270 = scmp.eq.s32.totalorder %s31, 0
      %p271 = por %p269, %p270
      %p272 = scmp.ne.s32.totalorder %s264, %s266
      %p273 = scmp.eq.s32.totalorder %s36, 3
      %p274 = por %p272, %p273
      %p275 = scmp.ne.s32.totalorder %s266, %s267
      %p276 = scmp.eq.s32.totalorder %s36, 0
      %p277 = por %p275, %p276
      %p278 = scmp.ne.s32.totalorder %s266, %s267
      %p279 = scmp.eq.s32.totalorder %s37, 3
      %p280 = por %p278, %p279
      %p282 = scmp.ne.s32.totalorder %s267, %s281
      %p283 = scmp.eq.s32.totalorder %s37, 0
      %p284 = por %p282, %p283
      %s285 = ssub.s32 %s38, %s50
      %s286 = ssub.s32 %s39, %s46
      %s287 = sor.u32 %s285, %s286
      %p288 = scmp.eq.s32.totalorder %s287, 0
      %s290 = sadd.s32 %s289, 1
      %s291 = scalar_select %p288, %s289, %s290
      %p294 = pneg %p288
      %p295 = scmp.eq.s32.totalorder %s31, 3
      %p296 = por %p294, %p295
      %p297 = scmp.ne.s32.totalorder %s289, %s292
      %p298 = scmp.eq.s32.totalorder %s31, 0
      %p299 = por %p297, %p298
      %p300 = scmp.ne.s32.totalorder %s289, %s292
      %p301 = scmp.eq.s32.totalorder %s36, 3
      %p302 = por %p300, %p301
      %p303 = scmp.ne.s32.totalorder %s292, %s293
      %p304 = scmp.eq.s32.totalorder %s36, 0
      %p305 = por %p303, %p304
      %p306 = scmp.ne.s32.totalorder %s292, %s293
      %p307 = scmp.eq.s32.totalorder %s37, 3
      %p308 = por %p306, %p307
      %p310 = scmp.ne.s32.totalorder %s293, %s309
      %p311 = scmp.eq.s32.totalorder %s37, 0
      %p312 = por %p310, %p311
      %p313 = scmp.le.s32.totalorder 1, %s31
      %p314 = scmp.lt.s32.totalorder %s31, 5
      %p315 = pnand %p313, %p314
      %p316 = pneg %p315
      // Predicated region
      $region9: #{tpu_custom_call.1} parent=5 // pred_check
        _
      $region10: #{tpu_custom_call.1} parent=5 // pred_check_branch
        %318 = sbr.rel (%p315) target = $region12
      $region11: #{tpu_custom_call.1} parent=5 // pred_region
        %s319 = ssub.s32 %s31, 1
        // Predicated region
        $region13: #{tpu_custom_call.1} parent=11 // pred_check
          %p320 = pneg %p172
        $region14: #{tpu_custom_call.1} parent=11 // pred_check_branch
          %322 = sbr.rel (%p320) target = $region16
        $region15: #{tpu_custom_call.1} parent=11 // pred_region
          %s324 = ssub.s32 512, 512
          %325 = vsyncadd [#allocation13], %s324
          %s326 = sshll.u32 [#allocation14], 4
          %s327 = int_to_ptr.vmem [resolvable:$true] %s326
          %332 = dma.hbm_to_vmem [thread:$0]  %s4, 512, %s327, [#allocation13], 128, 128, 8
        $region16: #{tpu_custom_call.1} parent=11 // pred_fallthru
          _
        // Predicated region
        $region17: #{tpu_custom_call.1} parent=11 // pred_check
          %p333 = pneg %p193
        $region18: #{tpu_custom_call.1} parent=11 // pred_check_branch
          %335 = sbr.rel (%p333) target = $region20
        $region19: #{tpu_custom_call.1} parent=11 // pred_region
          %s337 = ssub.s32 16, 16
          %338 = vsyncadd [#allocation16], %s337
          %s340 = sshll.u32 [#allocation15], 4
          %s341 = int_to_ptr.vmem [resolvable:$true] %s340
          %343 = dma.hbm_to_vmem [thread:$0]  %s5, 16, %s341, [#allocation16]
        $region20: #{tpu_custom_call.1} parent=11 // pred_fallthru
          _
        // Predicated region
        $region21: #{tpu_custom_call.1} parent=11 // pred_check
          %p344 = pneg %p214
        $region22: #{tpu_custom_call.1} parent=11 // pred_check_branch
          %346 = sbr.rel (%p344) target = $region24
        $region23: #{tpu_custom_call.1} parent=11 // pred_region
          %s348 = ssub.s32 512, 512
          %349 = vsyncadd [#allocation16], %s348
          %s350 = sshll.u32 [#allocation17], 4
          %s351 = int_to_ptr.vmem [resolvable:$true] %s350
          %356 = dma.hbm_to_vmem [thread:$0]  %s6, 512, %s351, [#allocation16], 128, 128, 8
        $region24: #{tpu_custom_call.1} parent=11 // pred_fallthru
          _
        // Predicated region
        $region25: #{tpu_custom_call.1} parent=11 // pred_check
          %p357 = pneg %p235
        $region26: #{tpu_custom_call.1} parent=11 // pred_check_branch
          %359 = sbr.rel (%p357) target = $region28
        $region27: #{tpu_custom_call.1} parent=11 // pred_region
          %s361 = ssub.s32 16, 16
          %362 = vsyncadd [#allocation19], %s361
          %s364 = sshll.u32 [#allocation18], 4
          %s365 = int_to_ptr.vmem [resolvable:$true] %s364
          %367 = dma.hbm_to_vmem [thread:$0]  %s7, 16, %s365, [#allocation19]
        $region28: #{tpu_custom_call.1} parent=11 // pred_fallthru
          _
        // Predicated region
        $region29: #{tpu_custom_call.1} parent=11 // pred_check
          %p368 = pneg %p256
        $region30: #{tpu_custom_call.1} parent=11 // pred_check_branch
          %370 = sbr.rel (%p368) target = $region32
        $region31: #{tpu_custom_call.1} parent=11 // pred_region
          %s372 = ssub.s32 512, 512
          %373 = vsyncadd [#allocation19], %s372
          %s374 = sshll.u32 [#allocation20], 4
          %s375 = int_to_ptr.vmem [resolvable:$true] %s374
          %380 = dma.hbm_to_vmem [thread:$0]  %s8, 512, %s375, [#allocation19], 128, 128, 8
        $region32: #{tpu_custom_call.1} parent=11 // pred_fallthru
          _
        // Predicated region
        $region33: #{tpu_custom_call.1} parent=11 // pred_check
          %p381 = pneg %p277
        $region34: #{tpu_custom_call.1} parent=11 // pred_check_branch
          %383 = sbr.rel (%p381) target = $region36
        $region35: #{tpu_custom_call.1} parent=11 // pred_region
          %s385 = ssub.s32 16, 16
          %386 = vsyncadd [#allocation22], %s385
          %s388 = sshll.u32 [#allocation21], 4
          %s389 = int_to_ptr.vmem [resolvable:$true] %s388
          %391 = dma.hbm_to_vmem [thread:$0]  %s9, 16, %s389, [#allocation22]
        $region36: #{tpu_custom_call.1} parent=11 // pred_fallthru
          _
      $region12: #{tpu_custom_call.1} parent=5 // pred_fallthru
        _
      %p392 = scmp.lt.s32.totalorder %s31, 4
      // Predicated region
      $region37: #{tpu_custom_call.1} parent=5 // pred_check
        %p393 = pneg %p392
      $region38: #{tpu_custom_call.1} parent=5 // pred_check_branch
        %395 = sbr.rel (%p393) target = $region40
      $region39: #{tpu_custom_call.1} parent=5 // pred_region
        // Predicated region
        $region41: #{tpu_custom_call.1} parent=39 // pred_check
          %p396 = pneg %p65
        $region42: #{tpu_custom_call.1} parent=39 // pred_check_branch
          %398 = sbr.rel (%p396) target = $region44
        $region43: #{tpu_custom_call.1} parent=39 // pred_region
          %s399 = sand.u32 %s55, 1
          %s400 = scalar_lea.sflag [#allocation7], %s399
          %s401 = sand.u32 %s55, 1
          %s402 = smul.addr %s401, 32
          %s403 = scalar_lea.vmem [#allocation6], %s402
          %s404 = smul.u32 4, %s39
          %s406 = ssub.s32 512, 512
          %407 = vsyncadd %s400, %s406
          %s408 = smul.addr %s38, 8
          %s409 = sadd.s32 %s404, %s408
          %s410 = smul.addr %s409, 128
          %s411 = scalar_lea.hbm %s0, %s410
          %s412 = sshll.u32 %s403, 4
          %s413 = int_to_ptr.vmem [resolvable:$true] %s412
          %418 = dma.hbm_to_vmem [thread:$0]  %s411, 512, %s413, %s400, 128, 128, 8
        $region44: #{tpu_custom_call.1} parent=39 // pred_fallthru
          _
        // Predicated region
        $region45: #{tpu_custom_call.1} parent=39 // pred_check
          %p419 = pneg %p91
        $region46: #{tpu_custom_call.1} parent=39 // pred_check_branch
          %421 = sbr.rel (%p419) target = $region48
        $region47: #{tpu_custom_call.1} parent=39 // pred_region
          %s422 = sand.u32 %s31, 1
          %s423 = scalar_lea.sflag [#allocation10], %s422
          %s424 = sand.u32 %s81, 1
          %s425 = smul.addr %s424, 64
          %s426 = scalar_lea.vmem [#allocation9], %s425
          %s428 = ssub.s32 1024, 1024
          %429 = vsyncadd %s423, %s428
          %s430 = smul.addr %s38, 8
          %s431 = smul.addr %s430, 128
          %s432 = scalar_lea.hbm %s1, %s431
          %s433 = sshll.u32 %s426, 4
          %s434 = int_to_ptr.vmem [resolvable:$true] %s433
          %439 = dma.hbm_to_vmem [thread:$0]  %s432, 1024, %s434, %s423, 128, 128, 8
        $region48: #{tpu_custom_call.1} parent=39 // pred_fallthru
          _
        // Predicated region
        $region49: #{tpu_custom_call.1} parent=39 // pred_check
          %p440 = pneg %p117
        $region50: #{tpu_custom_call.1} parent=39 // pred_check_branch
          %442 = sbr.rel (%p440) target = $region52
        $region51: #{tpu_custom_call.1} parent=39 // pred_region
          %s443 = sand.u32 %s31, 1
          %s444 = scalar_lea.sflag [#allocation10], %s443
          %s445 = sand.u32 %s107, 1
          %s446 = smul.addr %s445, 64
          %s447 = scalar_lea.vmem [#allocation11], %s446
          %s449 = ssub.s32 1024, 1024
          %450 = vsyncadd %s444, %s449
          %s451 = smul.addr %s38, 8
          %s452 = smul.addr %s451, 128
          %s453 = scalar_lea.hbm %s2, %s452
          %s454 = sshll.u32 %s447, 4
          %s455 = int_to_ptr.vmem [resolvable:$true] %s454
          %460 = dma.hbm_to_vmem [thread:$0]  %s453, 1024, %s455, %s444, 128, 128, 8
        $region52: #{tpu_custom_call.1} parent=39 // pred_fallthru
          _
        // Predicated region
        $region53: #{tpu_custom_call.1} parent=39 // pred_check
          %p461 = pneg %p145
        $region54: #{tpu_custom_call.1} parent=39 // pred_check_branch
          %463 = sbr.rel (%p461) target = $region56
        $region55: #{tpu_custom_call.1} parent=39 // pred_region
          %s464 = sand.u32 %s31, 1
          %s465 = scalar_lea.sflag [#allocation13], %s464
          %s466 = sand.u32 %s135, 1
          %s467 = smul.addr %s466, 8
          %s468 = scalar_lea.vmem [#allocation12], %s467
          %s470 = ssub.s32 128, 128
          %471 = vsyncadd %s465, %s470
          %s472 = smul.addr %s38, 2
          %s473 = sadd.s32 %s39, %s472
          %s474 = smul.addr %s473, 128
          %s475 = scalar_lea.hbm %s3, %s474
          %s477 = sshll.u32 %s468, 4
          %s478 = int_to_ptr.vmem [resolvable:$true] %s477
          %480 = dma.hbm_to_vmem [thread:$0]  %s475, 128, %s478, %s465
        $region56: #{tpu_custom_call.1} parent=39 // pred_fallthru
          _
      $region40: #{tpu_custom_call.1} parent=5 // pred_fallthru
        _
      %p481 = scmp.le.s32.totalorder 1, %s31
      %p482 = scmp.lt.s32.totalorder %s31, 5
      %p483 = pnand %p481, %p482
      %p484 = pneg %p483
      // Predicated region
      $region57: #{tpu_custom_call.1} parent=5 // pred_check
        _
      $region58: #{tpu_custom_call.1} parent=5 // pred_check_branch
        %486 = sbr.rel (%p483) target = $region60
      $region59: #{tpu_custom_call.1} parent=5 // pred_region
        %s487 = ssub.s32 %s31, 1
        %s488 = sand.u32 %s58, 1
        %s489 = scalar_lea.sflag [#allocation7], %s488
        %s490 = sand.u32 %s58, 1
        %s491 = smul.addr %s490, 32
        %s492 = scalar_lea.vmem [#allocation6], %s491
        // Predicated region
        $region61: #{tpu_custom_call.1} parent=59 // pred_check
          %p493 = pneg %p71
        $region62: #{tpu_custom_call.1} parent=59 // pred_check_branch
          %495 = sbr.rel (%p493) target = $region64
        $region63: #{tpu_custom_call.1} parent=59 // pred_region
          %496 = dma.done %s489, 512
        $region64: #{tpu_custom_call.1} parent=59 // pred_fallthru
          _
        %s497 = sand.u32 %s36, 1
        %s498 = scalar_lea.sflag [#allocation10], %s497
        %s499 = sand.u32 %s84, 1
        %s500 = smul.addr %s499, 64
        %s501 = scalar_lea.vmem [#allocation9], %s500
        // Predicated region
        $region65: #{tpu_custom_call.1} parent=59 // pred_check
          %p502 = pneg %p97
        $region66: #{tpu_custom_call.1} parent=59 // pred_check_branch
          %504 = sbr.rel (%p502) target = $region68
        $region67: #{tpu_custom_call.1} parent=59 // pred_region
          %505 = dma.done %s498, 1024
        $region68: #{tpu_custom_call.1} parent=59 // pred_fallthru
          _
        %s506 = sand.u32 %s36, 1
        %s507 = scalar_lea.sflag [#allocation10], %s506
        %s508 = sand.u32 %s110, 1
        %s509 = smul.addr %s508, 64
        %s510 = scalar_lea.vmem [#allocation11], %s509
        // Predicated region
        $region69: #{tpu_custom_call.1} parent=59 // pred_check
          %p511 = pneg %p123
        $region70: #{tpu_custom_call.1} parent=59 // pred_check_branch
          %513 = sbr.rel (%p511) target = $region72
        $region71: #{tpu_custom_call.1} parent=59 // pred_region
          %514 = dma.done %s507, 1024
        $region72: #{tpu_custom_call.1} parent=59 // pred_fallthru
          _
        %s515 = sand.u32 %s36, 1
        %s516 = scalar_lea.sflag [#allocation13], %s515
        %s517 = sand.u32 %s138, 1
        %s518 = smul.addr %s517, 8
        %s519 = scalar_lea.vmem [#allocation12], %s518
        // Predicated region
        $region73: #{tpu_custom_call.1} parent=59 // pred_check
          %p520 = pneg %p151
        $region74: #{tpu_custom_call.1} parent=59 // pred_check_branch
          %522 = sbr.rel (%p520) target = $region76
        $region75: #{tpu_custom_call.1} parent=59 // pred_region
          %523 = dma.done %s516, 128
        $region76: #{tpu_custom_call.1} parent=59 // pred_fallthru
          _
        // Predicated region
        $region77: #{tpu_custom_call.1} parent=59 // pred_check
          %p524 = pneg %p172
        $region78: #{tpu_custom_call.1} parent=59 // pred_check_branch
          %526 = sbr.rel (%p524) target = $region80
        $region79: #{tpu_custom_call.1} parent=59 // pred_region
          %527 = dma.done [#allocation13], 512
        $region80: #{tpu_custom_call.1} parent=59 // pred_fallthru
          _
        // Predicated region
        $region81: #{tpu_custom_call.1} parent=59 // pred_check
          %p528 = pneg %p193
        $region82: #{tpu_custom_call.1} parent=59 // pred_check_branch
          %530 = sbr.rel (%p528) target = $region84
        $region83: #{tpu_custom_call.1} parent=59 // pred_region
          %531 = dma.done [#allocation16], 16
        $region84: #{tpu_custom_call.1} parent=59 // pred_fallthru
          _
        // Predicated region
        $region85: #{tpu_custom_call.1} parent=59 // pred_check
          %p532 = pneg %p214
        $region86: #{tpu_custom_call.1} parent=59 // pred_check_branch
          %534 = sbr.rel (%p532) target = $region88
        $region87: #{tpu_custom_call.1} parent=59 // pred_region
          %535 = dma.done [#allocation16], 512
        $region88: #{tpu_custom_call.1} parent=59 // pred_fallthru
          _
        // Predicated region
        $region89: #{tpu_custom_call.1} parent=59 // pred_check
          %p536 = pneg %p235
        $region90: #{tpu_custom_call.1} parent=59 // pred_check_branch
          %538 = sbr.rel (%p536) target = $region92
        $region91: #{tpu_custom_call.1} parent=59 // pred_region
          %539 = dma.done [#allocation19], 16
        $region92: #{tpu_custom_call.1} parent=59 // pred_fallthru
          _
        // Predicated region
        $region93: #{tpu_custom_call.1} parent=59 // pred_check
          %p540 = pneg %p256
        $region94: #{tpu_custom_call.1} parent=59 // pred_check_branch
          %542 = sbr.rel (%p540) target = $region96
        $region95: #{tpu_custom_call.1} parent=59 // pred_region
          %543 = dma.done [#allocation19], 512
        $region96: #{tpu_custom_call.1} parent=59 // pred_fallthru
          _
        // Predicated region
        $region97: #{tpu_custom_call.1} parent=59 // pred_check
          %p544 = pneg %p277
        $region98: #{tpu_custom_call.1} parent=59 // pred_check_branch
          %546 = sbr.rel (%p544) target = $region100
        $region99: #{tpu_custom_call.1} parent=59 // pred_region
          %547 = dma.done [#allocation22], 16
        $region100: #{tpu_custom_call.1} parent=59 // pred_fallthru
          _
        %s548 = sand.u32 %s58, 1
        %s549 = scalar_lea.sflag [#allocation7], %s548
        %s550 = sand.u32 %s58, 1
        %s551 = smul.addr %s550, 32
        %s552 = scalar_lea.vmem [#allocation6], %s551
        %p553 = pneg %p71
        %p554 = pneg %p68
        %s555 = sand.u32 %s36, 1
        %s556 = scalar_lea.sflag [#allocation10], %s555
        %s557 = sand.u32 %s84, 1
        %s558 = smul.addr %s557, 64
        %s559 = scalar_lea.vmem [#allocation9], %s558
        %p560 = pneg %p97
        %p561 = pneg %p94
        %s562 = sand.u32 %s36, 1
        %s563 = scalar_lea.sflag [#allocation10], %s562
        %s564 = sand.u32 %s110, 1
        %s565 = smul.addr %s564, 64
        %s566 = scalar_lea.vmem [#allocation11], %s565
        %p567 = pneg %p123
        %p568 = pneg %p120
        %s569 = sand.u32 %s36, 1
        %s570 = scalar_lea.sflag [#allocation13], %s569
        %s571 = sand.u32 %s138, 1
        %s572 = smul.addr %s571, 8
        %s573 = scalar_lea.vmem [#allocation12], %s572
        %p574 = pneg %p151
        %p575 = pneg %p148
        %p576 = pneg %p172
        %p577 = pneg %p169
        %p578 = pneg %p193
        %p579 = pneg %p190
        %p580 = pneg %p214
        %p581 = pneg %p211
        %p582 = pneg %p235
        %p583 = pneg %p232
        %p584 = pneg %p256
        %p585 = pneg %p253
        %p586 = pneg %p277
        %p587 = pneg %p274
        %p588 = pneg %p305
        %p589 = pneg %p302
        %s590 = sand.u32 %s292, 1
        %s591 = scalar_lea.sflag [#allocation8], %s590
        %s592 = sand.u32 %s292, 1
        %s593 = smul.addr %s592, 32
        %s594 = scalar_lea.vmem [#allocation23], %s593
        %s595 = smul.u32 4, %s41
        %s596 = smul.u32 4, %s41
        %p597 = scmp.eq.s32.totalorder %s41, 0
        // Predicated region
        $region101: #{tpu_custom_call.1} parent=59 // pred_check
          %p598 = pneg %p597
        $region102: #{tpu_custom_call.1} parent=59 // pred_check_branch
          %600 = sbr.rel (%p598) target = $region104
        $region103: #{tpu_custom_call.1} parent=59 // pred_region
          %v601 = vld [vmem:[%s501] sm:$0xff]
          %v602 = vld [vmem:[%s501 + $0x8] sm:$0xff]
          %v603 = vld [vmem:[%s501 + $0x10] sm:$0xff]
          %v604 = vld [vmem:[%s501 + $0x18] sm:$0xff]
          %v605 = vld [vmem:[%s501 + $0x20] sm:$0xff]
          %v606 = vld [vmem:[%s501 + $0x28] sm:$0xff]
          %v607 = vld [vmem:[%s501 + $0x30] sm:$0xff]
          %v608 = vld [vmem:[%s501 + $0x38] sm:$0xff]
          %v609 = vld [vmem:[#allocation17] sm:$0xff]
          %v610 = vld [vmem:[#allocation17 + $0x8] sm:$0xff]
          %v611 = vld [vmem:[#allocation17 + $0x10] sm:$0xff]
          %v612 = vld [vmem:[#allocation17 + $0x18] sm:$0xff]
          %v613 = vld [vmem:[#allocation18] sm:$0x1]
          %v615 = vlaneseq
          %v616 = vshrl.u32 %v615, 7
          %v617 = vsub.s32 0, %v616
          %v618 = vrot.slane %v613, %v617
          %vm620 = vcmask 261120
          %v622 = vsel %vm620, %v601, 0
          %v625 = vsel %vm620, %v602, 0
          %v628 = vsel %vm620, %v603, 0
          %v631 = vsel %vm620, %v604, 0
          %v634 = vsel %vm620, %v605, 0
          %v637 = vsel %vm620, %v606, 0
          %v640 = vsel %vm620, %v607, 0
          %v643 = vsel %vm620, %v608, 0
          %645 = vmatprep.subr.mxu0 0.0
          %646 = vmatpush1.msra.mxu0 %v609
          %647 = vmatprep.subr.mxu0 0.0
          %648 = vmatpush1.msra.mxu0 %v610
          %649 = vmatprep.subr.mxu0 0.0
          %650 = vmatpush1.msra.mxu0 %v611
          %651 = vmatprep.subr.mxu0 0.0
          %652 = vmatpush1.msra.mxu0 %v612
          %653 = vmatprep.subr.mxu0 0.0
          %654 = vmatpush1.msra.mxu0 0.0
          %655 = vmatprep.subr.mxu0 0.0
          %656 = vmatpush1.msra.mxu0 0.0
          %657 = vmatprep.subr.mxu0 0.0
          %658 = vmatpush1.msra.mxu0 0.0
          %659 = vmatprep.subr.mxu0 0.0
          %660 = vmatpush1.msra.mxu0 0.0
          %661 = vmatprep.subr.mxu0 0.0
          %662 = vmatpush1.msra.mxu0 0.0
          %663 = vmatprep.subr.mxu0 0.0
          %664 = vmatpush1.msra.mxu0 0.0
          %665 = vmatprep.subr.mxu0 0.0
          %666 = vmatpush1.msra.mxu0 0.0
          %667 = vmatprep.subr.mxu0 0.0
          %668 = vmatpush1.msra.mxu0 0.0
          %669 = vmatprep.subr.mxu0 0.0
          %670 = vmatpush1.msra.mxu0 0.0
          %671 = vmatprep.subr.mxu0 0.0
          %672 = vmatpush1.msra.mxu0 0.0
          %673 = vmatprep.subr.mxu0 0.0
          %674 = vmatpush1.msra.mxu0 0.0
          %675 = vmatprep.subr.mxu0 0.0
          %676 = vmatpush1.msra.mxu0 0.0
          %677 = vmatprep.subr.mxu0 0.0
          %678 = vmatpush1.msra.mxu0 0.0
          %679 = vmatprep.subr.mxu0 0.0
          %680 = vmatpush1.msra.mxu0 0.0
          %681 = vmatprep.subr.mxu0 0.0
          %682 = vmatpush1.msra.mxu0 0.0
          %683 = vmatprep.subr.mxu0 0.0
          %684 = vmatpush1.msra.mxu0 0.0
          %685 = vmatprep.subr.mxu0 0.0
          %686 = vmatpush1.msra.mxu0 0.0
          %687 = vmatprep.subr.mxu0 0.0
          %688 = vmatpush1.msra.mxu0 0.0
          %689 = vmatprep.subr.mxu0 0.0
          %690 = vmatpush1.msra.mxu0 0.0
          %691 = vmatprep.subr.mxu0 0.0
          %692 = vmatpush1.msra.mxu0 0.0
          %693 = vmatprep.subr.mxu0 0.0
          %694 = vmatpush1.msra.mxu0 0.0
          %695 = vmatprep.subr.mxu0 0.0
          %696 = vmatpush1.msra.mxu0 0.0
          %697 = vmatprep.subr.mxu0 0.0
          %698 = vmatpush1.msra.mxu0 0.0
          %699 = vmatprep.subr.mxu0 0.0
          %700 = vmatpush1.msra.mxu0 0.0
          %701 = vmatprep.subr.mxu0 0.0
          %702 = vmatpush1.msra.mxu0 0.0
          %703 = vmatprep.subr.mxu0 0.0
          %704 = vmatpush1.msra.mxu0 0.0
          %705 = vmatprep.subr.mxu0 0.0
          %706 = vmatpush1.msra.mxu0 0.0
          %707 = vmatprep.subr.mxu0 0.0
          %708 = vmatpush1.msra.mxu0 0.0
          %709 = vmatprep.mubr.f32.mxu0 0.0
          %710 = vmatmul.mubr.f32.gmra.mrb[0].mxu0 %v622
          %v711 = vpop.f32.mrb[0].mxu0
          %v712 = vadd.f32 %v618, %v711
          %v713 = vpop.f32.mrb[0].mxu0
          %714 = vmatprep.mubr.f32.mxu0 0.0
          %715 = vmatmul.mubr.f32.gmra.mrb[0].mxu0 %v625
          %v716 = vpop.f32.mrb[0].mxu0
          %v717 = vadd.f32 %v618, %v716
          %v718 = vpop.f32.mrb[0].mxu0
          %719 = vmatprep.mubr.f32.mxu0 0.0
          %720 = vmatmul.mubr.f32.gmra.mrb[0].mxu0 %v628
          %v721 = vpop.f32.mrb[0].mxu0
          %v722 = vadd.f32 %v618, %v721
          %v723 = vpop.f32.mrb[0].mxu0
          %724 = vmatprep.mubr.f32.mxu0 0.0
          %725 = vmatmul.mubr.f32.gmra.mrb[0].mxu0 %v631
          %v726 = vpop.f32.mrb[0].mxu0
          %v727 = vadd.f32 %v618, %v726
          %v728 = vpop.f32.mrb[0].mxu0
          %729 = vmatprep.mubr.f32.mxu0 0.0
          %730 = vmatmul.mubr.f32.gmra.mrb[0].mxu0 %v634
          %v731 = vpop.f32.mrb[0].mxu0
          %v732 = vadd.f32 %v618, %v731
          %v733 = vpop.f32.mrb[0].mxu0
          %734 = vmatprep.mubr.f32.mxu0 0.0
          %735 = vmatmul.mubr.f32.gmra.mrb[0].mxu0 %v637
          %v736 = vpop.f32.mrb[0].mxu0
          %v737 = vadd.f32 %v618, %v736
          %v738 = vpop.f32.mrb[0].mxu0
          %739 = vmatprep.mubr.f32.mxu0 0.0
          %740 = vmatmul.mubr.f32.gmra.mrb[0].mxu0 %v640
          %v741 = vpop.f32.mrb[0].mxu0
          %v742 = vadd.f32 %v618, %v741
          %v743 = vpop.f32.mrb[0].mxu0
          %744 = vmatprep.mubr.f32.mxu0 0.0
          %745 = vmatmul.mubr.f32.gmra.mrb[0].mxu0 %v643
          %v746 = vpop.f32.mrb[0].mxu0
          %v747 = vadd.f32 %v618, %v746
          %v748 = vpop.f32.mrb[0].mxu0
          %749 = vdwg.mxu0
          %v750 = vld [vmem:[%s510] sm:$0xff]
          %v751 = vld [vmem:[%s510 + $0x8] sm:$0xff]
          %v752 = vld [vmem:[%s510 + $0x10] sm:$0xff]
          %v753 = vld [vmem:[%s510 + $0x18] sm:$0xff]
          %v754 = vld [vmem:[%s510 + $0x20] sm:$0xff]
          %v755 = vld [vmem:[%s510 + $0x28] sm:$0xff]
          %v756 = vld [vmem:[%s510 + $0x30] sm:$0xff]
          %v757 = vld [vmem:[%s510 + $0x38] sm:$0xff]
          %762 = vrot.lane.b32.xlu0 %v609, 96
          %v763 = vpop.permute.xlu0 %762
          %764 = vrot.lane.b32.xlu0 %v610, 96
          %v765 = vpop.permute.xlu0 %764
          %766 = vrot.lane.b32.xlu0 %v611, 96
          %v767 = vpop.permute.xlu0 %766
          %768 = vrot.lane.b32.xlu0 %v612, 96
          %v769 = vpop.permute.xlu0 %768
          %774 = vrot.lane.b32.xlu0 %v618, 96
          %v775 = vpop.permute.xlu0 %774
          %v778 = vsel %vm620, %v750, 0
          %v781 = vsel %vm620, %v751, 0
          %v784 = vsel %vm620, %v752, 0
          %v787 = vsel %vm620, %v753, 0
          %v790 = vsel %vm620, %v754, 0
          %v793 = vsel %vm620, %v755, 0
          %v796 = vsel %vm620, %v756, 0
          %v799 = vsel %vm620, %v757, 0
          %801 = vmatprep.subr.mxu0 0.0
          %802 = vmatpush1.msra.mxu0 %v763
          %803 = vmatprep.subr.mxu0 0.0
          %804 = vmatpush1.msra.mxu0 %v765
          %805 = vmatprep.subr.mxu0 0.0
          %806 = vmatpush1.msra.mxu0 %v767
          %807 = vmatprep.subr.mxu0 0.0
          %808 = vmatpush1.msra.mxu0 %v769
          %809 = vmatprep.subr.mxu0 0.0
          %810 = vmatpush1.msra.mxu0 0.0
          %811 = vmatprep.subr.mxu0 0.0
          %812 = vmatpush1.msra.mxu0 0.0
          %813 = vmatprep.subr.mxu0 0.0
          %814 = vmatpush1.msra.mxu0 0.0
          %815 = vmatprep.subr.mxu0 0.0
          %816 = vmatpush1.msra.mxu0 0.0
          %817 = vmatprep.subr.mxu0 0.0
          %818 = vmatpush1.msra.mxu0 0.0
          %819 = vmatprep.subr.mxu0 0.0
          %820 = vmatpush1.msra.mxu0 0.0
          %821 = vmatprep.subr.mxu0 0.0
          %822 = vmatpush1.msra.mxu0 0.0
          %823 = vmatprep.subr.mxu0 0.0
          %824 = vmatpush1.msra.mxu0 0.0
          %825 = vmatprep.subr.mxu0 0.0
          %826 = vmatpush1.msra.mxu0 0.0
          %827 = vmatprep.subr.mxu0 0.0
          %828 = vmatpush1.msra.mxu0 0.0
          %829 = vmatprep.subr.mxu0 0.0
          %830 = vmatpush1.msra.mxu0 0.0
          %831 = vmatprep.subr.mxu0 0.0
          %832 = vmatpush1.msra.mxu0 0.0
          %833 = vmatprep.subr.mxu0 0.0
          %834 = vmatpush1.msra.mxu0 0.0
          %835 = vmatprep.subr.mxu0 0.0
          %836 = vmatpush1.msra.mxu0 0.0
          %837 = vmatprep.subr.mxu0 0.0
          %838 = vmatpush1.msra.mxu0 0.0
          %839 = vmatprep.subr.mxu0 0.0
          %840 = vmatpush1.msra.mxu0 0.0
          %841 = vmatprep.subr.mxu0 0.0
          %842 = vmatpush1.msra.mxu0 0.0
          %843 = vmatprep.subr.mxu0 0.0
          %844 = vmatpush1.msra.mxu0 0.0
          %845 = vmatprep.subr.mxu0 0.0
          %846 = vmatpush1.msra.mxu0 0.0
          %847 = vmatprep.subr.mxu0 0.0
          %848 = vmatpush1.msra.mxu0 0.0
          %849 = vmatprep.subr.mxu0 0.0
          %850 = vmatpush1.msra.mxu0 0.0
          %851 = vmatprep.subr.mxu0 0.0
          %852 = vmatpush1.msra.mxu0 0.0
          %853 = vmatprep.subr.mxu0 0.0
          %854 = vmatpush1.msra.mxu0 0.0
          %855 = vmatprep.subr.mxu0 0.0
          %856 = vmatpush1.msra.mxu0 0.0
          %857 = vmatprep.subr.mxu0 0.0
          %858 = vmatpush1.msra.mxu0 0.0
          %859 = vmatprep.subr.mxu0 0.0
          %860 = vmatpush1.msra.mxu0 0.0
          %861 = vmatprep.subr.mxu0 0.0
          %862 = vmatpush1.msra.mxu0 0.0
          %863 = vmatprep.subr.mxu0 0.0
          %864 = vmatpush1.msra.mxu0 0.0
          %865 = vmatprep.mubr.f32.mxu0 0.0
          %866 = vmatmul.mubr.f32.gmra.mrb[0].mxu0 %v778
          %v867 = vpop.f32.mrb[0].mxu0
          %v868 = vadd.f32 %v775, %v867
          %v869 = vpop.f32.mrb[0].mxu0
          %870 = vmatprep.mubr.f32.mxu0 0.0
          %871 = vmatmul.mubr.f32.gmra.mrb[0].mxu0 %v781
          %v872 = vpop.f32.mrb[0].mxu0
          %v873 = vadd.f32 %v775, %v872
          %v874 = vpop.f32.mrb[0].mxu0
          %875 = vmatprep.mubr.f32.mxu0 0.0
          %876 = vmatmul.mubr.f32.gmra.mrb[0].mxu0 %v784
          %v877 = vpop.f32.mrb[0].mxu0
          %v878 = vadd.f32 %v775, %v877
          %v879 = vpop.f32.mrb[0].mxu0
          %880 = vmatprep.mubr.f32.mxu0 0.0
          %881 = vmatmul.mubr.f32.gmra.mrb[0].mxu0 %v787
          %v882 = vpop.f32.mrb[0].mxu0
          %v883 = vadd.f32 %v775, %v882
          %v884 = vpop.f32.mrb[0].mxu0
          %885 = vmatprep.mubr.f32.mxu0 0.0
          %886 = vmatmul.mubr.f32.gmra.mrb[0].mxu0 %v790
          %v887 = vpop.f32.mrb[0].mxu0
          %v888 = vadd.f32 %v775, %v887
          %v889 = vpop.f32.mrb[0].mxu0
          %890 = vmatprep.mubr.f32.mxu0 0.0
          %891 = vmatmul.mubr.f32.gmra.mrb[0].mxu0 %v793
          %v892 = vpop.f32.mrb[0].mxu0
          %v893 = vadd.f32 %v775, %v892
          %v894 = vpop.f32.mrb[0].mxu0
          %895 = vmatprep.mubr.f32.mxu0 0.0
          %896 = vmatmul.mubr.f32.gmra.mrb[0].mxu0 %v796
          %v897 = vpop.f32.mrb[0].mxu0
          %v898 = vadd.f32 %v775, %v897
          %v899 = vpop.f32.mrb[0].mxu0
          %900 = vmatprep.mubr.f32.mxu0 0.0
          %901 = vmatmul.mubr.f32.gmra.mrb[0].mxu0 %v799
          %v902 = vpop.f32.mrb[0].mxu0
          %v903 = vadd.f32 %v775, %v902
          %v904 = vpop.f32.mrb[0].mxu0
          %905 = vdwg.mxu0
          %vm906 = vcmask 64512
          %907 = vst.msk [vmem:[#allocation2] sm:$0xff] %vm906, %v712
          %908 = vst.msk [vmem:[#allocation2 + $0x8] sm:$0xff] %vm906, %v717
          %909 = vst.msk [vmem:[#allocation2 + $0x10] sm:$0xff] %vm906, %v722
          %910 = vst.msk [vmem:[#allocation2 + $0x18] sm:$0xff] %vm906, %v727
          %911 = vst.msk [vmem:[#allocation2 + $0x20] sm:$0xff] %vm906, %v732
          %912 = vst.msk [vmem:[#allocation2 + $0x28] sm:$0xff] %vm906, %v737
          %913 = vst.msk [vmem:[#allocation2 + $0x30] sm:$0xff] %vm906, %v742
          %914 = vst.msk [vmem:[#allocation2 + $0x38] sm:$0xff] %vm906, %v747
          %915 = vst.msk [vmem:[#allocation3] sm:$0xff] %vm906, %v868
          %916 = vst.msk [vmem:[#allocation3 + $0x8] sm:$0xff] %vm906, %v873
          %917 = vst.msk [vmem:[#allocation3 + $0x10] sm:$0xff] %vm906, %v878
          %918 = vst.msk [vmem:[#allocation3 + $0x18] sm:$0xff] %vm906, %v883
          %919 = vst.msk [vmem:[#allocation3 + $0x20] sm:$0xff] %vm906, %v888
          %920 = vst.msk [vmem:[#allocation3 + $0x28] sm:$0xff] %vm906, %v893
          %921 = vst.msk [vmem:[#allocation3 + $0x30] sm:$0xff] %vm906, %v898
          %922 = vst.msk [vmem:[#allocation3 + $0x38] sm:$0xff] %vm906, %v903
          %931 = vrot.lane.b32.xlu0 %v712, 120
          %v932 = vpop.permute.xlu0 %931
          %933 = vrot.lane.b32.xlu0 %v717, 120
          %v934 = vpop.permute.xlu0 %933
          %935 = vrot.lane.b32.xlu0 %v722, 120
          %v936 = vpop.permute.xlu0 %935
          %937 = vrot.lane.b32.xlu0 %v727, 120
          %v938 = vpop.permute.xlu0 %937
          %939 = vrot.lane.b32.xlu0 %v732, 120
          %v940 = vpop.permute.xlu0 %939
          %941 = vrot.lane.b32.xlu0 %v737, 120
          %v942 = vpop.permute.xlu0 %941
          %943 = vrot.lane.b32.xlu0 %v742, 120
          %v944 = vpop.permute.xlu0 %943
          %945 = vrot.lane.b32.xlu0 %v747, 120
          %v946 = vpop.permute.xlu0 %945
          %s955 = scalar_lea.vmem [#allocation2], 64
          %956 = vst.msk [vmem:[%s955] sm:$0xff] %vm906, %v932
          %957 = vst.msk [vmem:[%s955 + $0x8] sm:$0xff] %vm906, %v934
          %958 = vst.msk [vmem:[%s955 + $0x10] sm:$0xff] %vm906, %v936
          %959 = vst.msk [vmem:[%s955 + $0x18] sm:$0xff] %vm906, %v938
          %960 = vst.msk [vmem:[%s955 + $0x20] sm:$0xff] %vm906, %v940
          %961 = vst.msk [vmem:[%s955 + $0x28] sm:$0xff] %vm906, %v942
          %962 = vst.msk [vmem:[%s955 + $0x30] sm:$0xff] %vm906, %v944
          %963 = vst.msk [vmem:[%s955 + $0x38] sm:$0xff] %vm906, %v946
          %972 = vrot.lane.b32.xlu0 %v868, 120
          %v973 = vpop.permute.xlu0 %972
          %974 = vrot.lane.b32.xlu0 %v873, 120
          %v975 = vpop.permute.xlu0 %974
          %976 = vrot.lane.b32.xlu0 %v878, 120
          %v977 = vpop.permute.xlu0 %976
          %978 = vrot.lane.b32.xlu0 %v883, 120
          %v979 = vpop.permute.xlu0 %978
          %980 = vrot.lane.b32.xlu0 %v888, 120
          %v981 = vpop.permute.xlu0 %980
          %982 = vrot.lane.b32.xlu0 %v893, 120
          %v983 = vpop.permute.xlu0 %982
          %984 = vrot.lane.b32.xlu0 %v898, 120
          %v985 = vpop.permute.xlu0 %984
          %986 = vrot.lane.b32.xlu0 %v903, 120
          %v987 = vpop.permute.xlu0 %986
          %s996 = scalar_lea.vmem [#allocation3], 64
          %997 = vst.msk [vmem:[%s996] sm:$0xff] %vm906, %v973
          %998 = vst.msk [vmem:[%s996 + $0x8] sm:$0xff] %vm906, %v975
          %999 = vst.msk [vmem:[%s996 + $0x10] sm:$0xff] %vm906, %v977
          %1000 = vst.msk [vmem:[%s996 + $0x18] sm:$0xff] %vm906, %v979
          %1001 = vst.msk [vmem:[%s996 + $0x20] sm:$0xff] %vm906, %v981
          %1002 = vst.msk [vmem:[%s996 + $0x28] sm:$0xff] %vm906, %v983
          %1003 = vst.msk [vmem:[%s996 + $0x30] sm:$0xff] %vm906, %v985
          %1004 = vst.msk [vmem:[%s996 + $0x38] sm:$0xff] %vm906, %v987
          %1005 = vrot.lane.b32.xlu0 %v712, 112
          %v1006 = vpop.permute.xlu0 %1005
          %1007 = vrot.lane.b32.xlu0 %v717, 112
          %v1008 = vpop.permute.xlu0 %1007
          %1009 = vrot.lane.b32.xlu0 %v722, 112
          %v1010 = vpop.permute.xlu0 %1009
          %1011 = vrot.lane.b32.xlu0 %v727, 112
          %v1012 = vpop.permute.xlu0 %1011
          %1013 = vrot.lane.b32.xlu0 %v732, 112
          %v1014 = vpop.permute.xlu0 %1013
          %1015 = vrot.lane.b32.xlu0 %v737, 112
          %v1016 = vpop.permute.xlu0 %1015
          %1017 = vrot.lane.b32.xlu0 %v742, 112
          %v1018 = vpop.permute.xlu0 %1017
          %1019 = vrot.lane.b32.xlu0 %v747, 112
          %v1020 = vpop.permute.xlu0 %1019
          %s1029 = scalar_lea.vmem [#allocation2], 128
          %1030 = vst.msk [vmem:[%s1029] sm:$0xff] %vm906, %v1006
          %1031 = vst.msk [vmem:[%s1029 + $0x8] sm:$0xff] %vm906, %v1008
          %1032 = vst.msk [vmem:[%s1029 + $0x10] sm:$0xff] %vm906, %v1010
          %1033 = vst.msk [vmem:[%s1029 + $0x18] sm:$0xff] %vm906, %v1012
          %1034 = vst.msk [vmem:[%s1029 + $0x20] sm:$0xff] %vm906, %v1014
          %1035 = vst.msk [vmem:[%s1029 + $0x28] sm:$0xff] %vm906, %v1016
          %1036 = vst.msk [vmem:[%s1029 + $0x30] sm:$0xff] %vm906, %v1018
          %1037 = vst.msk [vmem:[%s1029 + $0x38] sm:$0xff] %vm906, %v1020
          %1038 = vrot.lane.b32.xlu0 %v868, 112
          %v1039 = vpop.permute.xlu0 %1038
          %1040 = vrot.lane.b32.xlu0 %v873, 112
          %v1041 = vpop.permute.xlu0 %1040
          %1042 = vrot.lane.b32.xlu0 %v878, 112
          %v1043 = vpop.permute.xlu0 %1042
          %1044 = vrot.lane.b32.xlu0 %v883, 112
          %v1045 = vpop.permute.xlu0 %1044
          %1046 = vrot.lane.b32.xlu0 %v888, 112
          %v1047 = vpop.permute.xlu0 %1046
          %1048 = vrot.lane.b32.xlu0 %v893, 112
          %v1049 = vpop.permute.xlu0 %1048
          %1050 = vrot.lane.b32.xlu0 %v898, 112
          %v1051 = vpop.permute.xlu0 %1050
          %1052 = vrot.lane.b32.xlu0 %v903, 112
          %v1053 = vpop.permute.xlu0 %1052
          %s1062 = scalar_lea.vmem [#allocation3], 128
          %1063 = vst.msk [vmem:[%s1062] sm:$0xff] %vm906, %v1039
          %1064 = vst.msk [vmem:[%s1062 + $0x8] sm:$0xff] %vm906, %v1041
          %1065 = vst.msk [vmem:[%s1062 + $0x10] sm:$0xff] %vm906, %v1043
          %1066 = vst.msk [vmem:[%s1062 + $0x18] sm:$0xff] %vm906, %v1045
          %1067 = vst.msk [vmem:[%s1062 + $0x20] sm:$0xff] %vm906, %v1047
          %1068 = vst.msk [vmem:[%s1062 + $0x28] sm:$0xff] %vm906, %v1049
          %1069 = vst.msk [vmem:[%s1062 + $0x30] sm:$0xff] %vm906, %v1051
          %1070 = vst.msk [vmem:[%s1062 + $0x38] sm:$0xff] %vm906, %v1053
          %1071 = vrot.lane.b32.xlu0 %v712, 104
          %v1072 = vpop.permute.xlu0 %1071
          %1073 = vrot.lane.b32.xlu0 %v717, 104
          %v1074 = vpop.permute.xlu0 %1073
          %1075 = vrot.lane.b32.xlu0 %v722, 104
          %v1076 = vpop.permute.xlu0 %1075
          %1077 = vrot.lane.b32.xlu0 %v727, 104
          %v1078 = vpop.permute.xlu0 %1077
          %1079 = vrot.lane.b32.xlu0 %v732, 104
          %v1080 = vpop.permute.xlu0 %1079
          %1081 = vrot.lane.b32.xlu0 %v737, 104
          %v1082 = vpop.permute.xlu0 %1081
          %1083 = vrot.lane.b32.xlu0 %v742, 104
          %v1084 = vpop.permute.xlu0 %1083
          %1085 = vrot.lane.b32.xlu0 %v747, 104
          %v1086 = vpop.permute.xlu0 %1085
          %s1095 = scalar_lea.vmem [#allocation2], 192
          %1096 = vst.msk [vmem:[%s1095] sm:$0xff] %vm906, %v1072
          %1097 = vst.msk [vmem:[%s1095 + $0x8] sm:$0xff] %vm906, %v1074
          %1098 = vst.msk [vmem:[%s1095 + $0x10] sm:$0xff] %vm906, %v1076
          %1099 = vst.msk [vmem:[%s1095 + $0x18] sm:$0xff] %vm906, %v1078
          %1100 = vst.msk [vmem:[%s1095 + $0x20] sm:$0xff] %vm906, %v1080
          %1101 = vst.msk [vmem:[%s1095 + $0x28] sm:$0xff] %vm906, %v1082
          %1102 = vst.msk [vmem:[%s1095 + $0x30] sm:$0xff] %vm906, %v1084
          %1103 = vst.msk [vmem:[%s1095 + $0x38] sm:$0xff] %vm906, %v1086
          %1104 = vrot.lane.b32.xlu0 %v868, 104
          %v1105 = vpop.permute.xlu0 %1104
          %1106 = vrot.lane.b32.xlu0 %v873, 104
          %v1107 = vpop.permute.xlu0 %1106
          %1108 = vrot.lane.b32.xlu0 %v878, 104
          %v1109 = vpop.permute.xlu0 %1108
          %1110 = vrot.lane.b32.xlu0 %v883, 104
          %v1111 = vpop.permute.xlu0 %1110
          %1112 = vrot.lane.b32.xlu0 %v888, 104
          %v1113 = vpop.permute.xlu0 %1112
          %1114 = vrot.lane.b32.xlu0 %v893, 104
          %v1115 = vpop.permute.xlu0 %1114
          %1116 = vrot.lane.b32.xlu0 %v898, 104
          %v1117 = vpop.permute.xlu0 %1116
          %1118 = vrot.lane.b32.xlu0 %v903, 104
          %v1119 = vpop.permute.xlu0 %1118
          %s1128 = scalar_lea.vmem [#allocation3], 192
          %1129 = vst.msk [vmem:[%s1128] sm:$0xff] %vm906, %v1105
          %1130 = vst.msk [vmem:[%s1128 + $0x8] sm:$0xff] %vm906, %v1107
          %1131 = vst.msk [vmem:[%s1128 + $0x10] sm:$0xff] %vm906, %v1109
          %1132 = vst.msk [vmem:[%s1128 + $0x18] sm:$0xff] %vm906, %v1111
          %1133 = vst.msk [vmem:[%s1128 + $0x20] sm:$0xff] %vm906, %v1113
          %1134 = vst.msk [vmem:[%s1128 + $0x28] sm:$0xff] %vm906, %v1115
          %1135 = vst.msk [vmem:[%s1128 + $0x30] sm:$0xff] %vm906, %v1117
          %1136 = vst.msk [vmem:[%s1128 + $0x38] sm:$0xff] %vm906, %v1119
        $region104: #{tpu_custom_call.1} parent=59 // pred_fallthru
          _
        %v1137 = vld [vmem:[%s492] sm:$0xff]
        %v1138 = vld [vmem:[%s492 + $0x8] sm:$0xff]
        %v1139 = vld [vmem:[%s492 + $0x10] sm:$0xff]
        %v1140 = vld [vmem:[%s492 + $0x18] sm:$0xff]
        %v1141 = vld [vmem:[#allocation14] sm:$0xff]
        %v1142 = vld [vmem:[#allocation14 + $0x8] sm:$0xff]
        %v1143 = vld [vmem:[#allocation14 + $0x10] sm:$0xff]
        %v1144 = vld [vmem:[#allocation14 + $0x18] sm:$0xff]
        %v1145 = vld [vmem:[#allocation15] sm:$0x1]
        %v1147 = vlaneseq
        %v1148 = vshrl.u32 %v1147, 7
        %v1149 = vsub.s32 0, %v1148
        %v1150 = vrot.slane %v1145, %v1149
        %vm1152 = vcmask 261120
        %v1154 = vsel %vm1152, %v1137, 0
        %v1157 = vsel %vm1152, %v1138, 0
        %v1160 = vsel %vm1152, %v1139, 0
        %v1163 = vsel %vm1152, %v1140, 0
        %1165 = vmatprep.subr.mxu0 0.0
        %1166 = vmatpush1.msra.mxu0 %v1141
        %1167 = vmatprep.subr.mxu0 0.0
        %1168 = vmatpush1.msra.mxu0 %v1142
        %1169 = vmatprep.subr.mxu0 0.0
        %1170 = vmatpush1.msra.mxu0 %v1143
        %1171 = vmatprep.subr.mxu0 0.0
        %1172 = vmatpush1.msra.mxu0 %v1144
        %1173 = vmatprep.subr.mxu0 0.0
        %1174 = vmatpush1.msra.mxu0 0.0
        %1175 = vmatprep.subr.mxu0 0.0
        %1176 = vmatpush1.msra.mxu0 0.0
        %1177 = vmatprep.subr.mxu0 0.0
        %1178 = vmatpush1.msra.mxu0 0.0
        %1179 = vmatprep.subr.mxu0 0.0
        %1180 = vmatpush1.msra.mxu0 0.0
        %1181 = vmatprep.subr.mxu0 0.0
        %1182 = vmatpush1.msra.mxu0 0.0
        %1183 = vmatprep.subr.mxu0 0.0
        %1184 = vmatpush1.msra.mxu0 0.0
        %1185 = vmatprep.subr.mxu0 0.0
        %1186 = vmatpush1.msra.mxu0 0.0
        %1187 = vmatprep.subr.mxu0 0.0
        %1188 = vmatpush1.msra.mxu0 0.0
        %1189 = vmatprep.subr.mxu0 0.0
        %1190 = vmatpush1.msra.mxu0 0.0
        %1191 = vmatprep.subr.mxu0 0.0
        %1192 = vmatpush1.msra.mxu0 0.0
        %1193 = vmatprep.subr.mxu0 0.0
        %1194 = vmatpush1.msra.mxu0 0.0
        %1195 = vmatprep.subr.mxu0 0.0
        %1196 = vmatpush1.msra.mxu0 0.0
        %1197 = vmatprep.subr.mxu0 0.0
        %1198 = vmatpush1.msra.mxu0 0.0
        %1199 = vmatprep.subr.mxu0 0.0
        %1200 = vmatpush1.msra.mxu0 0.0
        %1201 = vmatprep.subr.mxu0 0.0
        %1202 = vmatpush1.msra.mxu0 0.0
        %1203 = vmatprep.subr.mxu0 0.0
        %1204 = vmatpush1.msra.mxu0 0.0
        %1205 = vmatprep.subr.mxu0 0.0
        %1206 = vmatpush1.msra.mxu0 0.0
        %1207 = vmatprep.subr.mxu0 0.0
        %1208 = vmatpush1.msra.mxu0 0.0
        %1209 = vmatprep.subr.mxu0 0.0
        %1210 = vmatpush1.msra.mxu0 0.0
        %1211 = vmatprep.subr.mxu0 0.0
        %1212 = vmatpush1.msra.mxu0 0.0
        %1213 = vmatprep.subr.mxu0 0.0
        %1214 = vmatpush1.msra.mxu0 0.0
        %1215 = vmatprep.subr.mxu0 0.0
        %1216 = vmatpush1.msra.mxu0 0.0
        %1217 = vmatprep.subr.mxu0 0.0
        %1218 = vmatpush1.msra.mxu0 0.0
        %1219 = vmatprep.subr.mxu0 0.0
        %1220 = vmatpush1.msra.mxu0 0.0
        %1221 = vmatprep.subr.mxu0 0.0
        %1222 = vmatpush1.msra.mxu0 0.0
        %1223 = vmatprep.subr.mxu0 0.0
        %1224 = vmatpush1.msra.mxu0 0.0
        %1225 = vmatprep.subr.mxu0 0.0
        %1226 = vmatpush1.msra.mxu0 0.0
        %1227 = vmatprep.subr.mxu0 0.0
        %1228 = vmatpush1.msra.mxu0 0.0
        %1229 = vmatprep.mubr.f32.mxu0 0.0
        %1230 = vmatmul.mubr.f32.gmra.mrb[0].mxu0 %v1154
        %v1231 = vpop.f32.mrb[0].mxu0
        %v1232 = vadd.f32 %v1150, %v1231
        %v1233 = vpop.f32.mrb[0].mxu0
        %1234 = vmatprep.mubr.f32.mxu0 0.0
        %1235 = vmatmul.mubr.f32.gmra.mrb[0].mxu0 %v1157
        %v1236 = vpop.f32.mrb[0].mxu0
        %v1237 = vadd.f32 %v1150, %v1236
        %v1238 = vpop.f32.mrb[0].mxu0
        %1239 = vmatprep.mubr.f32.mxu0 0.0
        %1240 = vmatmul.mubr.f32.gmra.mrb[0].mxu0 %v1160
        %v1241 = vpop.f32.mrb[0].mxu0
        %v1242 = vadd.f32 %v1150, %v1241
        %v1243 = vpop.f32.mrb[0].mxu0
        %1244 = vmatprep.mubr.f32.mxu0 0.0
        %1245 = vmatmul.mubr.f32.gmra.mrb[0].mxu0 %v1163
        %v1246 = vpop.f32.mrb[0].mxu0
        %v1247 = vadd.f32 %v1150, %v1246
        %v1248 = vpop.f32.mrb[0].mxu0
        %1249 = vdwg.mxu0
        %vm1250 = vcmask 64512
        %1251 = vst.msk [vmem:[#allocation4] sm:$0xff] %vm1250, %v1232
        %1252 = vst.msk [vmem:[#allocation4 + $0x8] sm:$0xff] %vm1250, %v1237
        %1253 = vst.msk [vmem:[#allocation4 + $0x10] sm:$0xff] %vm1250, %v1242
        %1254 = vst.msk [vmem:[#allocation4 + $0x18] sm:$0xff] %vm1250, %v1247
        %1259 = vrot.lane.b32.xlu0 %v1232, 120
        %v1260 = vpop.permute.xlu0 %1259
        %1261 = vrot.lane.b32.xlu0 %v1237, 120
        %v1262 = vpop.permute.xlu0 %1261
        %1263 = vrot.lane.b32.xlu0 %v1242, 120
        %v1264 = vpop.permute.xlu0 %1263
        %1265 = vrot.lane.b32.xlu0 %v1247, 120
        %v1266 = vpop.permute.xlu0 %1265
        %s1271 = scalar_lea.vmem [#allocation4], 32
        %1272 = vst.msk [vmem:[%s1271] sm:$0xff] %vm1250, %v1260
        %1273 = vst.msk [vmem:[%s1271 + $0x8] sm:$0xff] %vm1250, %v1262
        %1274 = vst.msk [vmem:[%s1271 + $0x10] sm:$0xff] %vm1250, %v1264
        %1275 = vst.msk [vmem:[%s1271 + $0x18] sm:$0xff] %vm1250, %v1266
        %1276 = vrot.lane.b32.xlu0 %v1232, 112
        %v1277 = vpop.permute.xlu0 %1276
        %1278 = vrot.lane.b32.xlu0 %v1237, 112
        %v1279 = vpop.permute.xlu0 %1278
        %1280 = vrot.lane.b32.xlu0 %v1242, 112
        %v1281 = vpop.permute.xlu0 %1280
        %1282 = vrot.lane.b32.xlu0 %v1247, 112
        %v1283 = vpop.permute.xlu0 %1282
        %s1288 = scalar_lea.vmem [#allocation4], 64
        %1289 = vst.msk [vmem:[%s1288] sm:$0xff] %vm1250, %v1277
        %1290 = vst.msk [vmem:[%s1288 + $0x8] sm:$0xff] %vm1250, %v1279
        %1291 = vst.msk [vmem:[%s1288 + $0x10] sm:$0xff] %vm1250, %v1281
        %1292 = vst.msk [vmem:[%s1288 + $0x18] sm:$0xff] %vm1250, %v1283
        %1293 = vrot.lane.b32.xlu0 %v1232, 104
        %v1294 = vpop.permute.xlu0 %1293
        %1295 = vrot.lane.b32.xlu0 %v1237, 104
        %v1296 = vpop.permute.xlu0 %1295
        %1297 = vrot.lane.b32.xlu0 %v1242, 104
        %v1298 = vpop.permute.xlu0 %1297
        %1299 = vrot.lane.b32.xlu0 %v1247, 104
        %v1300 = vpop.permute.xlu0 %1299
        %s1305 = scalar_lea.vmem [#allocation4], 96
        %1306 = vst.msk [vmem:[%s1305] sm:$0xff] %vm1250, %v1294
        %1307 = vst.msk [vmem:[%s1305 + $0x8] sm:$0xff] %vm1250, %v1296
        %1308 = vst.msk [vmem:[%s1305 + $0x10] sm:$0xff] %vm1250, %v1298
        %1309 = vst.msk [vmem:[%s1305 + $0x18] sm:$0xff] %vm1250, %v1300
        %v1310 = vld [vmem:[%s519] sm:$0xff]
        %v1311 = vunpack.c.0.s8 %v1310
        %v1312 = vunpack.c.1.s8 %v1310
        %v1313 = vunpack.c.2.s8 %v1310
        %v1314 = vunpack.c.3.s8 %v1310
        %vm1315 = vcmp.ne.s32.totalorder %v1311, 0
        %vm1316 = vcmp.ne.s32.totalorder %v1312, 0
        %vm1317 = vcmp.ne.s32.totalorder %v1313, 0
        %vm1318 = vcmp.ne.s32.totalorder %v1314, 0
        %v1319 = vsel %vm1315, 0.0, -1e+30
        %v1320 = vsel %vm1316, 0.0, -1e+30
        %v1321 = vsel %vm1317, 0.0, -1e+30
        %v1322 = vsel %vm1318, 0.0, -1e+30
        %v1323 = vld [vmem:[#allocation4] sm:$0xff]
        %v1324 = vld [vmem:[#allocation4 + $0x8] sm:$0xff]
        %v1325 = vld [vmem:[#allocation4 + $0x10] sm:$0xff]
        %v1326 = vld [vmem:[#allocation4 + $0x18] sm:$0xff]
        %v1327 = vld [vmem:[#allocation4 + $0x20] sm:$0xff]
        %v1328 = vld [vmem:[#allocation4 + $0x28] sm:$0xff]
        %v1329 = vld [vmem:[#allocation4 + $0x30] sm:$0xff]
        %v1330 = vld [vmem:[#allocation4 + $0x38] sm:$0xff]
        %v1331 = vld [vmem:[#allocation4 + $0x40] sm:$0xff]
        %v1332 = vld [vmem:[#allocation4 + $0x48] sm:$0xff]
        %v1333 = vld [vmem:[#allocation4 + $0x50] sm:$0xff]
        %v1334 = vld [vmem:[#allocation4 + $0x58] sm:$0xff]
        %v1335 = vld [vmem:[#allocation4 + $0x60] sm:$0xff]
        %v1336 = vld [vmem:[#allocation4 + $0x68] sm:$0xff]
        %v1337 = vld [vmem:[#allocation4 + $0x70] sm:$0xff]
        %v1338 = vld [vmem:[#allocation4 + $0x78] sm:$0xff]
        %v1339 = vld [vmem:[#allocation2] sm:$0xff]
        %v1340 = vld [vmem:[#allocation2 + $0x8] sm:$0xff]
        %v1341 = vld [vmem:[#allocation2 + $0x10] sm:$0xff]
        %v1342 = vld [vmem:[#allocation2 + $0x18] sm:$0xff]
        %v1343 = vld [vmem:[#allocation2 + $0x20] sm:$0xff]
        %v1344 = vld [vmem:[#allocation2 + $0x28] sm:$0xff]
        %v1345 = vld [vmem:[#allocation2 + $0x30] sm:$0xff]
        %v1346 = vld [vmem:[#allocation2 + $0x38] sm:$0xff]
        %v1347 = vld [vmem:[#allocation2 + $0x40] sm:$0xff]
        %v1348 = vld [vmem:[#allocation2 + $0x48] sm:$0xff]
        %v1349 = vld [vmem:[#allocation2 + $0x50] sm:$0xff]
        %v1350 = vld [vmem:[#allocation2 + $0x58] sm:$0xff]
        %v1351 = vld [vmem:[#allocation2 + $0x60] sm:$0xff]
        %v1352 = vld [vmem:[#allocation2 + $0x68] sm:$0xff]
        %v1353 = vld [vmem:[#allocation2 + $0x70] sm:$0xff]
        %v1354 = vld [vmem:[#allocation2 + $0x78] sm:$0xff]
        %v1355 = vld [vmem:[#allocation2 + $0x80] sm:$0xff]
        %v1356 = vld [vmem:[#allocation2 + $0x88] sm:$0xff]
        %v1357 = vld [vmem:[#allocation2 + $0x90] sm:$0xff]
        %v1358 = vld [vmem:[#allocation2 + $0x98] sm:$0xff]
        %v1359 = vld [vmem:[#allocation2 + $0xa0] sm:$0xff]
        %v1360 = vld [vmem:[#allocation2 + $0xa8] sm:$0xff]
        %v1361 = vld [vmem:[#allocation2 + $0xb0] sm:$0xff]
        %v1362 = vld [vmem:[#allocation2 + $0xb8] sm:$0xff]
        %v1363 = vld [vmem:[#allocation2 + $0xc0] sm:$0xff]
        %v1364 = vld [vmem:[#allocation2 + $0xc8] sm:$0xff]
        %v1365 = vld [vmem:[#allocation2 + $0xd0] sm:$0xff]
        %v1366 = vld [vmem:[#allocation2 + $0xd8] sm:$0xff]
        %v1367 = vld [vmem:[#allocation2 + $0xe0] sm:$0xff]
        %v1368 = vld [vmem:[#allocation2 + $0xe8] sm:$0xff]
        %v1369 = vld [vmem:[#allocation2 + $0xf0] sm:$0xff]
        %v1370 = vld [vmem:[#allocation2 + $0xf8] sm:$0xff]
        %v1371 = vld [vmem:[#allocation3] sm:$0xff]
        %v1372 = vld [vmem:[#allocation3 + $0x8] sm:$0xff]
        %v1373 = vld [vmem:[#allocation3 + $0x10] sm:$0xff]
        %v1374 = vld [vmem:[#allocation3 + $0x18] sm:$0xff]
        %v1375 = vld [vmem:[#allocation3 + $0x20] sm:$0xff]
        %v1376 = vld [vmem:[#allocation3 + $0x28] sm:$0xff]
        %v1377 = vld [vmem:[#allocation3 + $0x30] sm:$0xff]
        %v1378 = vld [vmem:[#allocation3 + $0x38] sm:$0xff]
        %v1379 = vld [vmem:[#allocation3 + $0x40] sm:$0xff]
        %v1380 = vld [vmem:[#allocation3 + $0x48] sm:$0xff]
        %v1381 = vld [vmem:[#allocation3 + $0x50] sm:$0xff]
        %v1382 = vld [vmem:[#allocation3 + $0x58] sm:$0xff]
        %v1383 = vld [vmem:[#allocation3 + $0x60] sm:$0xff]
        %v1384 = vld [vmem:[#allocation3 + $0x68] sm:$0xff]
        %v1385 = vld [vmem:[#allocation3 + $0x70] sm:$0xff]
        %v1386 = vld [vmem:[#allocation3 + $0x78] sm:$0xff]
        %v1387 = vld [vmem:[#allocation3 + $0x80] sm:$0xff]
        %v1388 = vld [vmem:[#allocation3 + $0x88] sm:$0xff]
        %v1389 = vld [vmem:[#allocation3 + $0x90] sm:$0xff]
        %v1390 = vld [vmem:[#allocation3 + $0x98] sm:$0xff]
        %v1391 = vld [vmem:[#allocation3 + $0xa0] sm:$0xff]
        %v1392 = vld [vmem:[#allocation3 + $0xa8] sm:$0xff]
        %v1393 = vld [vmem:[#allocation3 + $0xb0] sm:$0xff]
        %v1394 = vld [vmem:[#allocation3 + $0xb8] sm:$0xff]
        %v1395 = vld [vmem:[#allocation3 + $0xc0] sm:$0xff]
        %v1396 = vld [vmem:[#allocation3 + $0xc8] sm:$0xff]
        %v1397 = vld [vmem:[#allocation3 + $0xd0] sm:$0xff]
        %v1398 = vld [vmem:[#allocation3 + $0xd8] sm:$0xff]
        %v1399 = vld [vmem:[#allocation3 + $0xe0] sm:$0xff]
        %v1400 = vld [vmem:[#allocation3 + $0xe8] sm:$0xff]
        %v1401 = vld [vmem:[#allocation3 + $0xf0] sm:$0xff]
        %v1402 = vld [vmem:[#allocation3 + $0xf8] sm:$0xff]
        %v1404 = vsel %vm1250, %v1323, 0
        %v1407 = vsel %vm1250, %v1324, 0
        %v1410 = vsel %vm1250, %v1325, 0
        %v1413 = vsel %vm1250, %v1326, 0
        %v1416 = vsel %vm1250, %v1339, 0
        %v1419 = vsel %vm1250, %v1340, 0
        %v1422 = vsel %vm1250, %v1341, 0
        %v1425 = vsel %vm1250, %v1342, 0
        %v1428 = vsel %vm1250, %v1343, 0
        %v1431 = vsel %vm1250, %v1344, 0
        %v1434 = vsel %vm1250, %v1345, 0
        %v1437 = vsel %vm1250, %v1346, 0
        %1439 = vmatprep.subr.mxu0 0.0
        %1440 = vmatpush1.xpose.msra.mxu0 %v1416
        %1441 = vmatprep.subr.mxu0 0.0
        %1442 = vmatpush1.xpose.msra.mxu0 %v1419
        %1443 = vmatprep.subr.mxu0 0.0
        %1444 = vmatpush1.xpose.msra.mxu0 %v1422
        %1445 = vmatprep.subr.mxu0 0.0
        %1446 = vmatpush1.xpose.msra.mxu0 %v1425
        %1447 = vmatprep.subr.mxu0 0.0
        %1448 = vmatpush1.xpose.msra.mxu0 %v1428
        %1449 = vmatprep.subr.mxu0 0.0
        %1450 = vmatpush1.xpose.msra.mxu0 %v1431
        %1451 = vmatprep.subr.mxu0 0.0
        %1452 = vmatpush1.xpose.msra.mxu0 %v1434
        %1453 = vmatprep.subr.mxu0 0.0
        %1454 = vmatpush1.xpose.msra.mxu0 %v1437
        %1455 = vmatprep.subr.mxu0 0.0
        %1456 = vmatpush1.xpose.msra.mxu0 0.0
        %1457 = vmatprep.subr.mxu0 0.0
        %1458 = vmatpush1.xpose.msra.mxu0 0.0
        %1459 = vmatprep.subr.mxu0 0.0
        %1460 = vmatpush1.xpose.msra.mxu0 0.0
        %1461 = vmatprep.subr.mxu0 0.0
        %1462 = vmatpush1.xpose.msra.mxu0 0.0
        %1463 = vmatprep.subr.mxu0 0.0
        %1464 = vmatpush1.xpose.msra.mxu0 0.0
        %1465 = vmatprep.subr.mxu0 0.0
        %1466 = vmatpush1.xpose.msra.mxu0 0.0
        %1467 = vmatprep.subr.mxu0 0.0
        %1468 = vmatpush1.xpose.msra.mxu0 0.0
        %1469 = vmatprep.subr.mxu0 0.0
        %1470 = vmatpush1.xpose.msra.mxu0 0.0
        %1471 = vmatprep.subr.mxu0 0.0
        %1472 = vmatpush1.xpose.msra.mxu0 0.0
        %1473 = vmatprep.subr.mxu0 0.0
        %1474 = vmatpush1.xpose.msra.mxu0 0.0
        %1475 = vmatprep.subr.mxu0 0.0
        %1476 = vmatpush1.xpose.msra.mxu0 0.0
        %1477 = vmatprep.subr.mxu0 0.0
        %1478 = vmatpush1.xpose.msra.mxu0 0.0
        %1479 = vmatprep.subr.mxu0 0.0
        %1480 = vmatpush1.xpose.msra.mxu0 0.0
        %1481 = vmatprep.subr.mxu0 0.0
        %1482 = vmatpush1.xpose.msra.mxu0 0.0
        %1483 = vmatprep.subr.mxu0 0.0
        %1484 = vmatpush1.xpose.msra.mxu0 0.0
        %1485 = vmatprep.subr.mxu0 0.0
        %1486 = vmatpush1.xpose.msra.mxu0 0.0
        %1487 = vmatprep.subr.mxu0 0.0
        %1488 = vmatpush1.xpose.msra.mxu0 0.0
        %1489 = vmatprep.subr.mxu0 0.0
        %1490 = vmatpush1.xpose.msra.mxu0 0.0
        %1491 = vmatprep.subr.mxu0 0.0
        %1492 = vmatpush1.xpose.msra.mxu0 0.0
        %1493 = vmatprep.subr.mxu0 0.0
        %1494 = vmatpush1.xpose.msra.mxu0 0.0
        %1495 = vmatprep.subr.mxu0 0.0
        %1496 = vmatpush1.xpose.msra.mxu0 0.0
        %1497 = vmatprep.subr.mxu0 0.0
        %1498 = vmatpush1.xpose.msra.mxu0 0.0
        %1499 = vmatprep.subr.mxu0 0.0
        %1500 = vmatpush1.xpose.msra.mxu0 0.0
        %1501 = vmatprep.subr.mxu0 0.0
        %1502 = vmatpush1.xpose.msra.mxu0 0.0
        %1503 = vmatprep.mubr.f32.mxu0 0.0
        %1504 = vmatmul.mubr.f32.gmra.mrb[0].mxu0 %v1404
        %v1505 = vpop.f32.mrb[0].mxu0
        %v1506 = vadd.f32 %v1319, %v1505
        %v1507 = vpop.f32.mrb[0].mxu0
        %1508 = vmatprep.mubr.f32.mxu0 0.0
        %1509 = vmatmul.mubr.f32.gmra.mrb[0].mxu0 %v1407
        %v1510 = vpop.f32.mrb[0].mxu0
        %v1511 = vadd.f32 %v1320, %v1510
        %v1512 = vpop.f32.mrb[0].mxu0
        %1513 = vmatprep.mubr.f32.mxu0 0.0
        %1514 = vmatmul.mubr.f32.gmra.mrb[0].mxu0 %v1410
        %v1515 = vpop.f32.mrb[0].mxu0
        %v1516 = vadd.f32 %v1321, %v1515
        %v1517 = vpop.f32.mrb[0].mxu0
        %1518 = vmatprep.mubr.f32.mxu0 0.0
        %1519 = vmatmul.mubr.f32.gmra.mrb[0].mxu0 %v1413
        %v1520 = vpop.f32.mrb[0].mxu0
        %v1521 = vadd.f32 %v1322, %v1520
        %v1522 = vpop.f32.mrb[0].mxu0
        %1523 = vdwg.mxu0
        %v1525 = vsel %vm1250, %v1327, 0
        %v1528 = vsel %vm1250, %v1328, 0
        %v1531 = vsel %vm1250, %v1329, 0
        %v1534 = vsel %vm1250, %v1330, 0
        %v1537 = vsel %vm1250, %v1347, 0
        %v1540 = vsel %vm1250, %v1348, 0
        %v1543 = vsel %vm1250, %v1349, 0
        %v1546 = vsel %vm1250, %v1350, 0
        %v1549 = vsel %vm1250, %v1351, 0
        %v1552 = vsel %vm1250, %v1352, 0
        %v1555 = vsel %vm1250, %v1353, 0
        %v1558 = vsel %vm1250, %v1354, 0
        %1560 = vmatprep.subr.mxu0 0.0
        %1561 = vmatpush1.xpose.msra.mxu0 %v1537
        %1562 = vmatprep.subr.mxu0 0.0
        %1563 = vmatpush1.xpose.msra.mxu0 %v1540
        %1564 = vmatprep.subr.mxu0 0.0
        %1565 = vmatpush1.xpose.msra.mxu0 %v1543
        %1566 = vmatprep.subr.mxu0 0.0
        %1567 = vmatpush1.xpose.msra.mxu0 %v1546
        %1568 = vmatprep.subr.mxu0 0.0
        %1569 = vmatpush1.xpose.msra.mxu0 %v1549
        %1570 = vmatprep.subr.mxu0 0.0
        %1571 = vmatpush1.xpose.msra.mxu0 %v1552
        %1572 = vmatprep.subr.mxu0 0.0
        %1573 = vmatpush1.xpose.msra.mxu0 %v1555
        %1574 = vmatprep.subr.mxu0 0.0
        %1575 = vmatpush1.xpose.msra.mxu0 %v1558
        %1576 = vmatprep.subr.mxu0 0.0
        %1577 = vmatpush1.xpose.msra.mxu0 0.0
        %1578 = vmatprep.subr.mxu0 0.0
        %1579 = vmatpush1.xpose.msra.mxu0 0.0
        %1580 = vmatprep.subr.mxu0 0.0
        %1581 = vmatpush1.xpose.msra.mxu0 0.0
        %1582 = vmatprep.subr.mxu0 0.0
        %1583 = vmatpush1.xpose.msra.mxu0 0.0
        %1584 = vmatprep.subr.mxu0 0.0
        %1585 = vmatpush1.xpose.msra.mxu0 0.0
        %1586 = vmatprep.subr.mxu0 0.0
        %1587 = vmatpush1.xpose.msra.mxu0 0.0
        %1588 = vmatprep.subr.mxu0 0.0
        %1589 = vmatpush1.xpose.msra.mxu0 0.0
        %1590 = vmatprep.subr.mxu0 0.0
        %1591 = vmatpush1.xpose.msra.mxu0 0.0
        %1592 = vmatprep.subr.mxu0 0.0
        %1593 = vmatpush1.xpose.msra.mxu0 0.0
        %1594 = vmatprep.subr.mxu0 0.0
        %1595 = vmatpush1.xpose.msra.mxu0 0.0
        %1596 = vmatprep.subr.mxu0 0.0
        %1597 = vmatpush1.xpose.msra.mxu0 0.0
        %1598 = vmatprep.subr.mxu0 0.0
        %1599 = vmatpush1.xpose.msra.mxu0 0.0
        %1600 = vmatprep.subr.mxu0 0.0
        %1601 = vmatpush1.xpose.msra.mxu0 0.0
        %1602 = vmatprep.subr.mxu0 0.0
        %1603 = vmatpush1.xpose.msra.mxu0 0.0
        %1604 = vmatprep.subr.mxu0 0.0
        %1605 = vmatpush1.xpose.msra.mxu0 0.0
        %1606 = vmatprep.subr.mxu0 0.0
        %1607 = vmatpush1.xpose.msra.mxu0 0.0
        %1608 = vmatprep.subr.mxu0 0.0
        %1609 = vmatpush1.xpose.msra.mxu0 0.0
        %1610 = vmatprep.subr.mxu0 0.0
        %1611 = vmatpush1.xpose.msra.mxu0 0.0
        %1612 = vmatprep.subr.mxu0 0.0
        %1613 = vmatpush1.xpose.msra.mxu0 0.0
        %1614 = vmatprep.subr.mxu0 0.0
        %1615 = vmatpush1.xpose.msra.mxu0 0.0
        %1616 = vmatprep.subr.mxu0 0.0
        %1617 = vmatpush1.xpose.msra.mxu0 0.0
        %1618 = vmatprep.subr.mxu0 0.0
        %1619 = vmatpush1.xpose.msra.mxu0 0.0
        %1620 = vmatprep.subr.mxu0 0.0
        %1621 = vmatpush1.xpose.msra.mxu0 0.0
        %1622 = vmatprep.subr.mxu0 0.0
        %1623 = vmatpush1.xpose.msra.mxu0 0.0
        %1624 = vmatprep.mubr.f32.mxu0 0.0
        %1625 = vmatmul.mubr.f32.gmra.mrb[0].mxu0 %v1525
        %v1626 = vpop.f32.mrb[0].mxu0
        %v1627 = vadd.f32 %v1319, %v1626
        %v1628 = vpop.f32.mrb[0].mxu0
        %1629 = vmatprep.mubr.f32.mxu0 0.0
        %1630 = vmatmul.mubr.f32.gmra.mrb[0].mxu0 %v1528
        %v1631 = vpop.f32.mrb[0].mxu0
        %v1632 = vadd.f32 %v1320, %v1631
        %v1633 = vpop.f32.mrb[0].mxu0
        %1634 = vmatprep.mubr.f32.mxu0 0.0
        %1635 = vmatmul.mubr.f32.gmra.mrb[0].mxu0 %v1531
        %v1636 = vpop.f32.mrb[0].mxu0
        %v1637 = vadd.f32 %v1321, %v1636
        %v1638 = vpop.f32.mrb[0].mxu0
        %1639 = vmatprep.mubr.f32.mxu0 0.0
        %1640 = vmatmul.mubr.f32.gmra.mrb[0].mxu0 %v1534
        %v1641 = vpop.f32.mrb[0].mxu0
        %v1642 = vadd.f32 %v1322, %v1641
        %v1643 = vpop.f32.mrb[0].mxu0
        %1644 = vdwg.mxu0
        %v1646 = vsel %vm1250, %v1331, 0
        %v1649 = vsel %vm1250, %v1332, 0
        %v1652 = vsel %vm1250, %v1333, 0
        %v1655 = vsel %vm1250, %v1334, 0
        %v1658 = vsel %vm1250, %v1355, 0
        %v1661 = vsel %vm1250, %v1356, 0
        %v1664 = vsel %vm1250, %v1357, 0
        %v1667 = vsel %vm1250, %v1358, 0
        %v1670 = vsel %vm1250, %v1359, 0
        %v1673 = vsel %vm1250, %v1360, 0
        %v1676 = vsel %vm1250, %v1361, 0
        %v1679 = vsel %vm1250, %v1362, 0
        %1681 = vmatprep.subr.mxu0 0.0
        %1682 = vmatpush1.xpose.msra.mxu0 %v1658
        %1683 = vmatprep.subr.mxu0 0.0
        %1684 = vmatpush1.xpose.msra.mxu0 %v1661
        %1685 = vmatprep.subr.mxu0 0.0
        %1686 = vmatpush1.xpose.msra.mxu0 %v1664
        %1687 = vmatprep.subr.mxu0 0.0
        %1688 = vmatpush1.xpose.msra.mxu0 %v1667
        %1689 = vmatprep.subr.mxu0 0.0
        %1690 = vmatpush1.xpose.msra.mxu0 %v1670
        %1691 = vmatprep.subr.mxu0 0.0
        %1692 = vmatpush1.xpose.msra.mxu0 %v1673
        %1693 = vmatprep.subr.mxu0 0.0
        %1694 = vmatpush1.xpose.msra.mxu0 %v1676
        %1695 = vmatprep.subr.mxu0 0.0
        %1696 = vmatpush1.xpose.msra.mxu0 %v1679
        %1697 = vmatprep.subr.mxu0 0.0
        %1698 = vmatpush1.xpose.msra.mxu0 0.0
        %1699 = vmatprep.subr.mxu0 0.0
        %1700 = vmatpush1.xpose.msra.mxu0 0.0
        %1701 = vmatprep.subr.mxu0 0.0
        %1702 = vmatpush1.xpose.msra.mxu0 0.0
        %1703 = vmatprep.subr.mxu0 0.0
        %1704 = vmatpush1.xpose.msra.mxu0 0.0
        %1705 = vmatprep.subr.mxu0 0.0
        %1706 = vmatpush1.xpose.msra.mxu0 0.0
        %1707 = vmatprep.subr.mxu0 0.0
        %1708 = vmatpush1.xpose.msra.mxu0 0.0
        %1709 = vmatprep.subr.mxu0 0.0
        %1710 = vmatpush1.xpose.msra.mxu0 0.0
        %1711 = vmatprep.subr.mxu0 0.0
        %1712 = vmatpush1.xpose.msra.mxu0 0.0
        %1713 = vmatprep.subr.mxu0 0.0
        %1714 = vmatpush1.xpose.msra.mxu0 0.0
        %1715 = vmatprep.subr.mxu0 0.0
        %1716 = vmatpush1.xpose.msra.mxu0 0.0
        %1717 = vmatprep.subr.mxu0 0.0
        %1718 = vmatpush1.xpose.msra.mxu0 0.0
        %1719 = vmatprep.subr.mxu0 0.0
        %1720 = vmatpush1.xpose.msra.mxu0 0.0
        %1721 = vmatprep.subr.mxu0 0.0
        %1722 = vmatpush1.xpose.msra.mxu0 0.0
        %1723 = vmatprep.subr.mxu0 0.0
        %1724 = vmatpush1.xpose.msra.mxu0 0.0
        %1725 = vmatprep.subr.mxu0 0.0
        %1726 = vmatpush1.xpose.msra.mxu0 0.0
        %1727 = vmatprep.subr.mxu0 0.0
        %1728 = vmatpush1.xpose.msra.mxu0 0.0
        %1729 = vmatprep.subr.mxu0 0.0
        %1730 = vmatpush1.xpose.msra.mxu0 0.0
        %1731 = vmatprep.subr.mxu0 0.0
        %1732 = vmatpush1.xpose.msra.mxu0 0.0
        %1733 = vmatprep.subr.mxu0 0.0
        %1734 = vmatpush1.xpose.msra.mxu0 0.0
        %1735 = vmatprep.subr.mxu0 0.0
        %1736 = vmatpush1.xpose.msra.mxu0 0.0
        %1737 = vmatprep.subr.mxu0 0.0
        %1738 = vmatpush1.xpose.msra.mxu0 0.0
        %1739 = vmatprep.subr.mxu0 0.0
        %1740 = vmatpush1.xpose.msra.mxu0 0.0
        %1741 = vmatprep.subr.mxu0 0.0
        %1742 = vmatpush1.xpose.msra.mxu0 0.0
        %1743 = vmatprep.subr.mxu0 0.0
        %1744 = vmatpush1.xpose.msra.mxu0 0.0
        %1745 = vmatprep.mubr.f32.mxu0 0.0
        %1746 = vmatmul.mubr.f32.gmra.mrb[0].mxu0 %v1646
        %v1747 = vpop.f32.mrb[0].mxu0
        %v1748 = vadd.f32 %v1319, %v1747
        %v1749 = vpop.f32.mrb[0].mxu0
        %1750 = vmatprep.mubr.f32.mxu0 0.0
        %1751 = vmatmul.mubr.f32.gmra.mrb[0].mxu0 %v1649
        %v1752 = vpop.f32.mrb[0].mxu0
        %v1753 = vadd.f32 %v1320, %v1752
        %v1754 = vpop.f32.mrb[0].mxu0
        %1755 = vmatprep.mubr.f32.mxu0 0.0
        %1756 = vmatmul.mubr.f32.gmra.mrb[0].mxu0 %v1652
        %v1757 = vpop.f32.mrb[0].mxu0
        %v1758 = vadd.f32 %v1321, %v1757
        %v1759 = vpop.f32.mrb[0].mxu0
        %1760 = vmatprep.mubr.f32.mxu0 0.0
        %1761 = vmatmul.mubr.f32.gmra.mrb[0].mxu0 %v1655
        %v1762 = vpop.f32.mrb[0].mxu0
        %v1763 = vadd.f32 %v1322, %v1762
        %v1764 = vpop.f32.mrb[0].mxu0
        %1765 = vdwg.mxu0
        %v1767 = vsel %vm1250, %v1335, 0
        %v1770 = vsel %vm1250, %v1336, 0
        %v1773 = vsel %vm1250, %v1337, 0
        %v1776 = vsel %vm1250, %v1338, 0
        %v1779 = vsel %vm1250, %v1363, 0
        %v1782 = vsel %vm1250, %v1364, 0
        %v1785 = vsel %vm1250, %v1365, 0
        %v1788 = vsel %vm1250, %v1366, 0
        %v1791 = vsel %vm1250, %v1367, 0
        %v1794 = vsel %vm1250, %v1368, 0
        %v1797 = vsel %vm1250, %v1369, 0
        %v1800 = vsel %vm1250, %v1370, 0
        %1802 = vmatprep.subr.mxu0 0.0
        %1803 = vmatpush1.xpose.msra.mxu0 %v1779
        %1804 = vmatprep.subr.mxu0 0.0
        %1805 = vmatpush1.xpose.msra.mxu0 %v1782
        %1806 = vmatprep.subr.mxu0 0.0
        %1807 = vmatpush1.xpose.msra.mxu0 %v1785
        %1808 = vmatprep.subr.mxu0 0.0
        %1809 = vmatpush1.xpose.msra.mxu0 %v1788
        %1810 = vmatprep.subr.mxu0 0.0
        %1811 = vmatpush1.xpose.msra.mxu0 %v1791
        %1812 = vmatprep.subr.mxu0 0.0
        %1813 = vmatpush1.xpose.msra.mxu0 %v1794
        %1814 = vmatprep.subr.mxu0 0.0
        %1815 = vmatpush1.xpose.msra.mxu0 %v1797
        %1816 = vmatprep.subr.mxu0 0.0
        %1817 = vmatpush1.xpose.msra.mxu0 %v1800
        %1818 = vmatprep.subr.mxu0 0.0
        %1819 = vmatpush1.xpose.msra.mxu0 0.0
        %1820 = vmatprep.subr.mxu0 0.0
        %1821 = vmatpush1.xpose.msra.mxu0 0.0
        %1822 = vmatprep.subr.mxu0 0.0
        %1823 = vmatpush1.xpose.msra.mxu0 0.0
        %1824 = vmatprep.subr.mxu0 0.0
        %1825 = vmatpush1.xpose.msra.mxu0 0.0
        %1826 = vmatprep.subr.mxu0 0.0
        %1827 = vmatpush1.xpose.msra.mxu0 0.0
        %1828 = vmatprep.subr.mxu0 0.0
        %1829 = vmatpush1.xpose.msra.mxu0 0.0
        %1830 = vmatprep.subr.mxu0 0.0
        %1831 = vmatpush1.xpose.msra.mxu0 0.0
        %1832 = vmatprep.subr.mxu0 0.0
        %1833 = vmatpush1.xpose.msra.mxu0 0.0
        %1834 = vmatprep.subr.mxu0 0.0
        %1835 = vmatpush1.xpose.msra.mxu0 0.0
        %1836 = vmatprep.subr.mxu0 0.0
        %1837 = vmatpush1.xpose.msra.mxu0 0.0
        %1838 = vmatprep.subr.mxu0 0.0
        %1839 = vmatpush1.xpose.msra.mxu0 0.0
        %1840 = vmatprep.subr.mxu0 0.0
        %1841 = vmatpush1.xpose.msra.mxu0 0.0
        %1842 = vmatprep.subr.mxu0 0.0
        %1843 = vmatpush1.xpose.msra.mxu0 0.0
        %1844 = vmatprep.subr.mxu0 0.0
        %1845 = vmatpush1.xpose.msra.mxu0 0.0
        %1846 = vmatprep.subr.mxu0 0.0
        %1847 = vmatpush1.xpose.msra.mxu0 0.0
        %1848 = vmatprep.subr.mxu0 0.0
        %1849 = vmatpush1.xpose.msra.mxu0 0.0
        %1850 = vmatprep.subr.mxu0 0.0
        %1851 = vmatpush1.xpose.msra.mxu0 0.0
        %1852 = vmatprep.subr.mxu0 0.0
        %1853 = vmatpush1.xpose.msra.mxu0 0.0
        %1854 = vmatprep.subr.mxu0 0.0
        %1855 = vmatpush1.xpose.msra.mxu0 0.0
        %1856 = vmatprep.subr.mxu0 0.0
        %1857 = vmatpush1.xpose.msra.mxu0 0.0
        %1858 = vmatprep.subr.mxu0 0.0
        %1859 = vmatpush1.xpose.msra.mxu0 0.0
        %1860 = vmatprep.subr.mxu0 0.0
        %1861 = vmatpush1.xpose.msra.mxu0 0.0
        %1862 = vmatprep.subr.mxu0 0.0
        %1863 = vmatpush1.xpose.msra.mxu0 0.0
        %1864 = vmatprep.subr.mxu0 0.0
        %1865 = vmatpush1.xpose.msra.mxu0 0.0
        %1866 = vmatprep.mubr.f32.mxu0 0.0
        %1867 = vmatmul.mubr.f32.gmra.mrb[0].mxu0 %v1767
        %v1868 = vpop.f32.mrb[0].mxu0
        %v1869 = vadd.f32 %v1319, %v1868
        %v1870 = vpop.f32.mrb[0].mxu0
        %1871 = vmatprep.mubr.f32.mxu0 0.0
        %1872 = vmatmul.mubr.f32.gmra.mrb[0].mxu0 %v1770
        %v1873 = vpop.f32.mrb[0].mxu0
        %v1874 = vadd.f32 %v1320, %v1873
        %v1875 = vpop.f32.mrb[0].mxu0
        %1876 = vmatprep.mubr.f32.mxu0 0.0
        %1877 = vmatmul.mubr.f32.gmra.mrb[0].mxu0 %v1773
        %v1878 = vpop.f32.mrb[0].mxu0
        %v1879 = vadd.f32 %v1321, %v1878
        %v1880 = vpop.f32.mrb[0].mxu0
        %1881 = vmatprep.mubr.f32.mxu0 0.0
        %1882 = vmatmul.mubr.f32.gmra.mrb[0].mxu0 %v1776
        %v1883 = vpop.f32.mrb[0].mxu0
        %v1884 = vadd.f32 %v1322, %v1883
        %v1885 = vpop.f32.mrb[0].mxu0
        %1886 = vdwg.mxu0
        %vm1887 = vcmask 523264
        %v1888 = vsel %vm1887, %v1506, -inf
        %1889 = vmax.xlane.f32.xlu0 %v1888
        %v1890 = vpop.xlane.xlu0 %1889
        %v1891 = vsel %vm1887, %v1511, -inf
        %1892 = vmax.xlane.f32.xlu0 %v1891
        %v1893 = vpop.xlane.xlu0 %1892
        %v1894 = vsel %vm1887, %v1516, -inf
        %1895 = vmax.xlane.f32.xlu0 %v1894
        %v1896 = vpop.xlane.xlu0 %1895
        %v1897 = vsel %vm1887, %v1521, -inf
        %1898 = vmax.xlane.f32.xlu0 %v1897
        %v1899 = vpop.xlane.xlu0 %1898
        %v1900 = vsel %vm1887, %v1627, -inf
        %1901 = vmax.xlane.f32.xlu0 %v1900
        %v1902 = vpop.xlane.xlu0 %1901
        %v1903 = vsel %vm1887, %v1632, -inf
        %1904 = vmax.xlane.f32.xlu0 %v1903
        %v1905 = vpop.xlane.xlu0 %1904
        %v1906 = vsel %vm1887, %v1637, -inf
        %1907 = vmax.xlane.f32.xlu0 %v1906
        %v1908 = vpop.xlane.xlu0 %1907
        %v1909 = vsel %vm1887, %v1642, -inf
        %1910 = vmax.xlane.f32.xlu0 %v1909
        %v1911 = vpop.xlane.xlu0 %1910
        %v1912 = vsel %vm1887, %v1748, -inf
        %1913 = vmax.xlane.f32.xlu0 %v1912
        %v1914 = vpop.xlane.xlu0 %1913
        %v1915 = vsel %vm1887, %v1753, -inf
        %1916 = vmax.xlane.f32.xlu0 %v1915
        %v1917 = vpop.xlane.xlu0 %1916
        %v1918 = vsel %vm1887, %v1758, -inf
        %1919 = vmax.xlane.f32.xlu0 %v1918
        %v1920 = vpop.xlane.xlu0 %1919
        %v1921 = vsel %vm1887, %v1763, -inf
        %1922 = vmax.xlane.f32.xlu0 %v1921
        %v1923 = vpop.xlane.xlu0 %1922
        %v1924 = vsel %vm1887, %v1869, -inf
        %1925 = vmax.xlane.f32.xlu0 %v1924
        %v1926 = vpop.xlane.xlu0 %1925
        %v1927 = vsel %vm1887, %v1874, -inf
        %1928 = vmax.xlane.f32.xlu0 %v1927
        %v1929 = vpop.xlane.xlu0 %1928
        %v1930 = vsel %vm1887, %v1879, -inf
        %1931 = vmax.xlane.f32.xlu0 %v1930
        %v1932 = vpop.xlane.xlu0 %1931
        %v1933 = vsel %vm1887, %v1884, -inf
        %1934 = vmax.xlane.f32.xlu0 %v1933
        %v1935 = vpop.xlane.xlu0 %1934
        %v1936 = vsub.f32 %v1506, %v1890
        %v1937 = vsub.f32 %v1511, %v1893
        %v1938 = vsub.f32 %v1516, %v1896
        %v1939 = vsub.f32 %v1521, %v1899
        %v1940 = vsub.f32 %v1627, %v1902
        %v1941 = vsub.f32 %v1632, %v1905
        %v1942 = vsub.f32 %v1637, %v1908
        %v1943 = vsub.f32 %v1642, %v1911
        %v1944 = vsub.f32 %v1748, %v1914
        %v1945 = vsub.f32 %v1753, %v1917
        %v1946 = vsub.f32 %v1758, %v1920
        %v1947 = vsub.f32 %v1763, %v1923
        %v1948 = vsub.f32 %v1869, %v1926
        %v1949 = vsub.f32 %v1874, %v1929
        %v1950 = vsub.f32 %v1879, %v1932
        %v1951 = vsub.f32 %v1884, %v1935
        %v1952 = vmul.f32 %v1936, 1.442695
        %v1953 = vpow.pop %v1952
        %v1954 = vmul.f32 %v1937, 1.442695
        %v1955 = vpow.pop %v1954
        %v1956 = vmul.f32 %v1938, 1.442695
        %v1957 = vpow.pop %v1956
        %v1958 = vmul.f32 %v1939, 1.442695
        %v1959 = vpow.pop %v1958
        %v1960 = vmul.f32 %v1940, 1.442695
        %v1961 = vpow.pop %v1960
        %v1962 = vmul.f32 %v1941, 1.442695
        %v1963 = vpow.pop %v1962
        %v1964 = vmul.f32 %v1942, 1.442695
        %v1965 = vpow.pop %v1964
        %v1966 = vmul.f32 %v1943, 1.442695
        %v1967 = vpow.pop %v1966
        %v1968 = vmul.f32 %v1944, 1.442695
        %v1969 = vpow.pop %v1968
        %v1970 = vmul.f32 %v1945, 1.442695
        %v1971 = vpow.pop %v1970
        %v1972 = vmul.f32 %v1946, 1.442695
        %v1973 = vpow.pop %v1972
        %v1974 = vmul.f32 %v1947, 1.442695
        %v1975 = vpow.pop %v1974
        %v1976 = vmul.f32 %v1948, 1.442695
        %v1977 = vpow.pop %v1976
        %v1978 = vmul.f32 %v1949, 1.442695
        %v1979 = vpow.pop %v1978
        %v1980 = vmul.f32 %v1950, 1.442695
        %v1981 = vpow.pop %v1980
        %v1982 = vmul.f32 %v1951, 1.442695
        %v1983 = vpow.pop %v1982
        %v1984 = vsel %vm1887, %v1953, 0.0
        %1985 = vadd.xlane.f32.xlu0 %v1984
        %v1986 = vpop.xlane.xlu0 %1985
        %v1987 = vsel %vm1887, %v1955, 0.0
        %1988 = vadd.xlane.f32.xlu0 %v1987
        %v1989 = vpop.xlane.xlu0 %1988
        %v1990 = vsel %vm1887, %v1957, 0.0
        %1991 = vadd.xlane.f32.xlu0 %v1990
        %v1992 = vpop.xlane.xlu0 %1991
        %v1993 = vsel %vm1887, %v1959, 0.0
        %1994 = vadd.xlane.f32.xlu0 %v1993
        %v1995 = vpop.xlane.xlu0 %1994
        %v1996 = vsel %vm1887, %v1961, 0.0
        %1997 = vadd.xlane.f32.xlu0 %v1996
        %v1998 = vpop.xlane.xlu0 %1997
        %v1999 = vsel %vm1887, %v1963, 0.0
        %2000 = vadd.xlane.f32.xlu0 %v1999
        %v2001 = vpop.xlane.xlu0 %2000
        %v2002 = vsel %vm1887, %v1965, 0.0
        %2003 = vadd.xlane.f32.xlu0 %v2002
        %v2004 = vpop.xlane.xlu0 %2003
        %v2005 = vsel %vm1887, %v1967, 0.0
        %2006 = vadd.xlane.f32.xlu0 %v2005
        %v2007 = vpop.xlane.xlu0 %2006
        %v2008 = vsel %vm1887, %v1969, 0.0
        %2009 = vadd.xlane.f32.xlu0 %v2008
        %v2010 = vpop.xlane.xlu0 %2009
        %v2011 = vsel %vm1887, %v1971, 0.0
        %2012 = vadd.xlane.f32.xlu0 %v2011
        %v2013 = vpop.xlane.xlu0 %2012
        %v2014 = vsel %vm1887, %v1973, 0.0
        %2015 = vadd.xlane.f32.xlu0 %v2014
        %v2016 = vpop.xlane.xlu0 %2015
        %v2017 = vsel %vm1887, %v1975, 0.0
        %2018 = vadd.xlane.f32.xlu0 %v2017
        %v2019 = vpop.xlane.xlu0 %2018
        %v2020 = vsel %vm1887, %v1977, 0.0
        %2021 = vadd.xlane.f32.xlu0 %v2020
        %v2022 = vpop.xlane.xlu0 %2021
        %v2023 = vsel %vm1887, %v1979, 0.0
        %2024 = vadd.xlane.f32.xlu0 %v2023
        %v2025 = vpop.xlane.xlu0 %2024
        %v2026 = vsel %vm1887, %v1981, 0.0
        %2027 = vadd.xlane.f32.xlu0 %v2026
        %v2028 = vpop.xlane.xlu0 %2027
        %v2029 = vsel %vm1887, %v1983, 0.0
        %2030 = vadd.xlane.f32.xlu0 %v2029
        %v2031 = vpop.xlane.xlu0 %2030
        %v2032 = vrcp.pop %v1986
        %v2033 = vmul.f32 %v1953, %v2032
        %v2034 = vrcp.pop %v1989
        %v2035 = vmul.f32 %v1955, %v2034
        %v2036 = vrcp.pop %v1992
        %v2037 = vmul.f32 %v1957, %v2036
        %v2038 = vrcp.pop %v1995
        %v2039 = vmul.f32 %v1959, %v2038
        %v2040 = vrcp.pop %v1998
        %v2041 = vmul.f32 %v1961, %v2040
        %v2042 = vrcp.pop %v2001
        %v2043 = vmul.f32 %v1963, %v2042
        %v2044 = vrcp.pop %v2004
        %v2045 = vmul.f32 %v1965, %v2044
        %v2046 = vrcp.pop %v2007
        %v2047 = vmul.f32 %v1967, %v2046
        %v2048 = vrcp.pop %v2010
        %v2049 = vmul.f32 %v1969, %v2048
        %v2050 = vrcp.pop %v2013
        %v2051 = vmul.f32 %v1971, %v2050
        %v2052 = vrcp.pop %v2016
        %v2053 = vmul.f32 %v1973, %v2052
        %v2054 = vrcp.pop %v2019
        %v2055 = vmul.f32 %v1975, %v2054
        %v2056 = vrcp.pop %v2022
        %v2057 = vmul.f32 %v1977, %v2056
        %v2058 = vrcp.pop %v2025
        %v2059 = vmul.f32 %v1979, %v2058
        %v2060 = vrcp.pop %v2028
        %v2061 = vmul.f32 %v1981, %v2060
        %v2062 = vrcp.pop %v2031
        %v2063 = vmul.f32 %v1983, %v2062
        %v2064 = vsel %vm1315, 1, 0
        %v2065 = vsel %vm1316, 1, 0
        %v2066 = vsel %vm1317, 1, 0
        %v2067 = vsel %vm1318, 1, 0
        %vm2068 = vcmp.eq.s32.totalorder %v2064, 1
        %vm2069 = vcmp.eq.s32.totalorder %v2065, 1
        %vm2070 = vcmp.eq.s32.totalorder %v2066, 1
        %vm2071 = vcmp.eq.s32.totalorder %v2067, 1
        %v2072 = vsel %vm2068, %v2033, 0.0
        %v2073 = vsel %vm2069, %v2035, 0.0
        %v2074 = vsel %vm2070, %v2037, 0.0
        %v2075 = vsel %vm2071, %v2039, 0.0
        %v2076 = vsel %vm2068, %v2041, 0.0
        %v2077 = vsel %vm2069, %v2043, 0.0
        %v2078 = vsel %vm2070, %v2045, 0.0
        %v2079 = vsel %vm2071, %v2047, 0.0
        %v2080 = vsel %vm2068, %v2049, 0.0
        %v2081 = vsel %vm2069, %v2051, 0.0
        %v2082 = vsel %vm2070, %v2053, 0.0
        %v2083 = vsel %vm2071, %v2055, 0.0
        %v2084 = vsel %vm2068, %v2057, 0.0
        %v2085 = vsel %vm2069, %v2059, 0.0
        %v2086 = vsel %vm2070, %v2061, 0.0
        %v2087 = vsel %vm2071, %v2063, 0.0
        %v2089 = vsel %vm1887, %v2072, 0
        %v2092 = vsel %vm1887, %v2073, 0
        %v2095 = vsel %vm1887, %v2074, 0
        %v2098 = vsel %vm1887, %v2075, 0
        %2100 = vmatprep.subr.mxu0 0.0
        %2101 = vmatpush1.msra.mxu0 %v1371
        %2102 = vmatprep.subr.mxu0 0.0
        %2103 = vmatpush1.msra.mxu0 %v1372
        %2104 = vmatprep.subr.mxu0 0.0
        %2105 = vmatpush1.msra.mxu0 %v1373
        %2106 = vmatprep.subr.mxu0 0.0
        %2107 = vmatpush1.msra.mxu0 %v1374
        %2108 = vmatprep.subr.mxu0 0.0
        %2109 = vmatpush1.msra.mxu0 %v1375
        %2110 = vmatprep.subr.mxu0 0.0
        %2111 = vmatpush1.msra.mxu0 %v1376
        %2112 = vmatprep.subr.mxu0 0.0
        %2113 = vmatpush1.msra.mxu0 %v1377
        %2114 = vmatprep.subr.mxu0 0.0
        %2115 = vmatpush1.msra.mxu0 %v1378
        %2116 = vmatprep.subr.mxu0 0.0
        %2117 = vmatpush1.msra.mxu0 0.0
        %2118 = vmatprep.subr.mxu0 0.0
        %2119 = vmatpush1.msra.mxu0 0.0
        %2120 = vmatprep.subr.mxu0 0.0
        %2121 = vmatpush1.msra.mxu0 0.0
        %2122 = vmatprep.subr.mxu0 0.0
        %2123 = vmatpush1.msra.mxu0 0.0
        %2124 = vmatprep.subr.mxu0 0.0
        %2125 = vmatpush1.msra.mxu0 0.0
        %2126 = vmatprep.subr.mxu0 0.0
        %2127 = vmatpush1.msra.mxu0 0.0
        %2128 = vmatprep.subr.mxu0 0.0
        %2129 = vmatpush1.msra.mxu0 0.0
        %2130 = vmatprep.subr.mxu0 0.0
        %2131 = vmatpush1.msra.mxu0 0.0
        %2132 = vmatprep.subr.mxu0 0.0
        %2133 = vmatpush1.msra.mxu0 0.0
        %2134 = vmatprep.subr.mxu0 0.0
        %2135 = vmatpush1.msra.mxu0 0.0
        %2136 = vmatprep.subr.mxu0 0.0
        %2137 = vmatpush1.msra.mxu0 0.0
        %2138 = vmatprep.subr.mxu0 0.0
        %2139 = vmatpush1.msra.mxu0 0.0
        %2140 = vmatprep.subr.mxu0 0.0
        %2141 = vmatpush1.msra.mxu0 0.0
        %2142 = vmatprep.subr.mxu0 0.0
        %2143 = vmatpush1.msra.mxu0 0.0
        %2144 = vmatprep.subr.mxu0 0.0
        %2145 = vmatpush1.msra.mxu0 0.0
        %2146 = vmatprep.subr.mxu0 0.0
        %2147 = vmatpush1.msra.mxu0 0.0
        %2148 = vmatprep.subr.mxu0 0.0
        %2149 = vmatpush1.msra.mxu0 0.0
        %2150 = vmatprep.subr.mxu0 0.0
        %2151 = vmatpush1.msra.mxu0 0.0
        %2152 = vmatprep.subr.mxu0 0.0
        %2153 = vmatpush1.msra.mxu0 0.0
        %2154 = vmatprep.subr.mxu0 0.0
        %2155 = vmatpush1.msra.mxu0 0.0
        %2156 = vmatprep.subr.mxu0 0.0
        %2157 = vmatpush1.msra.mxu0 0.0
        %2158 = vmatprep.subr.mxu0 0.0
        %2159 = vmatpush1.msra.mxu0 0.0
        %2160 = vmatprep.subr.mxu0 0.0
        %2161 = vmatpush1.msra.mxu0 0.0
        %2162 = vmatprep.subr.mxu0 0.0
        %2163 = vmatpush1.msra.mxu0 0.0
        %2164 = vmatprep.mubr.f32.mxu0 0.0
        %2165 = vmatmul.mubr.f32.gmra.mrb[0].mxu0 %v2089
        %v2166 = vpop.f32.mrb[0].mxu0
        %v2167 = vadd.f32 0.0, %v2166
        %v2168 = vpop.f32.mrb[0].mxu0
        %2169 = vmatprep.mubr.f32.mxu0 0.0
        %2170 = vmatmul.mubr.f32.gmra.mrb[0].mxu0 %v2092
        %v2171 = vpop.f32.mrb[0].mxu0
        %v2172 = vadd.f32 0.0, %v2171
        %v2173 = vpop.f32.mrb[0].mxu0
        %2174 = vmatprep.mubr.f32.mxu0 0.0
        %2175 = vmatmul.mubr.f32.gmra.mrb[0].mxu0 %v2095
        %v2176 = vpop.f32.mrb[0].mxu0
        %v2177 = vadd.f32 0.0, %v2176
        %v2178 = vpop.f32.mrb[0].mxu0
        %2179 = vmatprep.mubr.f32.mxu0 0.0
        %2180 = vmatmul.mubr.f32.gmra.mrb[0].mxu0 %v2098
        %v2181 = vpop.f32.mrb[0].mxu0
        %v2182 = vadd.f32 0.0, %v2181
        %v2183 = vpop.f32.mrb[0].mxu0
        %2184 = vdwg.mxu0
        %v2186 = vsel %vm1887, %v2076, 0
        %v2189 = vsel %vm1887, %v2077, 0
        %v2192 = vsel %vm1887, %v2078, 0
        %v2195 = vsel %vm1887, %v2079, 0
        %2197 = vmatprep.subr.mxu0 0.0
        %2198 = vmatpush1.msra.mxu0 %v1379
        %2199 = vmatprep.subr.mxu0 0.0
        %2200 = vmatpush1.msra.mxu0 %v1380
        %2201 = vmatprep.subr.mxu0 0.0
        %2202 = vmatpush1.msra.mxu0 %v1381
        %2203 = vmatprep.subr.mxu0 0.0
        %2204 = vmatpush1.msra.mxu0 %v1382
        %2205 = vmatprep.subr.mxu0 0.0
        %2206 = vmatpush1.msra.mxu0 %v1383
        %2207 = vmatprep.subr.mxu0 0.0
        %2208 = vmatpush1.msra.mxu0 %v1384
        %2209 = vmatprep.subr.mxu0 0.0
        %2210 = vmatpush1.msra.mxu0 %v1385
        %2211 = vmatprep.subr.mxu0 0.0
        %2212 = vmatpush1.msra.mxu0 %v1386
        %2213 = vmatprep.subr.mxu0 0.0
        %2214 = vmatpush1.msra.mxu0 0.0
        %2215 = vmatprep.subr.mxu0 0.0
        %2216 = vmatpush1.msra.mxu0 0.0
        %2217 = vmatprep.subr.mxu0 0.0
        %2218 = vmatpush1.msra.mxu0 0.0
        %2219 = vmatprep.subr.mxu0 0.0
        %2220 = vmatpush1.msra.mxu0 0.0
        %2221 = vmatprep.subr.mxu0 0.0
        %2222 = vmatpush1.msra.mxu0 0.0
        %2223 = vmatprep.subr.mxu0 0.0
        %2224 = vmatpush1.msra.mxu0 0.0
        %2225 = vmatprep.subr.mxu0 0.0
        %2226 = vmatpush1.msra.mxu0 0.0
        %2227 = vmatprep.subr.mxu0 0.0
        %2228 = vmatpush1.msra.mxu0 0.0
        %2229 = vmatprep.subr.mxu0 0.0
        %2230 = vmatpush1.msra.mxu0 0.0
        %2231 = vmatprep.subr.mxu0 0.0
        %2232 = vmatpush1.msra.mxu0 0.0
        %2233 = vmatprep.subr.mxu0 0.0
        %2234 = vmatpush1.msra.mxu0 0.0
        %2235 = vmatprep.subr.mxu0 0.0
        %2236 = vmatpush1.msra.mxu0 0.0
        %2237 = vmatprep.subr.mxu0 0.0
        %2238 = vmatpush1.msra.mxu0 0.0
        %2239 = vmatprep.subr.mxu0 0.0
        %2240 = vmatpush1.msra.mxu0 0.0
        %2241 = vmatprep.subr.mxu0 0.0
        %2242 = vmatpush1.msra.mxu0 0.0
        %2243 = vmatprep.subr.mxu0 0.0
        %2244 = vmatpush1.msra.mxu0 0.0
        %2245 = vmatprep.subr.mxu0 0.0
        %2246 = vmatpush1.msra.mxu0 0.0
        %2247 = vmatprep.subr.mxu0 0.0
        %2248 = vmatpush1.msra.mxu0 0.0
        %2249 = vmatprep.subr.mxu0 0.0
        %2250 = vmatpush1.msra.mxu0 0.0
        %2251 = vmatprep.subr.mxu0 0.0
        %2252 = vmatpush1.msra.mxu0 0.0
        %2253 = vmatprep.subr.mxu0 0.0
        %2254 = vmatpush1.msra.mxu0 0.0
        %2255 = vmatprep.subr.mxu0 0.0
        %2256 = vmatpush1.msra.mxu0 0.0
        %2257 = vmatprep.subr.mxu0 0.0
        %2258 = vmatpush1.msra.mxu0 0.0
        %2259 = vmatprep.subr.mxu0 0.0
        %2260 = vmatpush1.msra.mxu0 0.0
        %2261 = vmatprep.mubr.f32.mxu0 0.0
        %2262 = vmatmul.mubr.f32.gmra.mrb[0].mxu0 %v2186
        %v2263 = vpop.f32.mrb[0].mxu0
        %v2264 = vadd.f32 0.0, %v2263
        %v2265 = vpop.f32.mrb[0].mxu0
        %2266 = vmatprep.mubr.f32.mxu0 0.0
        %2267 = vmatmul.mubr.f32.gmra.mrb[0].mxu0 %v2189
        %v2268 = vpop.f32.mrb[0].mxu0
        %v2269 = vadd.f32 0.0, %v2268
        %v2270 = vpop.f32.mrb[0].mxu0
        %2271 = vmatprep.mubr.f32.mxu0 0.0
        %2272 = vmatmul.mubr.f32.gmra.mrb[0].mxu0 %v2192
        %v2273 = vpop.f32.mrb[0].mxu0
        %v2274 = vadd.f32 0.0, %v2273
        %v2275 = vpop.f32.mrb[0].mxu0
        %2276 = vmatprep.mubr.f32.mxu0 0.0
        %2277 = vmatmul.mubr.f32.gmra.mrb[0].mxu0 %v2195
        %v2278 = vpop.f32.mrb[0].mxu0
        %v2279 = vadd.f32 0.0, %v2278
        %v2280 = vpop.f32.mrb[0].mxu0
        %2281 = vdwg.mxu0
        %v2283 = vsel %vm1887, %v2080, 0
        %v2286 = vsel %vm1887, %v2081, 0
        %v2289 = vsel %vm1887, %v2082, 0
        %v2292 = vsel %vm1887, %v2083, 0
        %2294 = vmatprep.subr.mxu0 0.0
        %2295 = vmatpush1.msra.mxu0 %v1387
        %2296 = vmatprep.subr.mxu0 0.0
        %2297 = vmatpush1.msra.mxu0 %v1388
        %2298 = vmatprep.subr.mxu0 0.0
        %2299 = vmatpush1.msra.mxu0 %v1389
        %2300 = vmatprep.subr.mxu0 0.0
        %2301 = vmatpush1.msra.mxu0 %v1390
        %2302 = vmatprep.subr.mxu0 0.0
        %2303 = vmatpush1.msra.mxu0 %v1391
        %2304 = vmatprep.subr.mxu0 0.0
        %2305 = vmatpush1.msra.mxu0 %v1392
        %2306 = vmatprep.subr.mxu0 0.0
        %2307 = vmatpush1.msra.mxu0 %v1393
        %2308 = vmatprep.subr.mxu0 0.0
        %2309 = vmatpush1.msra.mxu0 %v1394
        %2310 = vmatprep.subr.mxu0 0.0
        %2311 = vmatpush1.msra.mxu0 0.0
        %2312 = vmatprep.subr.mxu0 0.0
        %2313 = vmatpush1.msra.mxu0 0.0
        %2314 = vmatprep.subr.mxu0 0.0
        %2315 = vmatpush1.msra.mxu0 0.0
        %2316 = vmatprep.subr.mxu0 0.0
        %2317 = vmatpush1.msra.mxu0 0.0
        %2318 = vmatprep.subr.mxu0 0.0
        %2319 = vmatpush1.msra.mxu0 0.0
        %2320 = vmatprep.subr.mxu0 0.0
        %2321 = vmatpush1.msra.mxu0 0.0
        %2322 = vmatprep.subr.mxu0 0.0
        %2323 = vmatpush1.msra.mxu0 0.0
        %2324 = vmatprep.subr.mxu0 0.0
        %2325 = vmatpush1.msra.mxu0 0.0
        %2326 = vmatprep.subr.mxu0 0.0
        %2327 = vmatpush1.msra.mxu0 0.0
        %2328 = vmatprep.subr.mxu0 0.0
        %2329 = vmatpush1.msra.mxu0 0.0
        %2330 = vmatprep.subr.mxu0 0.0
        %2331 = vmatpush1.msra.mxu0 0.0
        %2332 = vmatprep.subr.mxu0 0.0
        %2333 = vmatpush1.msra.mxu0 0.0
        %2334 = vmatprep.subr.mxu0 0.0
        %2335 = vmatpush1.msra.mxu0 0.0
        %2336 = vmatprep.subr.mxu0 0.0
        %2337 = vmatpush1.msra.mxu0 0.0
        %2338 = vmatprep.subr.mxu0 0.0
        %2339 = vmatpush1.msra.mxu0 0.0
        %2340 = vmatprep.subr.mxu0 0.0
        %2341 = vmatpush1.msra.mxu0 0.0
        %2342 = vmatprep.subr.mxu0 0.0
        %2343 = vmatpush1.msra.mxu0 0.0
        %2344 = vmatprep.subr.mxu0 0.0
        %2345 = vmatpush1.msra.mxu0 0.0
        %2346 = vmatprep.subr.mxu0 0.0
        %2347 = vmatpush1.msra.mxu0 0.0
        %2348 = vmatprep.subr.mxu0 0.0
        %2349 = vmatpush1.msra.mxu0 0.0
        %2350 = vmatprep.subr.mxu0 0.0
        %2351 = vmatpush1.msra.mxu0 0.0
        %2352 = vmatprep.subr.mxu0 0.0
        %2353 = vmatpush1.msra.mxu0 0.0
        %2354 = vmatprep.subr.mxu0 0.0
        %2355 = vmatpush1.msra.mxu0 0.0
        %2356 = vmatprep.subr.mxu0 0.0
        %2357 = vmatpush1.msra.mxu0 0.0
        %2358 = vmatprep.mubr.f32.mxu0 0.0
        %2359 = vmatmul.mubr.f32.gmra.mrb[0].mxu0 %v2283
        %v2360 = vpop.f32.mrb[0].mxu0
        %v2361 = vadd.f32 0.0, %v2360
        %v2362 = vpop.f32.mrb[0].mxu0
        %2363 = vmatprep.mubr.f32.mxu0 0.0
        %2364 = vmatmul.mubr.f32.gmra.mrb[0].mxu0 %v2286
        %v2365 = vpop.f32.mrb[0].mxu0
        %v2366 = vadd.f32 0.0, %v2365
        %v2367 = vpop.f32.mrb[0].mxu0
        %2368 = vmatprep.mubr.f32.mxu0 0.0
        %2369 = vmatmul.mubr.f32.gmra.mrb[0].mxu0 %v2289
        %v2370 = vpop.f32.mrb[0].mxu0
        %v2371 = vadd.f32 0.0, %v2370
        %v2372 = vpop.f32.mrb[0].mxu0
        %2373 = vmatprep.mubr.f32.mxu0 0.0
        %2374 = vmatmul.mubr.f32.gmra.mrb[0].mxu0 %v2292
        %v2375 = vpop.f32.mrb[0].mxu0
        %v2376 = vadd.f32 0.0, %v2375
        %v2377 = vpop.f32.mrb[0].mxu0
        %2378 = vdwg.mxu0
        %v2380 = vsel %vm1887, %v2084, 0
        %v2383 = vsel %vm1887, %v2085, 0
        %v2386 = vsel %vm1887, %v2086, 0
        %v2389 = vsel %vm1887, %v2087, 0
        %2391 = vmatprep.subr.mxu0 0.0
        %2392 = vmatpush1.msra.mxu0 %v1395
        %2393 = vmatprep.subr.mxu0 0.0
        %2394 = vmatpush1.msra.mxu0 %v1396
        %2395 = vmatprep.subr.mxu0 0.0
        %2396 = vmatpush1.msra.mxu0 %v1397
        %2397 = vmatprep.subr.mxu0 0.0
        %2398 = vmatpush1.msra.mxu0 %v1398
        %2399 = vmatprep.subr.mxu0 0.0
        %2400 = vmatpush1.msra.mxu0 %v1399
        %2401 = vmatprep.subr.mxu0 0.0
        %2402 = vmatpush1.msra.mxu0 %v1400
        %2403 = vmatprep.subr.mxu0 0.0
        %2404 = vmatpush1.msra.mxu0 %v1401
        %2405 = vmatprep.subr.mxu0 0.0
        %2406 = vmatpush1.msra.mxu0 %v1402
        %2407 = vmatprep.subr.mxu0 0.0
        %2408 = vmatpush1.msra.mxu0 0.0
        %2409 = vmatprep.subr.mxu0 0.0
        %2410 = vmatpush1.msra.mxu0 0.0
        %2411 = vmatprep.subr.mxu0 0.0
        %2412 = vmatpush1.msra.mxu0 0.0
        %2413 = vmatprep.subr.mxu0 0.0
        %2414 = vmatpush1.msra.mxu0 0.0
        %2415 = vmatprep.subr.mxu0 0.0
        %2416 = vmatpush1.msra.mxu0 0.0
        %2417 = vmatprep.subr.mxu0 0.0
        %2418 = vmatpush1.msra.mxu0 0.0
        %2419 = vmatprep.subr.mxu0 0.0
        %2420 = vmatpush1.msra.mxu0 0.0
        %2421 = vmatprep.subr.mxu0 0.0
        %2422 = vmatpush1.msra.mxu0 0.0
        %2423 = vmatprep.subr.mxu0 0.0
        %2424 = vmatpush1.msra.mxu0 0.0
        %2425 = vmatprep.subr.mxu0 0.0
        %2426 = vmatpush1.msra.mxu0 0.0
        %2427 = vmatprep.subr.mxu0 0.0
        %2428 = vmatpush1.msra.mxu0 0.0
        %2429 = vmatprep.subr.mxu0 0.0
        %2430 = vmatpush1.msra.mxu0 0.0
        %2431 = vmatprep.subr.mxu0 0.0
        %2432 = vmatpush1.msra.mxu0 0.0
        %2433 = vmatprep.subr.mxu0 0.0
        %2434 = vmatpush1.msra.mxu0 0.0
        %2435 = vmatprep.subr.mxu0 0.0
        %2436 = vmatpush1.msra.mxu0 0.0
        %2437 = vmatprep.subr.mxu0 0.0
        %2438 = vmatpush1.msra.mxu0 0.0
        %2439 = vmatprep.subr.mxu0 0.0
        %2440 = vmatpush1.msra.mxu0 0.0
        %2441 = vmatprep.subr.mxu0 0.0
        %2442 = vmatpush1.msra.mxu0 0.0
        %2443 = vmatprep.subr.mxu0 0.0
        %2444 = vmatpush1.msra.mxu0 0.0
        %2445 = vmatprep.subr.mxu0 0.0
        %2446 = vmatpush1.msra.mxu0 0.0
        %2447 = vmatprep.subr.mxu0 0.0
        %2448 = vmatpush1.msra.mxu0 0.0
        %2449 = vmatprep.subr.mxu0 0.0
        %2450 = vmatpush1.msra.mxu0 0.0
        %2451 = vmatprep.subr.mxu0 0.0
        %2452 = vmatpush1.msra.mxu0 0.0
        %2453 = vmatprep.subr.mxu0 0.0
        %2454 = vmatpush1.msra.mxu0 0.0
        %2455 = vmatprep.mubr.f32.mxu0 0.0
        %2456 = vmatmul.mubr.f32.gmra.mrb[0].mxu0 %v2380
        %v2457 = vpop.f32.mrb[0].mxu0
        %v2458 = vadd.f32 0.0, %v2457
        %v2459 = vpop.f32.mrb[0].mxu0
        %2460 = vmatprep.mubr.f32.mxu0 0.0
        %2461 = vmatmul.mubr.f32.gmra.mrb[0].mxu0 %v2383
        %v2462 = vpop.f32.mrb[0].mxu0
        %v2463 = vadd.f32 0.0, %v2462
        %v2464 = vpop.f32.mrb[0].mxu0
        %2465 = vmatprep.mubr.f32.mxu0 0.0
        %2466 = vmatmul.mubr.f32.gmra.mrb[0].mxu0 %v2386
        %v2467 = vpop.f32.mrb[0].mxu0
        %v2468 = vadd.f32 0.0, %v2467
        %v2469 = vpop.f32.mrb[0].mxu0
        %2470 = vmatprep.mubr.f32.mxu0 0.0
        %2471 = vmatmul.mubr.f32.gmra.mrb[0].mxu0 %v2389
        %v2472 = vpop.f32.mrb[0].mxu0
        %v2473 = vadd.f32 0.0, %v2472
        %v2474 = vpop.f32.mrb[0].mxu0
        %2475 = vdwg.mxu0
        %2476 = vst.msk [vmem:[#allocation5] sm:$0xff] %vm1250, %v2167
        %2477 = vst.msk [vmem:[#allocation5 + $0x8] sm:$0xff] %vm1250, %v2172
        %2478 = vst.msk [vmem:[#allocation5 + $0x10] sm:$0xff] %vm1250, %v2177
        %2479 = vst.msk [vmem:[#allocation5 + $0x18] sm:$0xff] %vm1250, %v2182
        %2484 = vrot.lane.b32.xlu0 %v2264, 8
        %v2485 = vpop.permute.xlu0 %2484
        %2486 = vrot.lane.b32.xlu0 %v2269, 8
        %v2487 = vpop.permute.xlu0 %2486
        %2488 = vrot.lane.b32.xlu0 %v2274, 8
        %v2489 = vpop.permute.xlu0 %2488
        %2490 = vrot.lane.b32.xlu0 %v2279, 8
        %v2491 = vpop.permute.xlu0 %2490
        %vm2496 = vcmask 130112
        %2497 = vst.msk [vmem:[#allocation5] sm:$0xff] %vm2496, %v2485
        %2498 = vst.msk [vmem:[#allocation5 + $0x8] sm:$0xff] %vm2496, %v2487
        %2499 = vst.msk [vmem:[#allocation5 + $0x10] sm:$0xff] %vm2496, %v2489
        %2500 = vst.msk [vmem:[#allocation5 + $0x18] sm:$0xff] %vm2496, %v2491
        %2505 = vrot.lane.b32.xlu0 %v2361, 16
        %v2506 = vpop.permute.xlu0 %2505
        %2507 = vrot.lane.b32.xlu0 %v2366, 16
        %v2508 = vpop.permute.xlu0 %2507
        %2509 = vrot.lane.b32.xlu0 %v2371, 16
        %v2510 = vpop.permute.xlu0 %2509
        %2511 = vrot.lane.b32.xlu0 %v2376, 16
        %v2512 = vpop.permute.xlu0 %2511
        %vm2517 = vcmask 195712
        %2518 = vst.msk [vmem:[#allocation5] sm:$0xff] %vm2517, %v2506
        %2519 = vst.msk [vmem:[#allocation5 + $0x8] sm:$0xff] %vm2517, %v2508
        %2520 = vst.msk [vmem:[#allocation5 + $0x10] sm:$0xff] %vm2517, %v2510
        %2521 = vst.msk [vmem:[#allocation5 + $0x18] sm:$0xff] %vm2517, %v2512
        %2526 = vrot.lane.b32.xlu0 %v2458, 24
        %v2527 = vpop.permute.xlu0 %2526
        %2528 = vrot.lane.b32.xlu0 %v2463, 24
        %v2529 = vpop.permute.xlu0 %2528
        %2530 = vrot.lane.b32.xlu0 %v2468, 24
        %v2531 = vpop.permute.xlu0 %2530
        %2532 = vrot.lane.b32.xlu0 %v2473, 24
        %v2533 = vpop.permute.xlu0 %2532
        %vm2538 = vcmask 261312
        %2539 = vst.msk [vmem:[#allocation5] sm:$0xff] %vm2538, %v2527
        %2540 = vst.msk [vmem:[#allocation5 + $0x8] sm:$0xff] %vm2538, %v2529
        %2541 = vst.msk [vmem:[#allocation5 + $0x10] sm:$0xff] %vm2538, %v2531
        %2542 = vst.msk [vmem:[#allocation5 + $0x18] sm:$0xff] %vm2538, %v2533
        %v2543 = vld [vmem:[#allocation5] sm:$0xff]
        %v2544 = vld [vmem:[#allocation5 + $0x8] sm:$0xff]
        %v2545 = vld [vmem:[#allocation5 + $0x10] sm:$0xff]
        %v2546 = vld [vmem:[#allocation5 + $0x18] sm:$0xff]
        %v2547 = vld [vmem:[#allocation20] sm:$0xff]
        %v2548 = vld [vmem:[#allocation20 + $0x8] sm:$0xff]
        %v2549 = vld [vmem:[#allocation20 + $0x10] sm:$0xff]
        %v2550 = vld [vmem:[#allocation20 + $0x18] sm:$0xff]
        %v2551 = vld [vmem:[#allocation21] sm:$0x1]
        %v2553 = vlaneseq
        %v2554 = vshrl.u32 %v2553, 7
        %v2555 = vsub.s32 0, %v2554
        %v2556 = vrot.slane %v2551, %v2555
        %v2559 = vsel %vm1152, %v2543, 0
        %v2562 = vsel %vm1152, %v2544, 0
        %v2565 = vsel %vm1152, %v2545, 0
        %v2568 = vsel %vm1152, %v2546, 0
        %2570 = vmatprep.subr.mxu0 0.0
        %2571 = vmatpush1.msra.mxu0 %v2547
        %2572 = vmatprep.subr.mxu0 0.0
        %2573 = vmatpush1.msra.mxu0 %v2548
        %2574 = vmatprep.subr.mxu0 0.0
        %2575 = vmatpush1.msra.mxu0 %v2549
        %2576 = vmatprep.subr.mxu0 0.0
        %2577 = vmatpush1.msra.mxu0 %v2550
        %2578 = vmatprep.subr.mxu0 0.0
        %2579 = vmatpush1.msra.mxu0 0.0
        %2580 = vmatprep.subr.mxu0 0.0
        %2581 = vmatpush1.msra.mxu0 0.0
        %2582 = vmatprep.subr.mxu0 0.0
        %2583 = vmatpush1.msra.mxu0 0.0
        %2584 = vmatprep.subr.mxu0 0.0
        %2585 = vmatpush1.msra.mxu0 0.0
        %2586 = vmatprep.subr.mxu0 0.0
        %2587 = vmatpush1.msra.mxu0 0.0
        %2588 = vmatprep.subr.mxu0 0.0
        %2589 = vmatpush1.msra.mxu0 0.0
        %2590 = vmatprep.subr.mxu0 0.0
        %2591 = vmatpush1.msra.mxu0 0.0
        %2592 = vmatprep.subr.mxu0 0.0
        %2593 = vmatpush1.msra.mxu0 0.0
        %2594 = vmatprep.subr.mxu0 0.0
        %2595 = vmatpush1.msra.mxu0 0.0
        %2596 = vmatprep.subr.mxu0 0.0
        %2597 = vmatpush1.msra.mxu0 0.0
        %2598 = vmatprep.subr.mxu0 0.0
        %2599 = vmatpush1.msra.mxu0 0.0
        %2600 = vmatprep.subr.mxu0 0.0
        %2601 = vmatpush1.msra.mxu0 0.0
        %2602 = vmatprep.subr.mxu0 0.0
        %2603 = vmatpush1.msra.mxu0 0.0
        %2604 = vmatprep.subr.mxu0 0.0
        %2605 = vmatpush1.msra.mxu0 0.0
        %2606 = vmatprep.subr.mxu0 0.0
        %2607 = vmatpush1.msra.mxu0 0.0
        %2608 = vmatprep.subr.mxu0 0.0
        %2609 = vmatpush1.msra.mxu0 0.0
        %2610 = vmatprep.subr.mxu0 0.0
        %2611 = vmatpush1.msra.mxu0 0.0
        %2612 = vmatprep.subr.mxu0 0.0
        %2613 = vmatpush1.msra.mxu0 0.0
        %2614 = vmatprep.subr.mxu0 0.0
        %2615 = vmatpush1.msra.mxu0 0.0
        %2616 = vmatprep.subr.mxu0 0.0
        %2617 = vmatpush1.msra.mxu0 0.0
        %2618 = vmatprep.subr.mxu0 0.0
        %2619 = vmatpush1.msra.mxu0 0.0
        %2620 = vmatprep.subr.mxu0 0.0
        %2621 = vmatpush1.msra.mxu0 0.0
        %2622 = vmatprep.subr.mxu0 0.0
        %2623 = vmatpush1.msra.mxu0 0.0
        %2624 = vmatprep.subr.mxu0 0.0
        %2625 = vmatpush1.msra.mxu0 0.0
        %2626 = vmatprep.subr.mxu0 0.0
        %2627 = vmatpush1.msra.mxu0 0.0
        %2628 = vmatprep.subr.mxu0 0.0
        %2629 = vmatpush1.msra.mxu0 0.0
        %2630 = vmatprep.subr.mxu0 0.0
        %2631 = vmatpush1.msra.mxu0 0.0
        %2632 = vmatprep.subr.mxu0 0.0
        %2633 = vmatpush1.msra.mxu0 0.0
        %2634 = vmatprep.mubr.f32.mxu0 0.0
        %2635 = vmatmul.mubr.f32.gmra.mrb[0].mxu0 %v2559
        %v2636 = vpop.f32.mrb[0].mxu0
        %v2637 = vadd.f32 %v2556, %v2636
        %v2638 = vpop.f32.mrb[0].mxu0
        %2639 = vmatprep.mubr.f32.mxu0 0.0
        %2640 = vmatmul.mubr.f32.gmra.mrb[0].mxu0 %v2562
        %v2641 = vpop.f32.mrb[0].mxu0
        %v2642 = vadd.f32 %v2556, %v2641
        %v2643 = vpop.f32.mrb[0].mxu0
        %2644 = vmatprep.mubr.f32.mxu0 0.0
        %2645 = vmatmul.mubr.f32.gmra.mrb[0].mxu0 %v2565
        %v2646 = vpop.f32.mrb[0].mxu0
        %v2647 = vadd.f32 %v2556, %v2646
        %v2648 = vpop.f32.mrb[0].mxu0
        %2649 = vmatprep.mubr.f32.mxu0 0.0
        %2650 = vmatmul.mubr.f32.gmra.mrb[0].mxu0 %v2568
        %v2651 = vpop.f32.mrb[0].mxu0
        %v2652 = vadd.f32 %v2556, %v2651
        %v2653 = vpop.f32.mrb[0].mxu0
        %2654 = vdwg.mxu0
        %2655 = vst.msk [vmem:[%s594] sm:$0xff] %vm1152, %v2637
        %2656 = vst.msk [vmem:[%s594 + $0x8] sm:$0xff] %vm1152, %v2642
        %2657 = vst.msk [vmem:[%s594 + $0x10] sm:$0xff] %vm1152, %v2647
        %2658 = vst.msk [vmem:[%s594 + $0x18] sm:$0xff] %vm1152, %v2652
        %s2659 = sand.u32 %s292, 1
        %s2660 = scalar_lea.sflag [#allocation8], %s2659
        %s2661 = sand.u32 %s292, 1
        %s2662 = smul.addr %s2661, 32
        %s2663 = scalar_lea.vmem [#allocation23], %s2662
        // Predicated region
        $region105: #{tpu_custom_call.1} parent=59 // pred_check
          %p2664 = pneg %p302
        $region106: #{tpu_custom_call.1} parent=59 // pred_check_branch
          %2666 = sbr.rel (%p2664) target = $region108
        $region107: #{tpu_custom_call.1} parent=59 // pred_region
          %s2667 = smul.u32 4, %s41
          %s2669 = ssub.s32 512, 512
          %2670 = vsyncadd %s2660, %s2669
          %s2671 = smul.addr %s40, 8
          %s2672 = sadd.s32 %s2667, %s2671
          %s2673 = smul.addr %s2672, 128
          %s2674 = scalar_lea.hbm %s10, %s2673
          %s2675 = sshll.u32 %s2663, 4
          %s2676 = int_to_ptr.vmem [resolvable:$true] %s2675
          %2681 = dma.vmem_to_hbm [thread:$0]  %s2676, 512, %s2674, %s2660, 128, 128, 8
        $region108: #{tpu_custom_call.1} parent=59 // pred_fallthru
          _
      $region60: #{tpu_custom_call.1} parent=5 // pred_fallthru
        _
      %p2682 = scmp.le.s32.totalorder 2, %s31
      // Predicated region
      $region109: #{tpu_custom_call.1} parent=5 // pred_check
        %p2683 = pneg %p2682
      $region110: #{tpu_custom_call.1} parent=5 // pred_check_branch
        %2685 = sbr.rel (%p2683) target = $region112
      $region111: #{tpu_custom_call.1} parent=5 // pred_region
        %s2686 = ssub.s32 %s31, 2
        // Predicated region
        $region113: #{tpu_custom_call.1} parent=111 // pred_check
          %p2687 = pneg %p308
        $region114: #{tpu_custom_call.1} parent=111 // pred_check_branch
          %2689 = sbr.rel (%p2687) target = $region116
        $region115: #{tpu_custom_call.1} parent=111 // pred_region
          %s2690 = sand.u32 %s293, 1
          %s2691 = scalar_lea.sflag [#allocation8], %s2690
          %s2692 = sand.u32 %s293, 1
          %s2693 = smul.addr %s2692, 32
          %s2694 = scalar_lea.vmem [#allocation23], %s2693
          %2695 = dma.done %s2691, 512
        $region116: #{tpu_custom_call.1} parent=111 // pred_fallthru
          _
      $region112: #{tpu_custom_call.1} parent=5 // pred_fallthru
        _
    $region6: #{tpu_custom_call.1} parent=1 // loop_footer
      %s35 = sadd.s32 1, %s31
    $region7: #{tpu_custom_call.1} parent=1 // loop_footer_branch
      %30 = sbr.rel target = $region3
    $region8: #{tpu_custom_call.1} parent=1 // loop_exit
      _
    %2696 = vsyncpa [#allocation7], 1
    %s2697 = scalar_lea.sflag [#allocation7], 1
    %2698 = vsyncpa %s2697, 1
    %2699 = vsyncpa [#allocation10], 1
    %s2700 = scalar_lea.sflag [#allocation10], 1
    %2701 = vsyncpa %s2700, 1
    %2702 = vsyncpa [#allocation13], 1
    %s2703 = scalar_lea.sflag [#allocation13], 1
    %2704 = vsyncpa %s2703, 1
    %2705 = vsyncpa [#allocation16], 1
    %2706 = vsyncpa [#allocation19], 1
    %2707 = vsyncpa [#allocation22], 1
    %2708 = vsyncpa [#allocation8], 1
    %s2709 = scalar_lea.sflag [#allocation8], 1
    %2710 = vsyncpa %s2709, 1

// kernel: tpu_custom_call.1
$region0: #{tpu_custom_call.1}
  #allocation0 [shape = 'u32[]', space=smem, size = 0x4, offset = 0x4, fixed_abs, tag = 'smem constant byte address 0x4 - core index']
  #allocation1 [shape = 'u32[144,128]{1,0:T(1,128)}', space=vmem, size = 0x12000, scoped, tag = 'internal scratch']
  #allocation2 [shape = 'f32[4,64,8]{2,1,0:T(8,128)}', space=vmem, size = 0x20000, scoped, tag = 'scratch operand']
  #allocation3 [shape = 'f32[4,64,8]{2,1,0:T(8,128)}', space=vmem, size = 0x20000, scoped, tag = 'scratch operand']
  #allocation4 [shape = 'f32[4,32,8]{2,1,0:T(8,128)}', space=vmem, size = 0x10000, scoped, tag = 'scratch operand']
  #allocation5 [shape = 'f32[32,32]{1,0:T(8,128)}', space=vmem, size = 0x4000, scoped, tag = 'scratch operand']
  %s0 = inlined_call_operand.hbm [shape: f32[2,64,32], index: 0, kind: input, shape index: {}]
  %s1 = inlined_call_operand.hbm [shape: f32[2,64,32], index: 1, kind: input, shape index: {}]
  %s2 = inlined_call_operand.hbm [shape: f32[2,64,32], index: 2, kind: input, shape index: {}]
  %s3 = inlined_call_operand.hbm [shape: s8[2,64,64], index: 3, kind: input, shape index: {}]
  %s4 = inlined_call_operand.hbm [shape: f32[32,32], index: 4, kind: input, shape index: {}]
  %s5 = inlined_call_operand.hbm [shape: f32[1,32], index: 5, kind: input, shape index: {}]
  %s6 = inlined_call_operand.hbm [shape: f32[32,64], index: 6, kind: input, shape index: {}]
  %s7 = inlined_call_operand.hbm [shape: f32[1,64], index: 7, kind: input, shape index: {}]
  %s8 = inlined_call_operand.hbm [shape: f32[32,32], index: 8, kind: input, shape index: {}]
  %s9 = inlined_call_operand.hbm [shape: f32[1,32], index: 9, kind: input, shape index: {}]
  %s10 = inlined_call_operand.hbm [shape: f32[2,64,32], index: 10, kind: output, shape index: {}]
  %s11 = sld [smem:[#allocation0]]
  $region117: #{tpu_custom_call.1} parent=0
    _
  %s13 = ssub.s32 1, %s11
  %s14 = scalar_select 0, %s13, %s11
  $region1: #{tpu_custom_call.1} parent=0
    #allocation6 [shape = 'u8[32768]{0}', space=vmem, size = 0x8000, scoped, tag = 'input window, operand 0']
    #allocation7 [shape = 's32[2]{0}', space=sflag, size = 0x8, scoped, tag = 'scoped memory for tpu_custom_call.1']
    #allocation8 [shape = 's32[2]{0}', space=sflag, size = 0x8, scoped, tag = 'scoped memory for tpu_custom_call.1']
    #allocation9 [shape = 'u8[65536]{0}', space=vmem, size = 0x10000, scoped, tag = 'input window, operand 1']
    #allocation10 [shape = 's32[2]{0}', space=sflag, size = 0x8, scoped, tag = 'scoped memory for tpu_custom_call.1']
    #allocation11 [shape = 'u8[65536]{0}', space=vmem, size = 0x10000, scoped, tag = 'input window, operand 2']
    #allocation12 [shape = 'u8[8192]{0}', space=vmem, size = 0x2000, scoped, tag = 'input window, operand 3']
    #allocation13 [shape = 's32[2]{0}', space=sflag, size = 0x8, scoped, tag = 'scoped memory for tpu_custom_call.1']
    #allocation14 [shape = 'u8[16384]{0}', space=vmem, size = 0x4000, scoped, tag = 'input window, operand 4, single buffered']
    #allocation15 [shape = 'u8[512]{0}', space=vmem, size = 0x400, scoped, tag = 'input window, operand 5, single buffered']
    #allocation16 [shape = 's32[1]{0}', space=sflag, size = 0x4, scoped, tag = 'scoped memory for tpu_custom_call.1']
    #allocation17 [shape = 'u8[16384]{0}', space=vmem, size = 0x4000, scoped, tag = 'input window, operand 6, single buffered']
    #allocation18 [shape = 'u8[512]{0}', space=vmem, size = 0x400, scoped, tag = 'input window, operand 7, single buffered']
    #allocation19 [shape = 's32[1]{0}', space=sflag, size = 0x4, scoped, tag = 'scoped memory for tpu_custom_call.1']
    #allocation20 [shape = 'u8[16384]{0}', space=vmem, size = 0x4000, scoped, tag = 'input window, operand 8, single buffered']
    #allocation21 [shape = 'u8[512]{0}', space=vmem, size = 0x400, scoped, tag = 'input window, operand 9, single buffered']
    #allocation22 [shape = 's32[1]{0}', space=sflag, size = 0x4, scoped, tag = 'scoped memory for tpu_custom_call.1']
    #allocation23 [shape = 'u8[32768]{0}', space=vmem, size = 0x8000, scoped, tag = 'output window, operand 0']
    %15 = vsyncpa [#allocation7], 0
    %s16 = scalar_lea.sflag [#allocation7], 1
    %17 = vsyncpa %s16, 0
    %18 = vsyncpa [#allocation10], 0
    %s19 = scalar_lea.sflag [#allocation10], 1
    %20 = vsyncpa %s19, 0
    %21 = vsyncpa [#allocation13], 0
    %s22 = scalar_lea.sflag [#allocation13], 1
    %23 = vsyncpa %s22, 0
    %24 = vsyncpa [#allocation16], 0
    %25 = vsyncpa [#allocation19], 0
    %26 = vsyncpa [#allocation22], 0
    %27 = vsyncpa [#allocation8], 0
    %s28 = scalar_lea.sflag [#allocation8], 1
    %29 = vsyncpa %s28, 0
    loop: start=0, step=1, limit=6
    $region2: #{tpu_custom_call.1} parent=1 // loop_pre_header
      _
    $region3: #{tpu_custom_call.1} parent=1 // loop_header
      %s31 = sphi 0, %s35
      %p32 = scmp.ge.s32.totalorder %s31, 6
      %s38 = sphi 0, %s50
      %s39 = sphi 0, %s46
      %s40 = sphi 0, %s38
      %s41 = sphi 0, %s39
      %s42 = sphi 0, %s40
      %s43 = sphi 0, %s41
      %s55 = sphi 0, %s57
      %s58 = sphi 0, %s55
      %s59 = sphi 0, %s58
      %s75 = sphi 0, %s59
      %s81 = sphi 0, %s83
      %s84 = sphi 0, %s81
      %s85 = sphi 0, %s84
      %s101 = sphi 0, %s85
      %s107 = sphi 0, %s109
      %s110 = sphi 0, %s107
      %s111 = sphi 0, %s110
      %s127 = sphi 0, %s111
      %s135 = sphi 0, %s137
      %s138 = sphi 0, %s135
      %s139 = sphi 0, %s138
      %s155 = sphi 0, %s139
      %s159 = sphi 0, %s159
      %s161 = sphi 0, %s159
      %s162 = sphi 0, %s161
      %s176 = sphi 0, %s162
      %s180 = sphi 0, %s180
      %s182 = sphi 0, %s180
      %s183 = sphi 0, %s182
      %s197 = sphi 0, %s183
      %s201 = sphi 0, %s201
      %s203 = sphi 0, %s201
      %s204 = sphi 0, %s203
      %s218 = sphi 0, %s204
      %s222 = sphi 0, %s222
      %s224 = sphi 0, %s222
      %s225 = sphi 0, %s224
      %s239 = sphi 0, %s225
      %s243 = sphi 0, %s243
      %s245 = sphi 0, %s243
      %s246 = sphi 0, %s245
      %s260 = sphi 0, %s246
      %s264 = sphi 0, %s264
      %s266 = sphi 0, %s264
      %s267 = sphi 0, %s266
      %s281 = sphi 0, %s267
      %s289 = sphi 0, %s291
      %s292 = sphi 0, %s289
      %s293 = sphi 0, %s292
      %s309 = sphi 0, %s293
    $region4: #{tpu_custom_call.1} parent=1 // loop_header_branch
      %34 = sbr.rel (%p32) target = $region8
    $region5: #{tpu_custom_call.1} parent=1 // loop_body
      %s36 = ssub.s32 %s31, 1
      %s37 = ssub.s32 %s31, 2
      %s44 = sadd.s32 1, %s39
      %p45 = scmp.ge.s32.totalorder %s44, 2
      %s46 = scalar_select %p45, 0, %s44
      %s47 = sadd.s32 1, %s38
      %s48 = scalar_select %p45, %s47, %s38
      %p49 = scmp.ge.s32.totalorder %s48, 2
      %s50 = scalar_select %p49, 0, %s48
      %s51 = ssub.s32 %s38, %s50
      %s52 = ssub.s32 %s39, %s46
      %s53 = sor.u32 %s51, %s52
      %p54 = scmp.eq.s32.totalorder %s53, 0
      %s56 = sadd.s32 %s55, 1
      %s57 = scalar_select %p54, %s55, %s56
      %p60 = pneg %p54
      %p61 = scmp.eq.s32.totalorder %s31, 3
      %p62 = por %p60, %p61
      %p63 = scmp.ne.s32.totalorder %s55, %s58
      %p64 = scmp.eq.s32.totalorder %s31, 0
      %p65 = por %p63, %p64
      %p66 = scmp.ne.s32.totalorder %s55, %s58
      %p67 = scmp.eq.s32.totalorder %s36, 3
      %p68 = por %p66, %p67
      %p69 = scmp.ne.s32.totalorder %s58, %s59
      %p70 = scmp.eq.s32.totalorder %s36, 0
      %p71 = por %p69, %p70
      %p72 = scmp.ne.s32.totalorder %s58, %s59
      %p73 = scmp.eq.s32.totalorder %s37, 3
      %p74 = por %p72, %p73
      %p76 = scmp.ne.s32.totalorder %s59, %s75
      %p77 = scmp.eq.s32.totalorder %s37, 0
      %p78 = por %p76, %p77
      %s79 = ssub.s32 %s38, %s50
      %p80 = scmp.eq.s32.totalorder %s79, 0
      %s82 = sadd.s32 %s81, 1
      %s83 = scalar_select %p80, %s81, %s82
      %p86 = pneg %p80
      %p87 = scmp.eq.s32.totalorder %s31, 3
      %p88 = por %p86, %p87
      %p89 = scmp.ne.s32.totalorder %s81, %s84
      %p90 = scmp.eq.s32.totalorder %s31, 0
      %p91 = por %p89, %p90
      %p92 = scmp.ne.s32.totalorder %s81, %s84
      %p93 = scmp.eq.s32.totalorder %s36, 3
      %p94 = por %p92, %p93
      %p95 = scmp.ne.s32.totalorder %s84, %s85
      %p96 = scmp.eq.s32.totalorder %s36, 0
      %p97 = por %p95, %p96
      %p98 = scmp.ne.s32.totalorder %s84, %s85
      %p99 = scmp.eq.s32.totalorder %s37, 3
      %p100 = por %p98, %p99
      %p102 = scmp.ne.s32.totalorder %s85, %s101
      %p103 = scmp.eq.s32.totalorder %s37, 0
      %p104 = por %p102, %p103
      %s105 = ssub.s32 %s38, %s50
      %p106 = scmp.eq.s32.totalorder %s105, 0
      %s108 = sadd.s32 %s107, 1
      %s109 = scalar_select %p106, %s107, %s108
      %p112 = pneg %p106
      %p113 = scmp.eq.s32.totalorder %s31, 3
      %p114 = por %p112, %p113
      %p115 = scmp.ne.s32.totalorder %s107, %s110
      %p116 = scmp.eq.s32.totalorder %s31, 0
      %p117 = por %p115, %p116
      %p118 = scmp.ne.s32.totalorder %s107, %s110
      %p119 = scmp.eq.s32.totalorder %s36, 3
      %p120 = por %p118, %p119
      %p121 = scmp.ne.s32.totalorder %s110, %s111
      %p122 = scmp.eq.s32.totalorder %s36, 0
      %p123 = por %p121, %p122
      %p124 = scmp.ne.s32.totalorder %s110, %s111
      %p125 = scmp.eq.s32.totalorder %s37, 3
      %p126 = por %p124, %p125
      %p128 = scmp.ne.s32.totalorder %s111, %s127
      %p129 = scmp.eq.s32.totalorder %s37, 0
      %p130 = por %p128, %p129
      %s131 = ssub.s32 %s38, %s50
      %s132 = ssub.s32 %s39, %s46
      %s133 = sor.u32 %s131, %s132
      %p134 = scmp.eq.s32.totalorder %s133, 0
      %s136 = sadd.s32 %s135, 1
      %s137 = scalar_select %p134, %s135, %s136
      %p140 = pneg %p134
      %p141 = scmp.eq.s32.totalorder %s31, 3
      %p142 = por %p140, %p141
      %p143 = scmp.ne.s32.totalorder %s135, %s138
      %p144 = scmp.eq.s32.totalorder %s31, 0
      %p145 = por %p143, %p144
      %p146 = scmp.ne.s32.totalorder %s135, %s138
      %p147 = scmp.eq.s32.totalorder %s36, 3
      %p148 = por %p146, %p147
      %p149 = scmp.ne.s32.totalorder %s138, %s139
      %p150 = scmp.eq.s32.totalorder %s36, 0
      %p151 = por %p149, %p150
      %p152 = scmp.ne.s32.totalorder %s138, %s139
      %p153 = scmp.eq.s32.totalorder %s37, 3
      %p154 = por %p152, %p153
      %p156 = scmp.ne.s32.totalorder %s139, %s155
      %p157 = scmp.eq.s32.totalorder %s37, 0
      %p158 = por %p156, %p157
      %s160 = sadd.s32 %s159, 1
      %p163 = scmp.eq.s32.totalorder %s31, 3
      %p164 = scmp.ne.s32.totalorder %s159, %s161
      %p165 = scmp.eq.s32.totalorder %s31, 0
      %p166 = por %p164, %p165
      %p167 = scmp.ne.s32.totalorder %s159, %s161
      %p168 = scmp.eq.s32.totalorder %s36, 3
      %p169 = por %p167, %p168
      %p170 = scmp.ne.s32.totalorder %s161, %s162
      %p171 = scmp.eq.s32.totalorder %s36, 0
      %p172 = por %p170, %p171
      %p173 = scmp.ne.s32.totalorder %s161, %s162
      %p174 = scmp.eq.s32.totalorder %s37, 3
      %p175 = por %p173, %p174
      %p177 = scmp.ne.s32.totalorder %s162, %s176
      %p178 = scmp.eq.s32.totalorder %s37, 0
      %p179 = por %p177, %p178
      %s181 = sadd.s32 %s180, 1
      %p184 = scmp.eq.s32.totalorder %s31, 3
      %p185 = scmp.ne.s32.totalorder %s180, %s182
      %p186 = scmp.eq.s32.totalorder %s31, 0
      %p187 = por %p185, %p186
      %p188 = scmp.ne.s32.totalorder %s180, %s182
      %p189 = scmp.eq.s32.totalorder %s36, 3
      %p190 = por %p188, %p189
      %p191 = scmp.ne.s32.totalorder %s182, %s183
      %p192 = scmp.eq.s32.totalorder %s36, 0
      %p193 = por %p191, %p192
      %p194 = scmp.ne.s32.totalorder %s182, %s183
      %p195 = scmp.eq.s32.totalorder %s37, 3
      %p196 = por %p194, %p195
      %p198 = scmp.ne.s32.totalorder %s183, %s197
      %p199 = scmp.eq.s32.totalorder %s37, 0
      %p200 = por %p198, %p199
      %s202 = sadd.s32 %s201, 1
      %p205 = scmp.eq.s32.totalorder %s31, 3
      %p206 = scmp.ne.s32.totalorder %s201, %s203
      %p207 = scmp.eq.s32.totalorder %s31, 0
      %p208 = por %p206, %p207
      %p209 = scmp.ne.s32.totalorder %s201, %s203
      %p210 = scmp.eq.s32.totalorder %s36, 3
      %p211 = por %p209, %p210
      %p212 = scmp.ne.s32.totalorder %s203, %s204
      %p213 = scmp.eq.s32.totalorder %s36, 0
      %p214 = por %p212, %p213
      %p215 = scmp.ne.s32.totalorder %s203, %s204
      %p216 = scmp.eq.s32.totalorder %s37, 3
      %p217 = por %p215, %p216
      %p219 = scmp.ne.s32.totalorder %s204, %s218
      %p220 = scmp.eq.s32.totalorder %s37, 0
      %p221 = por %p219, %p220
      %s223 = sadd.s32 %s222, 1
      %p226 = scmp.eq.s32.totalorder %s31, 3
      %p227 = scmp.ne.s32.totalorder %s222, %s224
      %p228 = scmp.eq.s32.totalorder %s31, 0
      %p229 = por %p227, %p228
      %p230 = scmp.ne.s32.totalorder %s222, %s224
      %p231 = scmp.eq.s32.totalorder %s36, 3
      %p232 = por %p230, %p231
      %p233 = scmp.ne.s32.totalorder %s224, %s225
      %p234 = scmp.eq.s32.totalorder %s36, 0
      %p235 = por %p233, %p234
      %p236 = scmp.ne.s32.totalorder %s224, %s225
      %p237 = scmp.eq.s32.totalorder %s37, 3
      %p238 = por %p236, %p237
      %p240 = scmp.ne.s32.totalorder %s225, %s239
      %p241 = scmp.eq.s32.totalorder %s37, 0
      %p242 = por %p240, %p241
      %s244 = sadd.s32 %s243, 1
      %p247 = scmp.eq.s32.totalorder %s31, 3
      %p248 = scmp.ne.s32.totalorder %s243, %s245
      %p249 = scmp.eq.s32.totalorder %s31, 0
      %p250 = por %p248, %p249
      %p251 = scmp.ne.s32.totalorder %s243, %s245
      %p252 = scmp.eq.s32.totalorder %s36, 3
      %p253 = por %p251, %p252
      %p254 = scmp.ne.s32.totalorder %s245, %s246
      %p255 = scmp.eq.s32.totalorder %s36, 0
      %p256 = por %p254, %p255
      %p257 = scmp.ne.s32.totalorder %s245, %s246
      %p258 = scmp.eq.s32.totalorder %s37, 3
      %p259 = por %p257, %p258
      %p261 = scmp.ne.s32.totalorder %s246, %s260
      %p262 = scmp.eq.s32.totalorder %s37, 0
      %p263 = por %p261, %p262
      %s265 = sadd.s32 %s264, 1
      %p268 = scmp.eq.s32.totalorder %s31, 3
      %p269 = scmp.ne.s32.totalorder %s264, %s266
      %p270 = scmp.eq.s32.totalorder %s31, 0
      %p271 = por %p269, %p270
      %p272 = scmp.ne.s32.totalorder %s264, %s266
      %p273 = scmp.eq.s32.totalorder %s36, 3
      %p274 = por %p272, %p273
      %p275 = scmp.ne.s32.totalorder %s266, %s267
      %p276 = scmp.eq.s32.totalorder %s36, 0
      %p277 = por %p275, %p276
      %p278 = scmp.ne.s32.totalorder %s266, %s267
      %p279 = scmp.eq.s32.totalorder %s37, 3
      %p280 = por %p278, %p279
      %p282 = scmp.ne.s32.totalorder %s267, %s281
      %p283 = scmp.eq.s32.totalorder %s37, 0
      %p284 = por %p282, %p283
      %s285 = ssub.s32 %s38, %s50
      %s286 = ssub.s32 %s39, %s46
      %s287 = sor.u32 %s285, %s286
      %p288 = scmp.eq.s32.totalorder %s287, 0
      %s290 = sadd.s32 %s289, 1
      %s291 = scalar_select %p288, %s289, %s290
      %p294 = pneg %p288
      %p295 = scmp.eq.s32.totalorder %s31, 3
      %p296 = por %p294, %p295
      %p297 = scmp.ne.s32.totalorder %s289, %s292
      %p298 = scmp.eq.s32.totalorder %s31, 0
      %p299 = por %p297, %p298
      %p300 = scmp.ne.s32.totalorder %s289, %s292
      %p301 = scmp.eq.s32.totalorder %s36, 3
      %p302 = por %p300, %p301
      %p303 = scmp.ne.s32.totalorder %s292, %s293
      %p304 = scmp.eq.s32.totalorder %s36, 0
      %p305 = por %p303, %p304
      %p306 = scmp.ne.s32.totalorder %s292, %s293
      %p307 = scmp.eq.s32.totalorder %s37, 3
      %p308 = por %p306, %p307
      %p310 = scmp.ne.s32.totalorder %s293, %s309
      %p311 = scmp.eq.s32.totalorder %s37, 0
      %p312 = por %p310, %p311
      %p313 = scmp.le.s32.totalorder 1, %s31
      %p314 = scmp.lt.s32.totalorder %s31, 5
      %p315 = pnand %p313, %p314
      %p316 = pneg %p315
      // Predicated region
      $region9: #{tpu_custom_call.1} parent=5 // pred_check
        _
      $region10: #{tpu_custom_call.1} parent=5 // pred_check_branch
        %318 = sbr.rel (%p315) target = $region12
      $region11: #{tpu_custom_call.1} parent=5 // pred_region
        %s319 = ssub.s32 %s31, 1
        // Predicated region
        $region13: #{tpu_custom_call.1} parent=11 // pred_check
          %p320 = pneg %p172
        $region14: #{tpu_custom_call.1} parent=11 // pred_check_branch
          %322 = sbr.rel (%p320) target = $region16
        $region15: #{tpu_custom_call.1} parent=11 // pred_region
          %s324 = ssub.s32 512, 512
          %325 = vsyncadd [#allocation13], %s324
          %s326 = sshll.u32 [#allocation14], 4
          %s327 = int_to_ptr.vmem [resolvable:$true] %s326
          %332 = dma.hbm_to_vmem [thread:$0]  %s4, 512, %s327, [#allocation13], 128, 128, 8
        $region16: #{tpu_custom_call.1} parent=11 // pred_fallthru
          _
        // Predicated region
        $region17: #{tpu_custom_call.1} parent=11 // pred_check
          %p333 = pneg %p193
        $region18: #{tpu_custom_call.1} parent=11 // pred_check_branch
          %335 = sbr.rel (%p333) target = $region20
        $region19: #{tpu_custom_call.1} parent=11 // pred_region
          %s337 = ssub.s32 16, 16
          %338 = vsyncadd [#allocation16], %s337
          %s340 = sshll.u32 [#allocation15], 4
          %s341 = int_to_ptr.vmem [resolvable:$true] %s340
          %343 = dma.hbm_to_vmem [thread:$0]  %s5, 16, %s341, [#allocation16]
        $region20: #{tpu_custom_call.1} parent=11 // pred_fallthru
          _
        // Predicated region
        $region21: #{tpu_custom_call.1} parent=11 // pred_check
          %p344 = pneg %p214
        $region22: #{tpu_custom_call.1} parent=11 // pred_check_branch
          %346 = sbr.rel (%p344) target = $region24
        $region23: #{tpu_custom_call.1} parent=11 // pred_region
          %s348 = ssub.s32 512, 512
          %349 = vsyncadd [#allocation16], %s348
          %s350 = sshll.u32 [#allocation17], 4
          %s351 = int_to_ptr.vmem [resolvable:$true] %s350
          %356 = dma.hbm_to_vmem [thread:$0]  %s6, 512, %s351, [#allocation16], 128, 128, 8
        $region24: #{tpu_custom_call.1} parent=11 // pred_fallthru
          _
        // Predicated region
        $region25: #{tpu_custom_call.1} parent=11 // pred_check
          %p357 = pneg %p235
        $region26: #{tpu_custom_call.1} parent=11 // pred_check_branch
          %359 = sbr.rel (%p357) target = $region28
        $region27: #{tpu_custom_call.1} parent=11 // pred_region
          %s361 = ssub.s32 16, 16
          %362 = vsyncadd [#allocation19], %s361
          %s364 = sshll.u32 [#allocation18], 4
          %s365 = int_to_ptr.vmem [resolvable:$true] %s364
          %367 = dma.hbm_to_vmem [thread:$0]  %s7, 16, %s365, [#allocation19]
        $region28: #{tpu_custom_call.1} parent=11 // pred_fallthru
          _
        // Predicated region
        $region29: #{tpu_custom_call.1} parent=11 // pred_check
          %p368 = pneg %p256
        $region30: #{tpu_custom_call.1} parent=11 // pred_check_branch
          %370 = sbr.rel (%p368) target = $region32
        $region31: #{tpu_custom_call.1} parent=11 // pred_region
          %s372 = ssub.s32 512, 512
          %373 = vsyncadd [#allocation19], %s372
          %s374 = sshll.u32 [#allocation20], 4
          %s375 = int_to_ptr.vmem [resolvable:$true] %s374
          %380 = dma.hbm_to_vmem [thread:$0]  %s8, 512, %s375, [#allocation19], 128, 128, 8
        $region32: #{tpu_custom_call.1} parent=11 // pred_fallthru
          _
        // Predicated region
        $region33: #{tpu_custom_call.1} parent=11 // pred_check
          %p381 = pneg %p277
        $region34: #{tpu_custom_call.1} parent=11 // pred_check_branch
          %383 = sbr.rel (%p381) target = $region36
        $region35: #{tpu_custom_call.1} parent=11 // pred_region
          %s385 = ssub.s32 16, 16
          %386 = vsyncadd [#allocation22], %s385
          %s388 = sshll.u32 [#allocation21], 4
          %s389 = int_to_ptr.vmem [resolvable:$true] %s388
          %391 = dma.hbm_to_vmem [thread:$0]  %s9, 16, %s389, [#allocation22]
        $region36: #{tpu_custom_call.1} parent=11 // pred_fallthru
          _
      $region12: #{tpu_custom_call.1} parent=5 // pred_fallthru
        _
      %p392 = scmp.lt.s32.totalorder %s31, 4
      // Predicated region
      $region37: #{tpu_custom_call.1} parent=5 // pred_check
        %p393 = pneg %p392
      $region38: #{tpu_custom_call.1} parent=5 // pred_check_branch
        %395 = sbr.rel (%p393) target = $region40
      $region39: #{tpu_custom_call.1} parent=5 // pred_region
        // Predicated region
        $region41: #{tpu_custom_call.1} parent=39 // pred_check
          %p396 = pneg %p65
        $region42: #{tpu_custom_call.1} parent=39 // pred_check_branch
          %398 = sbr.rel (%p396) target = $region44
        $region43: #{tpu_custom_call.1} parent=39 // pred_region
          %s399 = sand.u32 %s55, 1
          %s400 = scalar_lea.sflag [#allocation7], %s399
          %s401 = sand.u32 %s55, 1
          %s402 = smul.addr %s401, 32
          %s403 = scalar_lea.vmem [#allocation6], %s402
          %s404 = smul.u32 4, %s39
          %s406 = ssub.s32 512, 512
          %407 = vsyncadd %s400, %s406
          %s408 = smul.addr %s38, 8
          %s409 = sadd.s32 %s404, %s408
          %s410 = smul.addr %s409, 128
          %s411 = scalar_lea.hbm %s0, %s410
          %s412 = sshll.u32 %s403, 4
          %s413 = int_to_ptr.vmem [resolvable:$true] %s412
          %418 = dma.hbm_to_vmem [thread:$0]  %s411, 512, %s413, %s400, 128, 128, 8
        $region44: #{tpu_custom_call.1} parent=39 // pred_fallthru
          _
        // Predicated region
        $region45: #{tpu_custom_call.1} parent=39 // pred_check
          %p419 = pneg %p91
        $region46: #{tpu_custom_call.1} parent=39 // pred_check_branch
          %421 = sbr.rel (%p419) target = $region48
        $region47: #{tpu_custom_call.1} parent=39 // pred_region
          %s422 = sand.u32 %s31, 1
          %s423 = scalar_lea.sflag [#allocation10], %s422
          %s424 = sand.u32 %s81, 1
          %s425 = smul.addr %s424, 64
          %s426 = scalar_lea.vmem [#allocation9], %s425
          %s428 = ssub.s32 1024, 1024
          %429 = vsyncadd %s423, %s428
          %s430 = smul.addr %s38, 8
          %s431 = smul.addr %s430, 128
          %s432 = scalar_lea.hbm %s1, %s431
          %s433 = sshll.u32 %s426, 4
          %s434 = int_to_ptr.vmem [resolvable:$true] %s433
          %439 = dma.hbm_to_vmem [thread:$0]  %s432, 1024, %s434, %s423, 128, 128, 8
        $region48: #{tpu_custom_call.1} parent=39 // pred_fallthru
          _
        // Predicated region
        $region49: #{tpu_custom_call.1} parent=39 // pred_check
          %p440 = pneg %p117
        $region50: #{tpu_custom_call.1} parent=39 // pred_check_branch
          %442 = sbr.rel (%p440) target = $region52
        $region51: #{tpu_custom_call.1} parent=39 // pred_region
          %s443 = sand.u32 %s31, 1
          %s444 = scalar_lea.sflag [#allocation10], %s443
          %s445 = sand.u32 %s107, 1
          %s446 = smul.addr %s445, 64
          %s447 = scalar_lea.vmem [#allocation11], %s446
          %s449 = ssub.s32 1024, 1024
          %450 = vsyncadd %s444, %s449
          %s451 = smul.addr %s38, 8
          %s452 = smul.addr %s451, 128
          %s453 = scalar_lea.hbm %s2, %s452
          %s454 = sshll.u32 %s447, 4
          %s455 = int_to_ptr.vmem [resolvable:$true] %s454
          %460 = dma.hbm_to_vmem [thread:$0]  %s453, 1024, %s455, %s444, 128, 128, 8
        $region52: #{tpu_custom_call.1} parent=39 // pred_fallthru
          _
        // Predicated region
        $region53: #{tpu_custom_call.1} parent=39 // pred_check
          %p461 = pneg %p145
        $region54: #{tpu_custom_call.1} parent=39 // pred_check_branch
          %463 = sbr.rel (%p461) target = $region56
        $region55: #{tpu_custom_call.1} parent=39 // pred_region
          %s464 = sand.u32 %s31, 1
          %s465 = scalar_lea.sflag [#allocation13], %s464
          %s466 = sand.u32 %s135, 1
          %s467 = smul.addr %s466, 8
          %s468 = scalar_lea.vmem [#allocation12], %s467
          %s470 = ssub.s32 128, 128
          %471 = vsyncadd %s465, %s470
          %s472 = smul.addr %s38, 2
          %s473 = sadd.s32 %s39, %s472
          %s474 = smul.addr %s473, 128
          %s475 = scalar_lea.hbm %s3, %s474
          %s477 = sshll.u32 %s468, 4
          %s478 = int_to_ptr.vmem [resolvable:$true] %s477
          %480 = dma.hbm_to_vmem [thread:$0]  %s475, 128, %s478, %s465
        $region56: #{tpu_custom_call.1} parent=39 // pred_fallthru
          _
      $region40: #{tpu_custom_call.1} parent=5 // pred_fallthru
        _
      %p481 = scmp.le.s32.totalorder 1, %s31
      %p482 = scmp.lt.s32.totalorder %s31, 5
      %p483 = pnand %p481, %p482
      %p484 = pneg %p483
      // Predicated region
      $region57: #{tpu_custom_call.1} parent=5 // pred_check
        _
      $region58: #{tpu_custom_call.1} parent=5 // pred_check_branch
        %486 = sbr.rel (%p483) target = $region60
      $region59: #{tpu_custom_call.1} parent=5 // pred_region
        %s487 = ssub.s32 %s31, 1
        %s488 = sand.u32 %s58, 1
        %s489 = scalar_lea.sflag [#allocation7], %s488
        %s490 = sand.u32 %s58, 1
        %s491 = smul.addr %s490, 32
        %s492 = scalar_lea.vmem [#allocation6], %s491
        // Predicated region
        $region61: #{tpu_custom_call.1} parent=59 // pred_check
          %p493 = pneg %p71
        $region62: #{tpu_custom_call.1} parent=59 // pred_check_branch
          %495 = sbr.rel (%p493) target = $region64
        $region63: #{tpu_custom_call.1} parent=59 // pred_region
          %496 = dma.done %s489, 512
        $region64: #{tpu_custom_call.1} parent=59 // pred_fallthru
          _
        %s497 = sand.u32 %s36, 1
        %s498 = scalar_lea.sflag [#allocation10], %s497
        %s499 = sand.u32 %s84, 1
        %s500 = smul.addr %s499, 64
        %s501 = scalar_lea.vmem [#allocation9], %s500
        // Predicated region
        $region65: #{tpu_custom_call.1} parent=59 // pred_check
          %p502 = pneg %p97
        $region66: #{tpu_custom_call.1} parent=59 // pred_check_branch
          %504 = sbr.rel (%p502) target = $region68
        $region67: #{tpu_custom_call.1} parent=59 // pred_region
          %505 = dma.done %s498, 1024
        $region68: #{tpu_custom_call.1} parent=59 // pred_fallthru
          _
        %s506 = sand.u32 %s36, 1
        %s507 = scalar_lea.sflag [#allocation10], %s506
        %s508 = sand.u32 %s110, 1
        %s509 = smul.addr %s508, 64
        %s510 = scalar_lea.vmem [#allocation11], %s509
        // Predicated region
        $region69: #{tpu_custom_call.1} parent=59 // pred_check
          %p511 = pneg %p123
        $region70: #{tpu_custom_call.1} parent=59 // pred_check_branch
          %513 = sbr.rel (%p511) target = $region72
        $region71: #{tpu_custom_call.1} parent=59 // pred_region
          %514 = dma.done %s507, 1024
        $region72: #{tpu_custom_call.1} parent=59 // pred_fallthru
          _
        %s515 = sand.u32 %s36, 1
        %s516 = scalar_lea.sflag [#allocation13], %s515
        %s517 = sand.u32 %s138, 1
        %s518 = smul.addr %s517, 8
        %s519 = scalar_lea.vmem [#allocation12], %s518
        // Predicated region
        $region73: #{tpu_custom_call.1} parent=59 // pred_check
          %p520 = pneg %p151
        $region74: #{tpu_custom_call.1} parent=59 // pred_check_branch
          %522 = sbr.rel (%p520) target = $region76
        $region75: #{tpu_custom_call.1} parent=59 // pred_region
          %523 = dma.done %s516, 128
        $region76: #{tpu_custom_call.1} parent=59 // pred_fallthru
          _
        // Predicated region
        $region77: #{tpu_custom_call.1} parent=59 // pred_check
          %p524 = pneg %p172
        $region78: #{tpu_custom_call.1} parent=59 // pred_check_branch
          %526 = sbr.rel (%p524) target = $region80
        $region79: #{tpu_custom_call.1} parent=59 // pred_region
          %527 = dma.done [#allocation13], 512
        $region80: #{tpu_custom_call.1} parent=59 // pred_fallthru
          _
        // Predicated region
        $region81: #{tpu_custom_call.1} parent=59 // pred_check
          %p528 = pneg %p193
        $region82: #{tpu_custom_call.1} parent=59 // pred_check_branch
          %530 = sbr.rel (%p528) target = $region84
        $region83: #{tpu_custom_call.1} parent=59 // pred_region
          %531 = dma.done [#allocation16], 16
        $region84: #{tpu_custom_call.1} parent=59 // pred_fallthru
          _
        // Predicated region
        $region85: #{tpu_custom_call.1} parent=59 // pred_check
          %p532 = pneg %p214
        $region86: #{tpu_custom_call.1} parent=59 // pred_check_branch
          %534 = sbr.rel (%p532) target = $region88
        $region87: #{tpu_custom_call.1} parent=59 // pred_region
          %535 = dma.done [#allocation16], 512
        $region88: #{tpu_custom_call.1} parent=59 // pred_fallthru
          _
        // Predicated region
        $region89: #{tpu_custom_call.1} parent=59 // pred_check
          %p536 = pneg %p235
        $region90: #{tpu_custom_call.1} parent=59 // pred_check_branch
          %538 = sbr.rel (%p536) target = $region92
        $region91: #{tpu_custom_call.1} parent=59 // pred_region
          %539 = dma.done [#allocation19], 16
        $region92: #{tpu_custom_call.1} parent=59 // pred_fallthru
          _
        // Predicated region
        $region93: #{tpu_custom_call.1} parent=59 // pred_check
          %p540 = pneg %p256
        $region94: #{tpu_custom_call.1} parent=59 // pred_check_branch
          %542 = sbr.rel (%p540) target = $region96
        $region95: #{tpu_custom_call.1} parent=59 // pred_region
          %543 = dma.done [#allocation19], 512
        $region96: #{tpu_custom_call.1} parent=59 // pred_fallthru
          _
        // Predicated region
        $region97: #{tpu_custom_call.1} parent=59 // pred_check
          %p544 = pneg %p277
        $region98: #{tpu_custom_call.1} parent=59 // pred_check_branch
          %546 = sbr.rel (%p544) target = $region100
        $region99: #{tpu_custom_call.1} parent=59 // pred_region
          %547 = dma.done [#allocation22], 16
        $region100: #{tpu_custom_call.1} parent=59 // pred_fallthru
          _
        %s548 = sand.u32 %s58, 1
        %s549 = scalar_lea.sflag [#allocation7], %s548
        %s550 = sand.u32 %s58, 1
        %s551 = smul.addr %s550, 32
        %s552 = scalar_lea.vmem [#allocation6], %s551
        %p553 = pneg %p71
        %p554 = pneg %p68
        %s555 = sand.u32 %s36, 1
        %s556 = scalar_lea.sflag [#allocation10], %s555
        %s557 = sand.u32 %s84, 1
        %s558 = smul.addr %s557, 64
        %s559 = scalar_lea.vmem [#allocation9], %s558
        %p560 = pneg %p97
        %p561 = pneg %p94
        %s562 = sand.u32 %s36, 1
        %s563 = scalar_lea.sflag [#allocation10], %s562
        %s564 = sand.u32 %s110, 1
        %s565 = smul.addr %s564, 64
        %s566 = scalar_lea.vmem [#allocation11], %s565
        %p567 = pneg %p123
        %p568 = pneg %p120
        %s569 = sand.u32 %s36, 1
        %s570 = scalar_lea.sflag [#allocation13], %s569
        %s571 = sand.u32 %s138, 1
        %s572 = smul.addr %s571, 8
        %s573 = scalar_lea.vmem [#allocation12], %s572
        %p574 = pneg %p151
        %p575 = pneg %p148
        %p576 = pneg %p172
        %p577 = pneg %p169
        %p578 = pneg %p193
        %p579 = pneg %p190
        %p580 = pneg %p214
        %p581 = pneg %p211
        %p582 = pneg %p235
        %p583 = pneg %p232
        %p584 = pneg %p256
        %p585 = pneg %p253
        %p586 = pneg %p277
        %p587 = pneg %p274
        %p588 = pneg %p305
        %p589 = pneg %p302
        %s590 = sand.u32 %s292, 1
        %s591 = scalar_lea.sflag [#allocation8], %s590
        %s592 = sand.u32 %s292, 1
        %s593 = smul.addr %s592, 32
        %s594 = scalar_lea.vmem [#allocation23], %s593
        %s595 = smul.u32 4, %s41
        %s596 = smul.u32 4, %s41
        %p597 = scmp.eq.s32.totalorder %s41, 0
        // Predicated region
        $region101: #{tpu_custom_call.1} parent=59 // pred_check
          %p598 = pneg %p597
        $region102: #{tpu_custom_call.1} parent=59 // pred_check_branch
          %600 = sbr.rel (%p598) target = $region104
        $region103: #{tpu_custom_call.1} parent=59 // pred_region
          %v601 = vld [vmem:[%s501] sm:$0xff]
          %v602 = vld [vmem:[%s501 + $0x8] sm:$0xff]
          %v603 = vld [vmem:[%s501 + $0x10] sm:$0xff]
          %v604 = vld [vmem:[%s501 + $0x18] sm:$0xff]
          %v605 = vld [vmem:[%s501 + $0x20] sm:$0xff]
          %v606 = vld [vmem:[%s501 + $0x28] sm:$0xff]
          %v607 = vld [vmem:[%s501 + $0x30] sm:$0xff]
          %v608 = vld [vmem:[%s501 + $0x38] sm:$0xff]
          %v609 = vld [vmem:[#allocation17] sm:$0xff]
          %v610 = vld [vmem:[#allocation17 + $0x8] sm:$0xff]
          %v611 = vld [vmem:[#allocation17 + $0x10] sm:$0xff]
          %v612 = vld [vmem:[#allocation17 + $0x18] sm:$0xff]
          %v613 = vld [vmem:[#allocation18] sm:$0x1]
          %v615 = vlaneseq
          %v616 = vshrl.u32 %v615, 7
          %v617 = vsub.s32 0, %v616
          %v618 = vrot.slane %v613, %v617
          %vm620 = vcmask 261120
          %v622 = vsel %vm620, %v601, 0
          %v625 = vsel %vm620, %v602, 0
          %v628 = vsel %vm620, %v603, 0
          %v631 = vsel %vm620, %v604, 0
          %v634 = vsel %vm620, %v605, 0
          %v637 = vsel %vm620, %v606, 0
          %v640 = vsel %vm620, %v607, 0
          %v643 = vsel %vm620, %v608, 0
          %645 = vmatprep.subr.mxu0 0.0
          %646 = vmatpush1.msra.mxu0 %v609
          %647 = vmatprep.subr.mxu0 0.0
          %648 = vmatpush1.msra.mxu0 %v610
          %649 = vmatprep.subr.mxu0 0.0
          %650 = vmatpush1.msra.mxu0 %v611
          %651 = vmatprep.subr.mxu0 0.0
          %652 = vmatpush1.msra.mxu0 %v612
          %653 = vmatprep.subr.mxu0 0.0
          %654 = vmatpush1.msra.mxu0 0.0
          %655 = vmatprep.subr.mxu0 0.0
          %656 = vmatpush1.msra.mxu0 0.0
          %657 = vmatprep.subr.mxu0 0.0
          %658 = vmatpush1.msra.mxu0 0.0
          %659 = vmatprep.subr.mxu0 0.0
          %660 = vmatpush1.msra.mxu0 0.0
          %661 = vmatprep.subr.mxu0 0.0
          %662 = vmatpush1.msra.mxu0 0.0
          %663 = vmatprep.subr.mxu0 0.0
          %664 = vmatpush1.msra.mxu0 0.0
          %665 = vmatprep.subr.mxu0 0.0
          %666 = vmatpush1.msra.mxu0 0.0
          %667 = vmatprep.subr.mxu0 0.0
          %668 = vmatpush1.msra.mxu0 0.0
          %669 = vmatprep.subr.mxu0 0.0
          %670 = vmatpush1.msra.mxu0 0.0
          %671 = vmatprep.subr.mxu0 0.0
          %672 = vmatpush1.msra.mxu0 0.0
          %673 = vmatprep.subr.mxu0 0.0
          %674 = vmatpush1.msra.mxu0 0.0
          %675 = vmatprep.subr.mxu0 0.0
          %676 = vmatpush1.msra.mxu0 0.0
          %677 = vmatprep.subr.mxu0 0.0
          %678 = vmatpush1.msra.mxu0 0.0
          %679 = vmatprep.subr.mxu0 0.0
          %680 = vmatpush1.msra.mxu0 0.0
          %681 = vmatprep.subr.mxu0 0.0
          %682 = vmatpush1.msra.mxu0 0.0
          %683 = vmatprep.subr.mxu0 0.0
          %684 = vmatpush1.msra.mxu0 0.0
          %685 = vmatprep.subr.mxu0 0.0
          %686 = vmatpush1.msra.mxu0 0.0
          %687 = vmatprep.subr.mxu0 0.0
          %688 = vmatpush1.msra.mxu0 0.0
          %689 = vmatprep.subr.mxu0 0.0
          %690 = vmatpush1.msra.mxu0 0.0
          %691 = vmatprep.subr.mxu0 0.0
          %692 = vmatpush1.msra.mxu0 0.0
          %693 = vmatprep.subr.mxu0 0.0
          %694 = vmatpush1.msra.mxu0 0.0
          %695 = vmatprep.subr.mxu0 0.0
          %696 = vmatpush1.msra.mxu0 0.0
          %697 = vmatprep.subr.mxu0 0.0
          %698 = vmatpush1.msra.mxu0 0.0
          %699 = vmatprep.subr.mxu0 0.0
          %700 = vmatpush1.msra.mxu0 0.0
          %701 = vmatprep.subr.mxu0 0.0
          %702 = vmatpush1.msra.mxu0 0.0
          %703 = vmatprep.subr.mxu0 0.0
          %704 = vmatpush1.msra.mxu0 0.0
          %705 = vmatprep.subr.mxu0 0.0
          %706 = vmatpush1.msra.mxu0 0.0
          %707 = vmatprep.subr.mxu0 0.0
          %708 = vmatpush1.msra.mxu0 0.0
          %709 = vmatprep.mubr.f32.mxu0 0.0
          %710 = vmatmul.mubr.f32.gmra.mrb[0].mxu0 %v622
          %v711 = vpop.f32.mrb[0].mxu0
          %v712 = vadd.f32 %v618, %v711
          %v713 = vpop.f32.mrb[0].mxu0
          %714 = vmatprep.mubr.f32.mxu0 0.0
          %715 = vmatmul.mubr.f32.gmra.mrb[0].mxu0 %v625
          %v716 = vpop.f32.mrb[0].mxu0
          %v717 = vadd.f32 %v618, %v716
          %v718 = vpop.f32.mrb[0].mxu0
          %719 = vmatprep.mubr.f32.mxu0 0.0
          %720 = vmatmul.mubr.f32.gmra.mrb[0].mxu0 %v628
          %v721 = vpop.f32.mrb[0].mxu0
          %v722 = vadd.f32 %v618, %v721
          %v723 = vpop.f32.mrb[0].mxu0
          %724 = vmatprep.mubr.f32.mxu0 0.0
          %725 = vmatmul.mubr.f32.gmra.mrb[0].mxu0 %v631
          %v726 = vpop.f32.mrb[0].mxu0
          %v727 = vadd.f32 %v618, %v726
          %v728 = vpop.f32.mrb[0].mxu0
          %729 = vmatprep.mubr.f32.mxu0 0.0
          %730 = vmatmul.mubr.f32.gmra.mrb[0].mxu0 %v634
          %v731 = vpop.f32.mrb[0].mxu0
          %v732 = vadd.f32 %v618, %v731
          %v733 = vpop.f32.mrb[0].mxu0
          %734 = vmatprep.mubr.f32.mxu0 0.0
          %735 = vmatmul.mubr.f32.gmra.mrb[0].mxu0 %v637
          %v736 = vpop.f32.mrb[0].mxu0
          %v737 = vadd.f32 %v618, %v736
          %v738 = vpop.f32.mrb[0].mxu0
          %739 = vmatprep.mubr.f32.mxu0 0.0
          %740 = vmatmul.mubr.f32.gmra.mrb[0].mxu0 %v640
          %v741 = vpop.f32.mrb[0].mxu0
          %v742 = vadd.f32 %v618, %v741
          %v743 = vpop.f32.mrb[0].mxu0
          %744 = vmatprep.mubr.f32.mxu0 0.0
          %745 = vmatmul.mubr.f32.gmra.mrb[0].mxu0 %v643
          %v746 = vpop.f32.mrb[0].mxu0
          %v747 = vadd.f32 %v618, %v746
          %v748 = vpop.f32.mrb[0].mxu0
          %749 = vdwg.mxu0
          %v750 = vld [vmem:[%s510] sm:$0xff]
          %v751 = vld [vmem:[%s510 + $0x8] sm:$0xff]
          %v752 = vld [vmem:[%s510 + $0x10] sm:$0xff]
          %v753 = vld [vmem:[%s510 + $0x18] sm:$0xff]
          %v754 = vld [vmem:[%s510 + $0x20] sm:$0xff]
          %v755 = vld [vmem:[%s510 + $0x28] sm:$0xff]
          %v756 = vld [vmem:[%s510 + $0x30] sm:$0xff]
          %v757 = vld [vmem:[%s510 + $0x38] sm:$0xff]
          %762 = vrot.lane.b32.xlu0 %v609, 96
          %v763 = vpop.permute.xlu0 %762
          %764 = vrot.lane.b32.xlu0 %v610, 96
          %v765 = vpop.permute.xlu0 %764
          %766 = vrot.lane.b32.xlu0 %v611, 96
          %v767 = vpop.permute.xlu0 %766
          %768 = vrot.lane.b32.xlu0 %v612, 96
          %v769 = vpop.permute.xlu0 %768
          %774 = vrot.lane.b32.xlu0 %v618, 96
          %v775 = vpop.permute.xlu0 %774
          %v778 = vsel %vm620, %v750, 0
          %v781 = vsel %vm620, %v751, 0
          %v784 = vsel %vm620, %v752, 0
          %v787 = vsel %vm620, %v753, 0
          %v790 = vsel %vm620, %v754, 0
          %v793 = vsel %vm620, %v755, 0
          %v796 = vsel %vm620, %v756, 0
          %v799 = vsel %vm620, %v757, 0
          %801 = vmatprep.subr.mxu0 0.0
          %802 = vmatpush1.msra.mxu0 %v763
          %803 = vmatprep.subr.mxu0 0.0
          %804 = vmatpush1.msra.mxu0 %v765
          %805 = vmatprep.subr.mxu0 0.0
          %806 = vmatpush1.msra.mxu0 %v767
          %807 = vmatprep.subr.mxu0 0.0
          %808 = vmatpush1.msra.mxu0 %v769
          %809 = vmatprep.subr.mxu0 0.0
          %810 = vmatpush1.msra.mxu0 0.0
          %811 = vmatprep.subr.mxu0 0.0
          %812 = vmatpush1.msra.mxu0 0.0
          %813 = vmatprep.subr.mxu0 0.0
          %814 = vmatpush1.msra.mxu0 0.0
          %815 = vmatprep.subr.mxu0 0.0
          %816 = vmatpush1.msra.mxu0 0.0
          %817 = vmatprep.subr.mxu0 0.0
          %818 = vmatpush1.msra.mxu0 0.0
          %819 = vmatprep.subr.mxu0 0.0
          %820 = vmatpush1.msra.mxu0 0.0
          %821 = vmatprep.subr.mxu0 0.0
          %822 = vmatpush1.msra.mxu0 0.0
          %823 = vmatprep.subr.mxu0 0.0
          %824 = vmatpush1.msra.mxu0 0.0
          %825 = vmatprep.subr.mxu0 0.0
          %826 = vmatpush1.msra.mxu0 0.0
          %827 = vmatprep.subr.mxu0 0.0
          %828 = vmatpush1.msra.mxu0 0.0
          %829 = vmatprep.subr.mxu0 0.0
          %830 = vmatpush1.msra.mxu0 0.0
          %831 = vmatprep.subr.mxu0 0.0
          %832 = vmatpush1.msra.mxu0 0.0
          %833 = vmatprep.subr.mxu0 0.0
          %834 = vmatpush1.msra.mxu0 0.0
          %835 = vmatprep.subr.mxu0 0.0
          %836 = vmatpush1.msra.mxu0 0.0
          %837 = vmatprep.subr.mxu0 0.0
          %838 = vmatpush1.msra.mxu0 0.0
          %839 = vmatprep.subr.mxu0 0.0
          %840 = vmatpush1.msra.mxu0 0.0
          %841 = vmatprep.subr.mxu0 0.0
          %842 = vmatpush1.msra.mxu0 0.0
          %843 = vmatprep.subr.mxu0 0.0
          %844 = vmatpush1.msra.mxu0 0.0
          %845 = vmatprep.subr.mxu0 0.0
          %846 = vmatpush1.msra.mxu0 0.0
          %847 = vmatprep.subr.mxu0 0.0
          %848 = vmatpush1.msra.mxu0 0.0
          %849 = vmatprep.subr.mxu0 0.0
          %850 = vmatpush1.msra.mxu0 0.0
          %851 = vmatprep.subr.mxu0 0.0
          %852 = vmatpush1.msra.mxu0 0.0
          %853 = vmatprep.subr.mxu0 0.0
          %854 = vmatpush1.msra.mxu0 0.0
          %855 = vmatprep.subr.mxu0 0.0
          %856 = vmatpush1.msra.mxu0 0.0
          %857 = vmatprep.subr.mxu0 0.0
          %858 = vmatpush1.msra.mxu0 0.0
          %859 = vmatprep.subr.mxu0 0.0
          %860 = vmatpush1.msra.mxu0 0.0
          %861 = vmatprep.subr.mxu0 0.0
          %862 = vmatpush1.msra.mxu0 0.0
          %863 = vmatprep.subr.mxu0 0.0
          %864 = vmatpush1.msra.mxu0 0.0
          %865 = vmatprep.mubr.f32.mxu0 0.0
          %866 = vmatmul.mubr.f32.gmra.mrb[0].mxu0 %v778
          %v867 = vpop.f32.mrb[0].mxu0
          %v868 = vadd.f32 %v775, %v867
          %v869 = vpop.f32.mrb[0].mxu0
          %870 = vmatprep.mubr.f32.mxu0 0.0
          %871 = vmatmul.mubr.f32.gmra.mrb[0].mxu0 %v781
          %v872 = vpop.f32.mrb[0].mxu0
          %v873 = vadd.f32 %v775, %v872
          %v874 = vpop.f32.mrb[0].mxu0
          %875 = vmatprep.mubr.f32.mxu0 0.0
          %876 = vmatmul.mubr.f32.gmra.mrb[0].mxu0 %v784
          %v877 = vpop.f32.mrb[0].mxu0
          %v878 = vadd.f32 %v775, %v877
          %v879 = vpop.f32.mrb[0].mxu0
          %880 = vmatprep.mubr.f32.mxu0 0.0
          %881 = vmatmul.mubr.f32.gmra.mrb[0].mxu0 %v787
          %v882 = vpop.f32.mrb[0].mxu0
          %v883 = vadd.f32 %v775, %v882
          %v884 = vpop.f32.mrb[0].mxu0
          %885 = vmatprep.mubr.f32.mxu0 0.0
          %886 = vmatmul.mubr.f32.gmra.mrb[0].mxu0 %v790
          %v887 = vpop.f32.mrb[0].mxu0
          %v888 = vadd.f32 %v775, %v887
          %v889 = vpop.f32.mrb[0].mxu0
          %890 = vmatprep.mubr.f32.mxu0 0.0
          %891 = vmatmul.mubr.f32.gmra.mrb[0].mxu0 %v793
          %v892 = vpop.f32.mrb[0].mxu0
          %v893 = vadd.f32 %v775, %v892
          %v894 = vpop.f32.mrb[0].mxu0
          %895 = vmatprep.mubr.f32.mxu0 0.0
          %896 = vmatmul.mubr.f32.gmra.mrb[0].mxu0 %v796
          %v897 = vpop.f32.mrb[0].mxu0
          %v898 = vadd.f32 %v775, %v897
          %v899 = vpop.f32.mrb[0].mxu0
          %900 = vmatprep.mubr.f32.mxu0 0.0
          %901 = vmatmul.mubr.f32.gmra.mrb[0].mxu0 %v799
          %v902 = vpop.f32.mrb[0].mxu0
          %v903 = vadd.f32 %v775, %v902
          %v904 = vpop.f32.mrb[0].mxu0
          %905 = vdwg.mxu0
          %vm906 = vcmask 64512
          %907 = vst.msk [vmem:[#allocation2] sm:$0xff] %vm906, %v712
          %908 = vst.msk [vmem:[#allocation2 + $0x8] sm:$0xff] %vm906, %v717
          %909 = vst.msk [vmem:[#allocation2 + $0x10] sm:$0xff] %vm906, %v722
          %910 = vst.msk [vmem:[#allocation2 + $0x18] sm:$0xff] %vm906, %v727
          %911 = vst.msk [vmem:[#allocation2 + $0x20] sm:$0xff] %vm906, %v732
          %912 = vst.msk [vmem:[#allocation2 + $0x28] sm:$0xff] %vm906, %v737
          %913 = vst.msk [vmem:[#allocation2 + $0x30] sm:$0xff] %vm906, %v742
          %914 = vst.msk [vmem:[#allocation2 + $0x38] sm:$0xff] %vm906, %v747
          %915 = vst.msk [vmem:[#allocation3] sm:$0xff] %vm906, %v868
          %916 = vst.msk [vmem:[#allocation3 + $0x8] sm:$0xff] %vm906, %v873
          %917 = vst.msk [vmem:[#allocation3 + $0x10] sm:$0xff] %vm906, %v878
          %918 = vst.msk [vmem:[#allocation3 + $0x18] sm:$0xff] %vm906, %v883
          %919 = vst.msk [vmem:[#allocation3 + $0x20] sm:$0xff] %vm906, %v888
          %920 = vst.msk [vmem:[#allocation3 + $0x28] sm:$0xff] %vm906, %v893
          %921 = vst.msk [vmem:[#allocation3 + $0x30] sm:$0xff] %vm906, %v898
          %922 = vst.msk [vmem:[#allocation3 + $0x38] sm:$0xff] %vm906, %v903
          %931 = vrot.lane.b32.xlu0 %v712, 120
          %v932 = vpop.permute.xlu0 %931
          %933 = vrot.lane.b32.xlu0 %v717, 120
          %v934 = vpop.permute.xlu0 %933
          %935 = vrot.lane.b32.xlu0 %v722, 120
          %v936 = vpop.permute.xlu0 %935
          %937 = vrot.lane.b32.xlu0 %v727, 120
          %v938 = vpop.permute.xlu0 %937
          %939 = vrot.lane.b32.xlu0 %v732, 120
          %v940 = vpop.permute.xlu0 %939
          %941 = vrot.lane.b32.xlu0 %v737, 120
          %v942 = vpop.permute.xlu0 %941
          %943 = vrot.lane.b32.xlu0 %v742, 120
          %v944 = vpop.permute.xlu0 %943
          %945 = vrot.lane.b32.xlu0 %v747, 120
          %v946 = vpop.permute.xlu0 %945
          %s955 = scalar_lea.vmem [#allocation2], 64
          %956 = vst.msk [vmem:[%s955] sm:$0xff] %vm906, %v932
          %957 = vst.msk [vmem:[%s955 + $0x8] sm:$0xff] %vm906, %v934
          %958 = vst.msk [vmem:[%s955 + $0x10] sm:$0xff] %vm906, %v936
          %959 = vst.msk [vmem:[%s955 + $0x18] sm:$0xff] %vm906, %v938
          %960 = vst.msk [vmem:[%s955 + $0x20] sm:$0xff] %vm906, %v940
          %961 = vst.msk [vmem:[%s955 + $0x28] sm:$0xff] %vm906, %v942
          %962 = vst.msk [vmem:[%s955 + $0x30] sm:$0xff] %vm906, %v944
          %963 = vst.msk [vmem:[%s955 + $0x38] sm:$0xff] %vm906, %v946
          %972 = vrot.lane.b32.xlu0 %v868, 120
          %v973 = vpop.permute.xlu0 %972
          %974 = vrot.lane.b32.xlu0 %v873, 120
          %v975 = vpop.permute.xlu0 %974
          %976 = vrot.lane.b32.xlu0 %v878, 120
          %v977 = vpop.permute.xlu0 %976
          %978 = vrot.lane.b32.xlu0 %v883, 120
          %v979 = vpop.permute.xlu0 %978
          %980 = vrot.lane.b32.xlu0 %v888, 120
          %v981 = vpop.permute.xlu0 %980
          %982 = vrot.lane.b32.xlu0 %v893, 120
          %v983 = vpop.permute.xlu0 %982
          %984 = vrot.lane.b32.xlu0 %v898, 120
          %v985 = vpop.permute.xlu0 %984
          %986 = vrot.lane.b32.xlu0 %v903, 120
          %v987 = vpop.permute.xlu0 %986
          %s996 = scalar_lea.vmem [#allocation3], 64
          %997 = vst.msk [vmem:[%s996] sm:$0xff] %vm906, %v973
          %998 = vst.msk [vmem:[%s996 + $0x8] sm:$0xff] %vm906, %v975
          %999 = vst.msk [vmem:[%s996 + $0x10] sm:$0xff] %vm906, %v977
          %1000 = vst.msk [vmem:[%s996 + $0x18] sm:$0xff] %vm906, %v979
          %1001 = vst.msk [vmem:[%s996 + $0x20] sm:$0xff] %vm906, %v981
          %1002 = vst.msk [vmem:[%s996 + $0x28] sm:$0xff] %vm906, %v983
          %1003 = vst.msk [vmem:[%s996 + $0x30] sm:$0xff] %vm906, %v985
          %1004 = vst.msk [vmem:[%s996 + $0x38] sm:$0xff] %vm906, %v987
          %1005 = vrot.lane.b32.xlu0 %v712, 112
          %v1006 = vpop.permute.xlu0 %1005
          %1007 = vrot.lane.b32.xlu0 %v717, 112
          %v1008 = vpop.permute.xlu0 %1007
          %1009 = vrot.lane.b32.xlu0 %v722, 112
          %v1010 = vpop.permute.xlu0 %1009
          %1011 = vrot.lane.b32.xlu0 %v727, 112
          %v1012 = vpop.permute.xlu0 %1011
          %1013 = vrot.lane.b32.xlu0 %v732, 112
          %v1014 = vpop.permute.xlu0 %1013
          %1015 = vrot.lane.b32.xlu0 %v737, 112
          %v1016 = vpop.permute.xlu0 %1015
          %1017 = vrot.lane.b32.xlu0 %v742, 112
          %v1018 = vpop.permute.xlu0 %1017
          %1019 = vrot.lane.b32.xlu0 %v747, 112
          %v1020 = vpop.permute.xlu0 %1019
          %s1029 = scalar_lea.vmem [#allocation2], 128
          %1030 = vst.msk [vmem:[%s1029] sm:$0xff] %vm906, %v1006
          %1031 = vst.msk [vmem:[%s1029 + $0x8] sm:$0xff] %vm906, %v1008
          %1032 = vst.msk [vmem:[%s1029 + $0x10] sm:$0xff] %vm906, %v1010
          %1033 = vst.msk [vmem:[%s1029 + $0x18] sm:$0xff] %vm906, %v1012
          %1034 = vst.msk [vmem:[%s1029 + $0x20] sm:$0xff] %vm906, %v1014
          %1035 = vst.msk [vmem:[%s1029 + $0x28] sm:$0xff] %vm906, %v1016
          %1036 = vst.msk [vmem:[%s1029 + $0x30] sm:$0xff] %vm906, %v1018
          %1037 = vst.msk [vmem:[%s1029 + $0x38] sm:$0xff] %vm906, %v1020
          %1038 = vrot.lane.b32.xlu0 %v868, 112
          %v1039 = vpop.permute.xlu0 %1038
          %1040 = vrot.lane.b32.xlu0 %v873, 112
          %v1041 = vpop.permute.xlu0 %1040
          %1042 = vrot.lane.b32.xlu0 %v878, 112
          %v1043 = vpop.permute.xlu0 %1042
          %1044 = vrot.lane.b32.xlu0 %v883, 112
          %v1045 = vpop.permute.xlu0 %1044
          %1046 = vrot.lane.b32.xlu0 %v888, 112
          %v1047 = vpop.permute.xlu0 %1046
          %1048 = vrot.lane.b32.xlu0 %v893, 112
          %v1049 = vpop.permute.xlu0 %1048
          %1050 = vrot.lane.b32.xlu0 %v898, 112
          %v1051 = vpop.permute.xlu0 %1050
          %1052 = vrot.lane.b32.xlu0 %v903, 112
          %v1053 = vpop.permute.xlu0 %1052
          %s1062 = scalar_lea.vmem [#allocation3], 128
          %1063 = vst.msk [vmem:[%s1062] sm:$0xff] %vm906, %v1039
          %1064 = vst.msk [vmem:[%s1062 + $0x8] sm:$0xff] %vm906, %v1041
          %1065 = vst.msk [vmem:[%s1062 + $0x10] sm:$0xff] %vm906, %v1043
          %1066 = vst.msk [vmem:[%s1062 + $0x18] sm:$0xff] %vm906, %v1045
          %1067 = vst.msk [vmem:[%s1062 + $0x20] sm:$0xff] %vm906, %v1047
          %1068 = vst.msk [vmem:[%s1062 + $0x28] sm:$0xff] %vm906, %v1049
          %1069 = vst.msk [vmem:[%s1062 + $0x30] sm:$0xff] %vm906, %v1051
          %1070 = vst.msk [vmem:[%s1062 + $0x38] sm:$0xff] %vm906, %v1053
          %1071 = vrot.lane.b32.xlu0 %v712, 104
          %v1072 = vpop.permute.xlu0 %1071
          %1073 = vrot.lane.b32.xlu0 %v717, 104
          %v1074 = vpop.permute.xlu0 %1073
          %1075 = vrot.lane.b32.xlu0 %v722, 104
          %v1076 = vpop.permute.xlu0 %1075
          %1077 = vrot.lane.b32.xlu0 %v727, 104
          %v1078 = vpop.permute.xlu0 %1077
          %1079 = vrot.lane.b32.xlu0 %v732, 104
          %v1080 = vpop.permute.xlu0 %1079
          %1081 = vrot.lane.b32.xlu0 %v737, 104
          %v1082 = vpop.permute.xlu0 %1081
          %1083 = vrot.lane.b32.xlu0 %v742, 104
          %v1084 = vpop.permute.xlu0 %1083
          %1085 = vrot.lane.b32.xlu0 %v747, 104
          %v1086 = vpop.permute.xlu0 %1085
          %s1095 = scalar_lea.vmem [#allocation2], 192
          %1096 = vst.msk [vmem:[%s1095] sm:$0xff] %vm906, %v1072
          %1097 = vst.msk [vmem:[%s1095 + $0x8] sm:$0xff] %vm906, %v1074
          %1098 = vst.msk [vmem:[%s1095 + $0x10] sm:$0xff] %vm906, %v1076
          %1099 = vst.msk [vmem:[%s1095 + $0x18] sm:$0xff] %vm906, %v1078
          %1100 = vst.msk [vmem:[%s1095 + $0x20] sm:$0xff] %vm906, %v1080
          %1101 = vst.msk [vmem:[%s1095 + $0x28] sm:$0xff] %vm906, %v1082
          %1102 = vst.msk [vmem:[%s1095 + $0x30] sm:$0xff] %vm906, %v1084
          %1103 = vst.msk [vmem:[%s1095 + $0x38] sm:$0xff] %vm906, %v1086
          %1104 = vrot.lane.b32.xlu0 %v868, 104
          %v1105 = vpop.permute.xlu0 %1104
          %1106 = vrot.lane.b32.xlu0 %v873, 104
          %v1107 = vpop.permute.xlu0 %1106
          %1108 = vrot.lane.b32.xlu0 %v878, 104
          %v1109 = vpop.permute.xlu0 %1108
          %1110 = vrot.lane.b32.xlu0 %v883, 104
          %v1111 = vpop.permute.xlu0 %1110
          %1112 = vrot.lane.b32.xlu0 %v888, 104
          %v1113 = vpop.permute.xlu0 %1112
          %1114 = vrot.lane.b32.xlu0 %v893, 104
          %v1115 = vpop.permute.xlu0 %1114
          %1116 = vrot.lane.b32.xlu0 %v898, 104
          %v1117 = vpop.permute.xlu0 %1116
          %1118 = vrot.lane.b32.xlu0 %v903, 104
          %v1119 = vpop.permute.xlu0 %1118
          %s1128 = scalar_lea.vmem [#allocation3], 192
          %1129 = vst.msk [vmem:[%s1128] sm:$0xff] %vm906, %v1105
          %1130 = vst.msk [vmem:[%s1128 + $0x8] sm:$0xff] %vm906, %v1107
          %1131 = vst.msk [vmem:[%s1128 + $0x10] sm:$0xff] %vm906, %v1109
          %1132 = vst.msk [vmem:[%s1128 + $0x18] sm:$0xff] %vm906, %v1111
          %1133 = vst.msk [vmem:[%s1128 + $0x20] sm:$0xff] %vm906, %v1113
          %1134 = vst.msk [vmem:[%s1128 + $0x28] sm:$0xff] %vm906, %v1115
          %1135 = vst.msk [vmem:[%s1128 + $0x30] sm:$0xff] %vm906, %v1117
          %1136 = vst.msk [vmem:[%s1128 + $0x38] sm:$0xff] %vm906, %v1119
        $region104: #{tpu_custom_call.1} parent=59 // pred_fallthru
          _
        %v1137 = vld [vmem:[%s492] sm:$0xff]
        %v1138 = vld [vmem:[%s492 + $0x8] sm:$0xff]
        %v1139 = vld [vmem:[%s492 + $0x10] sm:$0xff]
        %v1140 = vld [vmem:[%s492 + $0x18] sm:$0xff]
        %v1141 = vld [vmem:[#allocation14] sm:$0xff]
        %v1142 = vld [vmem:[#allocation14 + $0x8] sm:$0xff]
        %v1143 = vld [vmem:[#allocation14 + $0x10] sm:$0xff]
        %v1144 = vld [vmem:[#allocation14 + $0x18] sm:$0xff]
        %v1145 = vld [vmem:[#allocation15] sm:$0x1]
        %v1147 = vlaneseq
        %v1148 = vshrl.u32 %v1147, 7
        %v1149 = vsub.s32 0, %v1148
        %v1150 = vrot.slane %v1145, %v1149
        %vm1152 = vcmask 261120
        %v1154 = vsel %vm1152, %v1137, 0
        %v1157 = vsel %vm1152, %v1138, 0
        %v1160 = vsel %vm1152, %v1139, 0
        %v1163 = vsel %vm1152, %v1140, 0
        %1165 = vmatprep.subr.mxu0 0.0
        %1166 = vmatpush1.msra.mxu0 %v1141
        %1167 = vmatprep.subr.mxu0 0.0
        %1168 = vmatpush1.msra.mxu0 %v1142
        %1169 = vmatprep.subr.mxu0 0.0
        %1170 = vmatpush1.msra.mxu0 %v1143
        %1171 = vmatprep.subr.mxu0 0.0
        %1172 = vmatpush1.msra.mxu0 %v1144
        %1173 = vmatprep.subr.mxu0 0.0
        %1174 = vmatpush1.msra.mxu0 0.0
        %1175 = vmatprep.subr.mxu0 0.0
        %1176 = vmatpush1.msra.mxu0 0.0
        %1177 = vmatprep.subr.mxu0 0.0
        %1178 = vmatpush1.msra.mxu0 0.0
        %1179 = vmatprep.subr.mxu0 0.0
        %1180 = vmatpush1.msra.mxu0 0.0
        %1181 = vmatprep.subr.mxu0 0.0
        %1182 = vmatpush1.msra.mxu0 0.0
        %1183 = vmatprep.subr.mxu0 0.0
        %1184 = vmatpush1.msra.mxu0 0.0
        %1185 = vmatprep.subr.mxu0 0.0
        %1186 = vmatpush1.msra.mxu0 0.0
        %1187 = vmatprep.subr.mxu0 0.0
        %1188 = vmatpush1.msra.mxu0 0.0
        %1189 = vmatprep.subr.mxu0 0.0
        %1190 = vmatpush1.msra.mxu0 0.0
        %1191 = vmatprep.subr.mxu0 0.0
        %1192 = vmatpush1.msra.mxu0 0.0
        %1193 = vmatprep.subr.mxu0 0.0
        %1194 = vmatpush1.msra.mxu0 0.0
        %1195 = vmatprep.subr.mxu0 0.0
        %1196 = vmatpush1.msra.mxu0 0.0
        %1197 = vmatprep.subr.mxu0 0.0
        %1198 = vmatpush1.msra.mxu0 0.0
        %1199 = vmatprep.subr.mxu0 0.0
        %1200 = vmatpush1.msra.mxu0 0.0
        %1201 = vmatprep.subr.mxu0 0.0
        %1202 = vmatpush1.msra.mxu0 0.0
        %1203 = vmatprep.subr.mxu0 0.0
        %1204 = vmatpush1.msra.mxu0 0.0
        %1205 = vmatprep.subr.mxu0 0.0
        %1206 = vmatpush1.msra.mxu0 0.0
        %1207 = vmatprep.subr.mxu0 0.0
        %1208 = vmatpush1.msra.mxu0 0.0
        %1209 = vmatprep.subr.mxu0 0.0
        %1210 = vmatpush1.msra.mxu0 0.0
        %1211 = vmatprep.subr.mxu0 0.0
        %1212 = vmatpush1.msra.mxu0 0.0
        %1213 = vmatprep.subr.mxu0 0.0
        %1214 = vmatpush1.msra.mxu0 0.0
        %1215 = vmatprep.subr.mxu0 0.0
        %1216 = vmatpush1.msra.mxu0 0.0
        %1217 = vmatprep.subr.mxu0 0.0
        %1218 = vmatpush1.msra.mxu0 0.0
        %1219 = vmatprep.subr.mxu0 0.0
        %1220 = vmatpush1.msra.mxu0 0.0
        %1221 = vmatprep.subr.mxu0 0.0
        %1222 = vmatpush1.msra.mxu0 0.0
        %1223 = vmatprep.subr.mxu0 0.0
        %1224 = vmatpush1.msra.mxu0 0.0
        %1225 = vmatprep.subr.mxu0 0.0
        %1226 = vmatpush1.msra.mxu0 0.0
        %1227 = vmatprep.subr.mxu0 0.0
        %1228 = vmatpush1.msra.mxu0 0.0
        %1229 = vmatprep.mubr.f32.mxu0 0.0
        %1230 = vmatmul.mubr.f32.gmra.mrb[0].mxu0 %v1154
        %v1231 = vpop.f32.mrb[0].mxu0
        %v1232 = vadd.f32 %v1150, %v1231
        %v1233 = vpop.f32.mrb[0].mxu0
        %1234 = vmatprep.mubr.f32.mxu0 0.0
        %1235 = vmatmul.mubr.f32.gmra.mrb[0].mxu0 %v1157
        %v1236 = vpop.f32.mrb[0].mxu0
        %v1237 = vadd.f32 %v1150, %v1236
        %v1238 = vpop.f32.mrb[0].mxu0
        %1239 = vmatprep.mubr.f32.mxu0 0.0
        %1240 = vmatmul.mubr.f32.gmra.mrb[0].mxu0 %v1160
        %v1241 = vpop.f32.mrb[0].mxu0
        %v1242 = vadd.f32 %v1150, %v1241
        %v1243 = vpop.f32.mrb[0].mxu0
        %1244 = vmatprep.mubr.f32.mxu0 0.0
        %1245 = vmatmul.mubr.f32.gmra.mrb[0].mxu0 %v1163
        %v1246 = vpop.f32.mrb[0].mxu0
        %v1247 = vadd.f32 %v1150, %v1246
        %v1248 = vpop.f32.mrb[0].mxu0
        %1249 = vdwg.mxu0
        %vm1250 = vcmask 64512
        %1251 = vst.msk [vmem:[#allocation4] sm:$0xff] %vm1250, %v1232
        %1252 = vst.msk [vmem:[#allocation4 + $0x8] sm:$0xff] %vm1250, %v1237
        %1253 = vst.msk [vmem:[#allocation4 + $0x10] sm:$0xff] %vm1250, %v1242
        %1254 = vst.msk [vmem:[#allocation4 + $0x18] sm:$0xff] %vm1250, %v1247
        %1259 = vrot.lane.b32.xlu0 %v1232, 120
        %v1260 = vpop.permute.xlu0 %1259
        %1261 = vrot.lane.b32.xlu0 %v1237, 120
        %v1262 = vpop.permute.xlu0 %1261
        %1263 = vrot.lane.b32.xlu0 %v1242, 120
        %v1264 = vpop.permute.xlu0 %1263
        %1265 = vrot.lane.b32.xlu0 %v1247, 120
        %v1266 = vpop.permute.xlu0 %1265
        %s1271 = scalar_lea.vmem [#allocation4], 32
        %1272 = vst.msk [vmem:[%s1271] sm:$0xff] %vm1250, %v1260
        %1273 = vst.msk [vmem:[%s1271 + $0x8] sm:$0xff] %vm1250, %v1262
        %1274 = vst.msk [vmem:[%s1271 + $0x10] sm:$0xff] %vm1250, %v1264
        %1275 = vst.msk [vmem:[%s1271 + $0x18] sm:$0xff] %vm1250, %v1266
        %1276 = vrot.lane.b32.xlu0 %v1232, 112
        %v1277 = vpop.permute.xlu0 %1276
        %1278 = vrot.lane.b32.xlu0 %v1237, 112
        %v1279 = vpop.permute.xlu0 %1278
        %1280 = vrot.lane.b32.xlu0 %v1242, 112
        %v1281 = vpop.permute.xlu0 %1280
        %1282 = vrot.lane.b32.xlu0 %v1247, 112
        %v1283 = vpop.permute.xlu0 %1282
        %s1288 = scalar_lea.vmem [#allocation4], 64
        %1289 = vst.msk [vmem:[%s1288] sm:$0xff] %vm1250, %v1277
        %1290 = vst.msk [vmem:[%s1288 + $0x8] sm:$0xff] %vm1250, %v1279
        %1291 = vst.msk [vmem:[%s1288 + $0x10] sm:$0xff] %vm1250, %v1281
        %1292 = vst.msk [vmem:[%s1288 + $0x18] sm:$0xff] %vm1250, %v1283
        %1293 = vrot.lane.b32.xlu0 %v1232, 104
        %v1294 = vpop.permute.xlu0 %1293
        %1295 = vrot.lane.b32.xlu0 %v1237, 104
        %v1296 = vpop.permute.xlu0 %1295
        %1297 = vrot.lane.b32.xlu0 %v1242, 104
        %v1298 = vpop.permute.xlu0 %1297
        %1299 = vrot.lane.b32.xlu0 %v1247, 104
        %v1300 = vpop.permute.xlu0 %1299
        %s1305 = scalar_lea.vmem [#allocation4], 96
        %1306 = vst.msk [vmem:[%s1305] sm:$0xff] %vm1250, %v1294
        %1307 = vst.msk [vmem:[%s1305 + $0x8] sm:$0xff] %vm1250, %v1296
        %1308 = vst.msk [vmem:[%s1305 + $0x10] sm:$0xff] %vm1250, %v1298
        %1309 = vst.msk [vmem:[%s1305 + $0x18] sm:$0xff] %vm1250, %v1300
        %v1310 = vld [vmem:[%s519] sm:$0xff]
        %v1311 = vunpack.c.0.s8 %v1310
        %v1312 = vunpack.c.1.s8 %v1310
        %v1313 = vunpack.c.2.s8 %v1310
        %v1314 = vunpack.c.3.s8 %v1310
        %vm1315 = vcmp.ne.s32.totalorder %v1311, 0
        %vm1316 = vcmp.ne.s32.totalorder %v1312, 0
        %vm1317 = vcmp.ne.s32.totalorder %v1313, 0
        %vm1318 = vcmp.ne.s32.totalorder %v1314, 0
        %v1319 = vsel %vm1315, 0.0, -1e+30
        %v1320 = vsel %vm1316, 0.0, -1e+30
        %v1321 = vsel %vm1317, 0.0, -1e+30
        %v1322 = vsel %vm1318, 0.0, -1e+30
        %v1323 = vld [vmem:[#allocation4] sm:$0xff]
        %v1324 = vld [vmem:[#allocation4 + $0x8] sm:$0xff]
        %v1325 = vld [vmem:[#allocation4 + $0x10] sm:$0xff]
        %v1326 = vld [vmem:[#allocation4 + $0x18] sm:$0xff]
        %v1327 = vld [vmem:[#allocation4 + $0x20] sm:$0xff]
        %v1328 = vld [vmem:[#allocation4 + $0x28] sm:$0xff]
        %v1329 = vld [vmem:[#allocation4 + $0x30] sm:$0xff]
        %v1330 = vld [vmem:[#allocation4 + $0x38] sm:$0xff]
        %v1331 = vld [vmem:[#allocation4 + $0x40] sm:$0xff]
        %v1332 = vld [vmem:[#allocation4 + $0x48] sm:$0xff]
        %v1333 = vld [vmem:[#allocation4 + $0x50] sm:$0xff]
        %v1334 = vld [vmem:[#allocation4 + $0x58] sm:$0xff]
        %v1335 = vld [vmem:[#allocation4 + $0x60] sm:$0xff]
        %v1336 = vld [vmem:[#allocation4 + $0x68] sm:$0xff]
        %v1337 = vld [vmem:[#allocation4 + $0x70] sm:$0xff]
        %v1338 = vld [vmem:[#allocation4 + $0x78] sm:$0xff]
        %v1339 = vld [vmem:[#allocation2] sm:$0xff]
        %v1340 = vld [vmem:[#allocation2 + $0x8] sm:$0xff]
        %v1341 = vld [vmem:[#allocation2 + $0x10] sm:$0xff]
        %v1342 = vld [vmem:[#allocation2 + $0x18] sm:$0xff]
        %v1343 = vld [vmem:[#allocation2 + $0x20] sm:$0xff]
        %v1344 = vld [vmem:[#allocation2 + $0x28] sm:$0xff]
        %v1345 = vld [vmem:[#allocation2 + $0x30] sm:$0xff]
        %v1346 = vld [vmem:[#allocation2 + $0x38] sm:$0xff]
        %v1347 = vld [vmem:[#allocation2 + $0x40] sm:$0xff]
        %v1348 = vld [vmem:[#allocation2 + $0x48] sm:$0xff]
        %v1349 = vld [vmem:[#allocation2 + $0x50] sm:$0xff]
        %v1350 = vld [vmem:[#allocation2 + $0x58] sm:$0xff]
        %v1351 = vld [vmem:[#allocation2 + $0x60] sm:$0xff]
        %v1352 = vld [vmem:[#allocation2 + $0x68] sm:$0xff]
        %v1353 = vld [vmem:[#allocation2 + $0x70] sm:$0xff]
        %v1354 = vld [vmem:[#allocation2 + $0x78] sm:$0xff]
        %v1355 = vld [vmem:[#allocation2 + $0x80] sm:$0xff]
        %v1356 = vld [vmem:[#allocation2 + $0x88] sm:$0xff]
        %v1357 = vld [vmem:[#allocation2 + $0x90] sm:$0xff]
        %v1358 = vld [vmem:[#allocation2 + $0x98] sm:$0xff]
        %v1359 = vld [vmem:[#allocation2 + $0xa0] sm:$0xff]
        %v1360 = vld [vmem:[#allocation2 + $0xa8] sm:$0xff]
        %v1361 = vld [vmem:[#allocation2 + $0xb0] sm:$0xff]
        %v1362 = vld [vmem:[#allocation2 + $0xb8] sm:$0xff]
        %v1363 = vld [vmem:[#allocation2 + $0xc0] sm:$0xff]
        %v1364 = vld [vmem:[#allocation2 + $0xc8] sm:$0xff]
        %v1365 = vld [vmem:[#allocation2 + $0xd0] sm:$0xff]
        %v1366 = vld [vmem:[#allocation2 + $0xd8] sm:$0xff]
        %v1367 = vld [vmem:[#allocation2 + $0xe0] sm:$0xff]
        %v1368 = vld [vmem:[#allocation2 + $0xe8] sm:$0xff]
        %v1369 = vld [vmem:[#allocation2 + $0xf0] sm:$0xff]
        %v1370 = vld [vmem:[#allocation2 + $0xf8] sm:$0xff]
        %v1371 = vld [vmem:[#allocation3] sm:$0xff]
        %v1372 = vld [vmem:[#allocation3 + $0x8] sm:$0xff]
        %v1373 = vld [vmem:[#allocation3 + $0x10] sm:$0xff]
        %v1374 = vld [vmem:[#allocation3 + $0x18] sm:$0xff]
        %v1375 = vld [vmem:[#allocation3 + $0x20] sm:$0xff]
        %v1376 = vld [vmem:[#allocation3 + $0x28] sm:$0xff]
        %v1377 = vld [vmem:[#allocation3 + $0x30] sm:$0xff]
        %v1378 = vld [vmem:[#allocation3 + $0x38] sm:$0xff]
        %v1379 = vld [vmem:[#allocation3 + $0x40] sm:$0xff]
        %v1380 = vld [vmem:[#allocation3 + $0x48] sm:$0xff]
        %v1381 = vld [vmem:[#allocation3 + $0x50] sm:$0xff]
        %v1382 = vld [vmem:[#allocation3 + $0x58] sm:$0xff]
        %v1383 = vld [vmem:[#allocation3 + $0x60] sm:$0xff]
        %v1384 = vld [vmem:[#allocation3 + $0x68] sm:$0xff]
        %v1385 = vld [vmem:[#allocation3 + $0x70] sm:$0xff]
        %v1386 = vld [vmem:[#allocation3 + $0x78] sm:$0xff]
        %v1387 = vld [vmem:[#allocation3 + $0x80] sm:$0xff]
        %v1388 = vld [vmem:[#allocation3 + $0x88] sm:$0xff]
        %v1389 = vld [vmem:[#allocation3 + $0x90] sm:$0xff]
        %v1390 = vld [vmem:[#allocation3 + $0x98] sm:$0xff]
        %v1391 = vld [vmem:[#allocation3 + $0xa0] sm:$0xff]
        %v1392 = vld [vmem:[#allocation3 + $0xa8] sm:$0xff]
        %v1393 = vld [vmem:[#allocation3 + $0xb0] sm:$0xff]
        %v1394 = vld [vmem:[#allocation3 + $0xb8] sm:$0xff]
        %v1395 = vld [vmem:[#allocation3 + $0xc0] sm:$0xff]
        %v1396 = vld [vmem:[#allocation3 + $0xc8] sm:$0xff]
        %v1397 = vld [vmem:[#allocation3 + $0xd0] sm:$0xff]
        %v1398 = vld [vmem:[#allocation3 + $0xd8] sm:$0xff]
        %v1399 = vld [vmem:[#allocation3 + $0xe0] sm:$0xff]
        %v1400 = vld [vmem:[#allocation3 + $0xe8] sm:$0xff]
        %v1401 = vld [vmem:[#allocation3 + $0xf0] sm:$0xff]
        %v1402 = vld [vmem:[#allocation3 + $0xf8] sm:$0xff]
        %v1404 = vsel %vm1250, %v1323, 0
        %v1407 = vsel %vm1250, %v1324, 0
        %v1410 = vsel %vm1250, %v1325, 0
        %v1413 = vsel %vm1250, %v1326, 0
        %v1416 = vsel %vm1250, %v1339, 0
        %v1419 = vsel %vm1250, %v1340, 0
        %v1422 = vsel %vm1250, %v1341, 0
        %v1425 = vsel %vm1250, %v1342, 0
        %v1428 = vsel %vm1250, %v1343, 0
        %v1431 = vsel %vm1250, %v1344, 0
        %v1434 = vsel %vm1250, %v1345, 0
        %v1437 = vsel %vm1250, %v1346, 0
        %1439 = vmatprep.subr.mxu0 0.0
        %1440 = vmatpush1.xpose.msra.mxu0 %v1416
        %1441 = vmatprep.subr.mxu0 0.0
        %1442 = vmatpush1.xpose.msra.mxu0 %v1419
        %1443 = vmatprep.subr.mxu0 0.0
        %1444 = vmatpush1.xpose.msra.mxu0 %v1422
        %1445 = vmatprep.subr.mxu0 0.0
        %1446 = vmatpush1.xpose.msra.mxu0 %v1425
        %1447 = vmatprep.subr.mxu0 0.0
        %1448 = vmatpush1.xpose.msra.mxu0 %v1428
        %1449 = vmatprep.subr.mxu0 0.0
        %1450 = vmatpush1.xpose.msra.mxu0 %v1431
        %1451 = vmatprep.subr.mxu0 0.0
        %1452 = vmatpush1.xpose.msra.mxu0 %v1434
        %1453 = vmatprep.subr.mxu0 0.0
        %1454 = vmatpush1.xpose.msra.mxu0 %v1437
        %1455 = vmatprep.subr.mxu0 0.0
        %1456 = vmatpush1.xpose.msra.mxu0 0.0
        %1457 = vmatprep.subr.mxu0 0.0
        %1458 = vmatpush1.xpose.msra.mxu0 0.0
        %1459 = vmatprep.subr.mxu0 0.0
        %1460 = vmatpush1.xpose.msra.mxu0 0.0
        %1461 = vmatprep.subr.mxu0 0.0
        %1462 = vmatpush1.xpose.msra.mxu0 0.0
        %1463 = vmatprep.subr.mxu0 0.0
        %1464 = vmatpush1.xpose.msra.mxu0 0.0
        %1465 = vmatprep.subr.mxu0 0.0
        %1466 = vmatpush1.xpose.msra.mxu0 0.0
        %1467 = vmatprep.subr.mxu0 0.0
        %1468 = vmatpush1.xpose.msra.mxu0 0.0
        %1469 = vmatprep.subr.mxu0 0.0
        %1470 = vmatpush1.xpose.msra.mxu0 0.0
        %1471 = vmatprep.subr.mxu0 0.0
        %1472 = vmatpush1.xpose.msra.mxu0 0.0
        %1473 = vmatprep.subr.mxu0 0.0
        %1474 = vmatpush1.xpose.msra.mxu0 0.0
        %1475 = vmatprep.subr.mxu0 0.0
        %1476 = vmatpush1.xpose.msra.mxu0 0.0
        %1477 = vmatprep.subr.mxu0 0.0
        %1478 = vmatpush1.xpose.msra.mxu0 0.0
        %1479 = vmatprep.subr.mxu0 0.0
        %1480 = vmatpush1.xpose.msra.mxu0 0.0
        %1481 = vmatprep.subr.mxu0 0.0
        %1482 = vmatpush1.xpose.msra.mxu0 0.0
        %1483 = vmatprep.subr.mxu0 0.0
        %1484 = vmatpush1.xpose.msra.mxu0 0.0
        %1485 = vmatprep.subr.mxu0 0.0
        %1486 = vmatpush1.xpose.msra.mxu0 0.0
        %1487 = vmatprep.subr.mxu0 0.0
        %1488 = vmatpush1.xpose.msra.mxu0 0.0
        %1489 = vmatprep.subr.mxu0 0.0
        %1490 = vmatpush1.xpose.msra.mxu0 0.0
        %1491 = vmatprep.subr.mxu0 0.0
        %1492 = vmatpush1.xpose.msra.mxu0 0.0
        %1493 = vmatprep.subr.mxu0 0.0
        %1494 = vmatpush1.xpose.msra.mxu0 0.0
        %1495 = vmatprep.subr.mxu0 0.0
        %1496 = vmatpush1.xpose.msra.mxu0 0.0
        %1497 = vmatprep.subr.mxu0 0.0
        %1498 = vmatpush1.xpose.msra.mxu0 0.0
        %1499 = vmatprep.subr.mxu0 0.0
        %1500 = vmatpush1.xpose.msra.mxu0 0.0
        %1501 = vmatprep.subr.mxu0 0.0
        %1502 = vmatpush1.xpose.msra.mxu0 0.0
        %1503 = vmatprep.mubr.f32.mxu0 0.0
        %1504 = vmatmul.mubr.f32.gmra.mrb[0].mxu0 %v1404
        %v1505 = vpop.f32.mrb[0].mxu0
        %v1506 = vadd.f32 %v1319, %v1505
        %v1507 = vpop.f32.mrb[0].mxu0
        %1508 = vmatprep.mubr.f32.mxu0 0.0
        %1509 = vmatmul.mubr.f32.gmra.mrb[0].mxu0 %v1407
        %v1510 = vpop.f32.mrb[0].mxu0
        %v1511 = vadd.f32 %v1320, %v1510
        %v1512 = vpop.f32.mrb[0].mxu0
        %1513 = vmatprep.mubr.f32.mxu0 0.0
        %1514 = vmatmul.mubr.f32.gmra.mrb[0].mxu0 %v1410
        %v1515 = vpop.f32.mrb[0].mxu0
        %v1516 = vadd.f32 %v1321, %v1515
        %v1517 = vpop.f32.mrb[0].mxu0
        %1518 = vmatprep.mubr.f32.mxu0 0.0
        %1519 = vmatmul.mubr.f32.gmra.mrb[0].mxu0 %v1413
        %v1520 = vpop.f32.mrb[0].mxu0
        %v1521 = vadd.f32 %v1322, %v1520
        %v1522 = vpop.f32.mrb[0].mxu0
        %1523 = vdwg.mxu0
        %v1525 = vsel %vm1250, %v1327, 0
        %v1528 = vsel %vm1250, %v1328, 0
        %v1531 = vsel %vm1250, %v1329, 0
        %v1534 = vsel %vm1250, %v1330, 0
        %v1537 = vsel %vm1250, %v1347, 0
        %v1540 = vsel %vm1250, %v1348, 0
        %v1543 = vsel %vm1250, %v1349, 0
        %v1546 = vsel %vm1250, %v1350, 0
        %v1549 = vsel %vm1250, %v1351, 0
        %v1552 = vsel %vm1250, %v1352, 0
        %v1555 = vsel %vm1250, %v1353, 0
        %v1558 = vsel %vm1250, %v1354, 0
        %1560 = vmatprep.subr.mxu0 0.0
        %1561 = vmatpush1.xpose.msra.mxu0 %v1537
        %1562 = vmatprep.subr.mxu0 0.0
        %1563 = vmatpush1.xpose.msra.mxu0 %v1540
        %1564 = vmatprep.subr.mxu0 0.0
        %1565 = vmatpush1.xpose.msra.mxu0 %v1543
        %1566 = vmatprep.subr.mxu0 0.0
        %1567 = vmatpush1.xpose.msra.mxu0 %v1546
        %1568 = vmatprep.subr.mxu0 0.0
        %1569 = vmatpush1.xpose.msra.mxu0 %v1549
        %1570 = vmatprep.subr.mxu0 0.0
        %1571 = vmatpush1.xpose.msra.mxu0 %v1552
        %1572 = vmatprep.subr.mxu0 0.0
        %1573 = vmatpush1.xpose.msra.mxu0 %v1555
        %1574 = vmatprep.subr.mxu0 0.0
        %1575 = vmatpush1.xpose.msra.mxu0 %v1558
        %1576 = vmatprep.subr.mxu0 0.0
        %1577 = vmatpush1.xpose.msra.mxu0 0.0
        %1578 = vmatprep.subr.mxu0 0.0
        %1579 = vmatpush1.xpose.msra.mxu0 0.0
        %1580 = vmatprep.subr.mxu0 0.0
        %1581 = vmatpush1.xpose.msra.mxu0 0.0
        %1582 = vmatprep.subr.mxu0 0.0
        %1583 = vmatpush1.xpose.msra.mxu0 0.0
        %1584 = vmatprep.subr.mxu0 0.0
        %1585 = vmatpush1.xpose.msra.mxu0 0.0
        %1586 = vmatprep.subr.mxu0 0.0
        %1587 = vmatpush1.xpose.msra.mxu0 0.0
        %1588 = vmatprep.subr.mxu0 0.0
        %1589 = vmatpush1.xpose.msra.mxu0 0.0
        %1590 = vmatprep.subr.mxu0 0.0
        %1591 = vmatpush1.xpose.msra.mxu0 0.0
        %1592 = vmatprep.subr.mxu0 0.0
        %1593 = vmatpush1.xpose.msra.mxu0 0.0
        %1594 = vmatprep.subr.mxu0 0.0
        %1595 = vmatpush1.xpose.msra.mxu0 0.0
        %1596 = vmatprep.subr.mxu0 0.0
        %1597 = vmatpush1.xpose.msra.mxu0 0.0
        %1598 = vmatprep.subr.mxu0 0.0
        %1599 = vmatpush1.xpose.msra.mxu0 0.0
        %1600 = vmatprep.subr.mxu0 0.0
        %1601 = vmatpush1.xpose.msra.mxu0 0.0
        %1602 = vmatprep.subr.mxu0 0.0
        %1603 = vmatpush1.xpose.msra.mxu0 0.0
        %1604 = vmatprep.subr.mxu0 0.0
        %1605 = vmatpush1.xpose.msra.mxu0 0.0
        %1606 = vmatprep.subr.mxu0 0.0
        %1607 = vmatpush1.xpose.msra.mxu0 0.0
        %1608 = vmatprep.subr.mxu0 0.0
        %1609 = vmatpush1.xpose.msra.mxu0 0.0
        %1610 = vmatprep.subr.mxu0 0.0
        %1611 = vmatpush1.xpose.msra.mxu0 0.0
        %1612 = vmatprep.subr.mxu0 0.0
        %1613 = vmatpush1.xpose.msra.mxu0 0.0
        %1614 = vmatprep.subr.mxu0 0.0
        %1615 = vmatpush1.xpose.msra.mxu0 0.0
        %1616 = vmatprep.subr.mxu0 0.0
        %1617 = vmatpush1.xpose.msra.mxu0 0.0
        %1618 = vmatprep.subr.mxu0 0.0
        %1619 = vmatpush1.xpose.msra.mxu0 0.0
        %1620 = vmatprep.subr.mxu0 0.0
        %1621 = vmatpush1.xpose.msra.mxu0 0.0
        %1622 = vmatprep.subr.mxu0 0.0
        %1623 = vmatpush1.xpose.msra.mxu0 0.0
        %1624 = vmatprep.mubr.f32.mxu0 0.0
        %1625 = vmatmul.mubr.f32.gmra.mrb[0].mxu0 %v1525
        %v1626 = vpop.f32.mrb[0].mxu0
        %v1627 = vadd.f32 %v1319, %v1626
        %v1628 = vpop.f32.mrb[0].mxu0
        %1629 = vmatprep.mubr.f32.mxu0 0.0
        %1630 = vmatmul.mubr.f32.gmra.mrb[0].mxu0 %v1528
        %v1631 = vpop.f32.mrb[0].mxu0
        %v1632 = vadd.f32 %v1320, %v1631
        %v1633 = vpop.f32.mrb[0].mxu0
        %1634 = vmatprep.mubr.f32.mxu0 0.0
        %1635 = vmatmul.mubr.f32.gmra.mrb[0].mxu0 %v1531
        %v1636 = vpop.f32.mrb[0].mxu0
        %v1637 = vadd.f32 %v1321, %v1636
        %v1638 = vpop.f32.mrb[0].mxu0
        %1639 = vmatprep.mubr.f32.mxu0 0.0
        %1640 = vmatmul.mubr.f32.gmra.mrb[0].mxu0 %v1534
        %v1641 = vpop.f32.mrb[0].mxu0
        %v1642 = vadd.f32 %v1322, %v1641
        %v1643 = vpop.f32.mrb[0].mxu0
        %1644 = vdwg.mxu0
        %v1646 = vsel %vm1250, %v1331, 0
        %v1649 = vsel %vm1250, %v1332, 0
        %v1652 = vsel %vm1250, %v1333, 0
        %v1655 = vsel %vm1250, %v1334, 0
        %v1658 = vsel %vm1250, %v1355, 0
        %v1661 = vsel %vm1250, %v1356, 0
        %v1664 = vsel %vm1250, %v1357, 0
        %v1667 = vsel %vm1250, %v1358, 0
        %v1670 = vsel %vm1250, %v1359, 0
        %v1673 = vsel %vm1250, %v1360, 0
        %v1676 = vsel %vm1250, %v1361, 0
        %v1679 = vsel %vm1250, %v1362, 0
        %1681 = vmatprep.subr.mxu0 0.0
        %1682 = vmatpush1.xpose.msra.mxu0 %v1658
        %1683 = vmatprep.subr.mxu0 0.0
        %1684 = vmatpush1.xpose.msra.mxu0 %v1661
        %1685 = vmatprep.subr.mxu0 0.0
        %1686 = vmatpush1.xpose.msra.mxu0 %v1664
        %1687 = vmatprep.subr.mxu0 0.0
        %1688 = vmatpush1.xpose.msra.mxu0 %v1667
        %1689 = vmatprep.subr.mxu0 0.0
        %1690 = vmatpush1.xpose.msra.mxu0 %v1670
        %1691 = vmatprep.subr.mxu0 0.0
        %1692 = vmatpush1.xpose.msra.mxu0 %v1673
        %1693 = vmatprep.subr.mxu0 0.0
        %1694 = vmatpush1.xpose.msra.mxu0 %v1676
        %1695 = vmatprep.subr.mxu0 0.0
        %1696 = vmatpush1.xpose.msra.mxu0 %v1679
        %1697 = vmatprep.subr.mxu0 0.0
        %1698 = vmatpush1.xpose.msra.mxu0 0.0
        %1699 = vmatprep.subr.mxu0 0.0
        %1700 = vmatpush1.xpose.msra.mxu0 0.0
        %1701 = vmatprep.subr.mxu0 0.0
        %1702 = vmatpush1.xpose.msra.mxu0 0.0
        %1703 = vmatprep.subr.mxu0 0.0
        %1704 = vmatpush1.xpose.msra.mxu0 0.0
        %1705 = vmatprep.subr.mxu0 0.0
        %1706 = vmatpush1.xpose.msra.mxu0 0.0
        %1707 = vmatprep.subr.mxu0 0.0
        %1708 = vmatpush1.xpose.msra.mxu0 0.0
        %1709 = vmatprep.subr.mxu0 0.0
        %1710 = vmatpush1.xpose.msra.mxu0 0.0
        %1711 = vmatprep.subr.mxu0 0.0
        %1712 = vmatpush1.xpose.msra.mxu0 0.0
        %1713 = vmatprep.subr.mxu0 0.0
        %1714 = vmatpush1.xpose.msra.mxu0 0.0
        %1715 = vmatprep.subr.mxu0 0.0
        %1716 = vmatpush1.xpose.msra.mxu0 0.0
        %1717 = vmatprep.subr.mxu0 0.0
        %1718 = vmatpush1.xpose.msra.mxu0 0.0
        %1719 = vmatprep.subr.mxu0 0.0
        %1720 = vmatpush1.xpose.msra.mxu0 0.0
        %1721 = vmatprep.subr.mxu0 0.0
        %1722 = vmatpush1.xpose.msra.mxu0 0.0
        %1723 = vmatprep.subr.mxu0 0.0
        %1724 = vmatpush1.xpose.msra.mxu0 0.0
        %1725 = vmatprep.subr.mxu0 0.0
        %1726 = vmatpush1.xpose.msra.mxu0 0.0
        %1727 = vmatprep.subr.mxu0 0.0
        %1728 = vmatpush1.xpose.msra.mxu0 0.0
        %1729 = vmatprep.subr.mxu0 0.0
        %1730 = vmatpush1.xpose.msra.mxu0 0.0
        %1731 = vmatprep.subr.mxu0 0.0
        %1732 = vmatpush1.xpose.msra.mxu0 0.0
        %1733 = vmatprep.subr.mxu0 0.0
        %1734 = vmatpush1.xpose.msra.mxu0 0.0
        %1735 = vmatprep.subr.mxu0 0.0
        %1736 = vmatpush1.xpose.msra.mxu0 0.0
        %1737 = vmatprep.subr.mxu0 0.0
        %1738 = vmatpush1.xpose.msra.mxu0 0.0
        %1739 = vmatprep.subr.mxu0 0.0
        %1740 = vmatpush1.xpose.msra.mxu0 0.0
        %1741 = vmatprep.subr.mxu0 0.0
        %1742 = vmatpush1.xpose.msra.mxu0 0.0
        %1743 = vmatprep.subr.mxu0 0.0
        %1744 = vmatpush1.xpose.msra.mxu0 0.0
        %1745 = vmatprep.mubr.f32.mxu0 0.0
        %1746 = vmatmul.mubr.f32.gmra.mrb[0].mxu0 %v1646
        %v1747 = vpop.f32.mrb[0].mxu0
        %v1748 = vadd.f32 %v1319, %v1747
        %v1749 = vpop.f32.mrb[0].mxu0
        %1750 = vmatprep.mubr.f32.mxu0 0.0
        %1751 = vmatmul.mubr.f32.gmra.mrb[0].mxu0 %v1649
        %v1752 = vpop.f32.mrb[0].mxu0
        %v1753 = vadd.f32 %v1320, %v1752
        %v1754 = vpop.f32.mrb[0].mxu0
        %1755 = vmatprep.mubr.f32.mxu0 0.0
        %1756 = vmatmul.mubr.f32.gmra.mrb[0].mxu0 %v1652
        %v1757 = vpop.f32.mrb[0].mxu0
        %v1758 = vadd.f32 %v1321, %v1757
        %v1759 = vpop.f32.mrb[0].mxu0
        %1760 = vmatprep.mubr.f32.mxu0 0.0
        %1761 = vmatmul.mubr.f32.gmra.mrb[0].mxu0 %v1655
        %v1762 = vpop.f32.mrb[0].mxu0
        %v1763 = vadd.f32 %v1322, %v1762
        %v1764 = vpop.f32.mrb[0].mxu0
        %1765 = vdwg.mxu0
        %v1767 = vsel %vm1250, %v1335, 0
        %v1770 = vsel %vm1250, %v1336, 0
        %v1773 = vsel %vm1250, %v1337, 0
        %v1776 = vsel %vm1250, %v1338, 0
        %v1779 = vsel %vm1250, %v1363, 0
        %v1782 = vsel %vm1250, %v1364, 0
        %v1785 = vsel %vm1250, %v1365, 0
        %v1788 = vsel %vm1250, %v1366, 0
        %v1791 = vsel %vm1250, %v1367, 0
        %v1794 = vsel %vm1250, %v1368, 0
        %v1797 = vsel %vm1250, %v1369, 0
        %v1800 = vsel %vm1250, %v1370, 0
        %1802 = vmatprep.subr.mxu0 0.0
        %1803 = vmatpush1.xpose.msra.mxu0 %v1779
        %1804 = vmatprep.subr.mxu0 0.0
        %1805 = vmatpush1.xpose.msra.mxu0 %v1782
        %1806 = vmatprep.subr.mxu0 0.0
        %1807 = vmatpush1.xpose.msra.mxu0 %v1785
        %1808 = vmatprep.subr.mxu0 0.0
        %1809 = vmatpush1.xpose.msra.mxu0 %v1788
        %1810 = vmatprep.subr.mxu0 0.0
        %1811 = vmatpush1.xpose.msra.mxu0 %v1791
        %1812 = vmatprep.subr.mxu0 0.0
        %1813 = vmatpush1.xpose.msra.mxu0 %v1794
        %1814 = vmatprep.subr.mxu0 0.0
        %1815 = vmatpush1.xpose.msra.mxu0 %v1797
        %1816 = vmatprep.subr.mxu0 0.0
        %1817 = vmatpush1.xpose.msra.mxu0 %v1800
        %1818 = vmatprep.subr.mxu0 0.0
        %1819 = vmatpush1.xpose.msra.mxu0 0.0
        %1820 = vmatprep.subr.mxu0 0.0
        %1821 = vmatpush1.xpose.msra.mxu0 0.0
        %1822 = vmatprep.subr.mxu0 0.0
        %1823 = vmatpush1.xpose.msra.mxu0 0.0
        %1824 = vmatprep.subr.mxu0 0.0
        %1825 = vmatpush1.xpose.msra.mxu0 0.0
        %1826 = vmatprep.subr.mxu0 0.0
        %1827 = vmatpush1.xpose.msra.mxu0 0.0
        %1828 = vmatprep.subr.mxu0 0.0
        %1829 = vmatpush1.xpose.msra.mxu0 0.0
        %1830 = vmatprep.subr.mxu0 0.0
        %1831 = vmatpush1.xpose.msra.mxu0 0.0
        %1832 = vmatprep.subr.mxu0 0.0
        %1833 = vmatpush1.xpose.msra.mxu0 0.0
        %1834 = vmatprep.subr.mxu0 0.0
        %1835 = vmatpush1.xpose.msra.mxu0 0.0
        %1836 = vmatprep.subr.mxu0 0.0
        %1837 = vmatpush1.xpose.msra.mxu0 0.0
        %1838 = vmatprep.subr.mxu0 0.0
        %1839 = vmatpush1.xpose.msra.mxu0 0.0
        %1840 = vmatprep.subr.mxu0 0.0
        %1841 = vmatpush1.xpose.msra.mxu0 0.0
        %1842 = vmatprep.subr.mxu0 0.0
        %1843 = vmatpush1.xpose.msra.mxu0 0.0
        %1844 = vmatprep.subr.mxu0 0.0
        %1845 = vmatpush1.xpose.msra.mxu0 0.0
        %1846 = vmatprep.subr.mxu0 0.0
        %1847 = vmatpush1.xpose.msra.mxu0 0.0
        %1848 = vmatprep.subr.mxu0 0.0
        %1849 = vmatpush1.xpose.msra.mxu0 0.0
        %1850 = vmatprep.subr.mxu0 0.0
        %1851 = vmatpush1.xpose.msra.mxu0 0.0
        %1852 = vmatprep.subr.mxu0 0.0
        %1853 = vmatpush1.xpose.msra.mxu0 0.0
        %1854 = vmatprep.subr.mxu0 0.0
        %1855 = vmatpush1.xpose.msra.mxu0 0.0
        %1856 = vmatprep.subr.mxu0 0.0
        %1857 = vmatpush1.xpose.msra.mxu0 0.0
        %1858 = vmatprep.subr.mxu0 0.0
        %1859 = vmatpush1.xpose.msra.mxu0 0.0
        %1860 = vmatprep.subr.mxu0 0.0
        %1861 = vmatpush1.xpose.msra.mxu0 0.0
        %1862 = vmatprep.subr.mxu0 0.0
        %1863 = vmatpush1.xpose.msra.mxu0 0.0
        %1864 = vmatprep.subr.mxu0 0.0
        %1865 = vmatpush1.xpose.msra.mxu0 0.0
        %1866 = vmatprep.mubr.f32.mxu0 0.0
        %1867 = vmatmul.mubr.f32.gmra.mrb[0].mxu0 %v1767
        %v1868 = vpop.f32.mrb[0].mxu0
        %v1869 = vadd.f32 %v1319, %v1868
        %v1870 = vpop.f32.mrb[0].mxu0
        %1871 = vmatprep.mubr.f32.mxu0 0.0
        %1872 = vmatmul.mubr.f32.gmra.mrb[0].mxu0 %v1770
        %v1873 = vpop.f32.mrb[0].mxu0
        %v1874 = vadd.f32 %v1320, %v1873
        %v1875 = vpop.f32.mrb[0].mxu0
        %1876 = vmatprep.mubr.f32.mxu0 0.0
        %1877 = vmatmul.mubr.f32.gmra.mrb[0].mxu0 %v1773
        %v1878 = vpop.f32.mrb[0].mxu0
        %v1879 = vadd.f32 %v1321, %v1878
        %v1880 = vpop.f32.mrb[0].mxu0
        %1881 = vmatprep.mubr.f32.mxu0 0.0
        %1882 = vmatmul.mubr.f32.gmra.mrb[0].mxu0 %v1776
        %v1883 = vpop.f32.mrb[0].mxu0
        %v1884 = vadd.f32 %v1322, %v1883
        %v1885 = vpop.f32.mrb[0].mxu0
        %1886 = vdwg.mxu0
        %vm1887 = vcmask 523264
        %v1888 = vsel %vm1887, %v1506, -inf
        %1889 = vmax.xlane.f32.xlu0 %v1888
        %v1890 = vpop.xlane.xlu0 %1889
        %v1891 = vsel %vm1887, %v1511, -inf
        %1892 = vmax.xlane.f32.xlu0 %v1891
        %v1893 = vpop.xlane.xlu0 %1892
        %v1894 = vsel %vm1887, %v1516, -inf
        %1895 = vmax.xlane.f32.xlu0 %v1894
        %v1896 = vpop.xlane.xlu0 %1895
        %v1897 = vsel %vm1887, %v1521, -inf
        %1898 = vmax.xlane.f32.xlu0 %v1897
        %v1899 = vpop.xlane.xlu0 %1898
        %v1900 = vsel %vm1887, %v1627, -inf
        %1901 = vmax.xlane.f32.xlu0 %v1900
        %v1902 = vpop.xlane.xlu0 %1901
        %v1903 = vsel %vm1887, %v1632, -inf
        %1904 = vmax.xlane.f32.xlu0 %v1903
        %v1905 = vpop.xlane.xlu0 %1904
        %v1906 = vsel %vm1887, %v1637, -inf
        %1907 = vmax.xlane.f32.xlu0 %v1906
        %v1908 = vpop.xlane.xlu0 %1907
        %v1909 = vsel %vm1887, %v1642, -inf
        %1910 = vmax.xlane.f32.xlu0 %v1909
        %v1911 = vpop.xlane.xlu0 %1910
        %v1912 = vsel %vm1887, %v1748, -inf
        %1913 = vmax.xlane.f32.xlu0 %v1912
        %v1914 = vpop.xlane.xlu0 %1913
        %v1915 = vsel %vm1887, %v1753, -inf
        %1916 = vmax.xlane.f32.xlu0 %v1915
        %v1917 = vpop.xlane.xlu0 %1916
        %v1918 = vsel %vm1887, %v1758, -inf
        %1919 = vmax.xlane.f32.xlu0 %v1918
        %v1920 = vpop.xlane.xlu0 %1919
        %v1921 = vsel %vm1887, %v1763, -inf
        %1922 = vmax.xlane.f32.xlu0 %v1921
        %v1923 = vpop.xlane.xlu0 %1922
        %v1924 = vsel %vm1887, %v1869, -inf
        %1925 = vmax.xlane.f32.xlu0 %v1924
        %v1926 = vpop.xlane.xlu0 %1925
        %v1927 = vsel %vm1887, %v1874, -inf
        %1928 = vmax.xlane.f32.xlu0 %v1927
        %v1929 = vpop.xlane.xlu0 %1928
        %v1930 = vsel %vm1887, %v1879, -inf
        %1931 = vmax.xlane.f32.xlu0 %v1930
        %v1932 = vpop.xlane.xlu0 %1931
        %v1933 = vsel %vm1887, %v1884, -inf
        %1934 = vmax.xlane.f32.xlu0 %v1933
        %v1935 = vpop.xlane.xlu0 %1934
        %v1936 = vsub.f32 %v1506, %v1890
        %v1937 = vsub.f32 %v1511, %v1893
        %v1938 = vsub.f32 %v1516, %v1896
        %v1939 = vsub.f32 %v1521, %v1899
        %v1940 = vsub.f32 %v1627, %v1902
        %v1941 = vsub.f32 %v1632, %v1905
        %v1942 = vsub.f32 %v1637, %v1908
        %v1943 = vsub.f32 %v1642, %v1911
        %v1944 = vsub.f32 %v1748, %v1914
        %v1945 = vsub.f32 %v1753, %v1917
        %v1946 = vsub.f32 %v1758, %v1920
        %v1947 = vsub.f32 %v1763, %v1923
        %v1948 = vsub.f32 %v1869, %v1926
        %v1949 = vsub.f32 %v1874, %v1929
        %v1950 = vsub.f32 %v1879, %v1932
        %v1951 = vsub.f32 %v1884, %v1935
        %v1952 = vmul.f32 %v1936, 1.442695
        %v1953 = vpow.pop %v1952
        %v1954 = vmul.f32 %v1937, 1.442695
        %v1955 = vpow.pop %v1954
        %v1956 = vmul.f32 %v1938, 1.442695
        %v1957 = vpow.pop %v1956
        %v1958 = vmul.f32 %v1939, 1.442695
        %v1959 = vpow.pop %v1958
        %v1960 = vmul.f32 %v1940, 1.442695
        %v1961 = vpow.pop %v1960
        %v1962 = vmul.f32 %v1941, 1.442695
        %v1963 = vpow.pop %v1962
        %v1964 = vmul.f32 %v1942, 1.442695
        %v1965 = vpow.pop %v1964
        %v1966 = vmul.f32 %v1943, 1.442695
        %v1967 = vpow.pop %v1966
        %v1968 = vmul.f32 %v1944, 1.442695
        %v1969 = vpow.pop %v1968
        %v1970 = vmul.f32 %v1945, 1.442695
        %v1971 = vpow.pop %v1970
        %v1972 = vmul.f32 %v1946, 1.442695
        %v1973 = vpow.pop %v1972
        %v1974 = vmul.f32 %v1947, 1.442695
        %v1975 = vpow.pop %v1974
        %v1976 = vmul.f32 %v1948, 1.442695
        %v1977 = vpow.pop %v1976
        %v1978 = vmul.f32 %v1949, 1.442695
        %v1979 = vpow.pop %v1978
        %v1980 = vmul.f32 %v1950, 1.442695
        %v1981 = vpow.pop %v1980
        %v1982 = vmul.f32 %v1951, 1.442695
        %v1983 = vpow.pop %v1982
        %v1984 = vsel %vm1887, %v1953, 0.0
        %1985 = vadd.xlane.f32.xlu0 %v1984
        %v1986 = vpop.xlane.xlu0 %1985
        %v1987 = vsel %vm1887, %v1955, 0.0
        %1988 = vadd.xlane.f32.xlu0 %v1987
        %v1989 = vpop.xlane.xlu0 %1988
        %v1990 = vsel %vm1887, %v1957, 0.0
        %1991 = vadd.xlane.f32.xlu0 %v1990
        %v1992 = vpop.xlane.xlu0 %1991
        %v1993 = vsel %vm1887, %v1959, 0.0
        %1994 = vadd.xlane.f32.xlu0 %v1993
        %v1995 = vpop.xlane.xlu0 %1994
        %v1996 = vsel %vm1887, %v1961, 0.0
        %1997 = vadd.xlane.f32.xlu0 %v1996
        %v1998 = vpop.xlane.xlu0 %1997
        %v1999 = vsel %vm1887, %v1963, 0.0
        %2000 = vadd.xlane.f32.xlu0 %v1999
        %v2001 = vpop.xlane.xlu0 %2000
        %v2002 = vsel %vm1887, %v1965, 0.0
        %2003 = vadd.xlane.f32.xlu0 %v2002
        %v2004 = vpop.xlane.xlu0 %2003
        %v2005 = vsel %vm1887, %v1967, 0.0
        %2006 = vadd.xlane.f32.xlu0 %v2005
        %v2007 = vpop.xlane.xlu0 %2006
        %v2008 = vsel %vm1887, %v1969, 0.0
        %2009 = vadd.xlane.f32.xlu0 %v2008
        %v2010 = vpop.xlane.xlu0 %2009
        %v2011 = vsel %vm1887, %v1971, 0.0
        %2012 = vadd.xlane.f32.xlu0 %v2011
        %v2013 = vpop.xlane.xlu0 %2012
        %v2014 = vsel %vm1887, %v1973, 0.0
        %2015 = vadd.xlane.f32.xlu0 %v2014
        %v2016 = vpop.xlane.xlu0 %2015
        %v2017 = vsel %vm1887, %v1975, 0.0
        %2018 = vadd.xlane.f32.xlu0 %v2017
        %v2019 = vpop.xlane.xlu0 %2018
        %v2020 = vsel %vm1887, %v1977, 0.0
        %2021 = vadd.xlane.f32.xlu0 %v2020
        %v2022 = vpop.xlane.xlu0 %2021
        %v2023 = vsel %vm1887, %v1979, 0.0
        %2024 = vadd.xlane.f32.xlu0 %v2023
        %v2025 = vpop.xlane.xlu0 %2024
        %v2026 = vsel %vm1887, %v1981, 0.0
        %2027 = vadd.xlane.f32.xlu0 %v2026
        %v2028 = vpop.xlane.xlu0 %2027
        %v2029 = vsel %vm1887, %v1983, 0.0
        %2030 = vadd.xlane.f32.xlu0 %v2029
        %v2031 = vpop.xlane.xlu0 %2030
        %v2032 = vrcp.pop %v1986
        %v2033 = vmul.f32 %v1953, %v2032
        %v2034 = vrcp.pop %v1989
        %v2035 = vmul.f32 %v1955, %v2034
        %v2036 = vrcp.pop %v1992
        %v2037 = vmul.f32 %v1957, %v2036
        %v2038 = vrcp.pop %v1995
        %v2039 = vmul.f32 %v1959, %v2038
        %v2040 = vrcp.pop %v1998
        %v2041 = vmul.f32 %v1961, %v2040
        %v2042 = vrcp.pop %v2001
        %v2043 = vmul.f32 %v1963, %v2042
        %v2044 = vrcp.pop %v2004
        %v2045 = vmul.f32 %v1965, %v2044
        %v2046 = vrcp.pop %v2007
        %v2047 = vmul.f32 %v1967, %v2046
        %v2048 = vrcp.pop %v2010
        %v2049 = vmul.f32 %v1969, %v2048
        %v2050 = vrcp.pop %v2013
        %v2051 = vmul.f32 %v1971, %v2050
        %v2052 = vrcp.pop %v2016
        %v2053 = vmul.f32 %v1973, %v2052
        %v2054 = vrcp.pop %v2019
        %v2055 = vmul.f32 %v1975, %v2054
        %v2056 = vrcp.pop %v2022
        %v2057 = vmul.f32 %v1977, %v2056
        %v2058 = vrcp.pop %v2025
        %v2059 = vmul.f32 %v1979, %v2058
        %v2060 = vrcp.pop %v2028
        %v2061 = vmul.f32 %v1981, %v2060
        %v2062 = vrcp.pop %v2031
        %v2063 = vmul.f32 %v1983, %v2062
        %v2064 = vsel %vm1315, 1, 0
        %v2065 = vsel %vm1316, 1, 0
        %v2066 = vsel %vm1317, 1, 0
        %v2067 = vsel %vm1318, 1, 0
        %vm2068 = vcmp.eq.s32.totalorder %v2064, 1
        %vm2069 = vcmp.eq.s32.totalorder %v2065, 1
        %vm2070 = vcmp.eq.s32.totalorder %v2066, 1
        %vm2071 = vcmp.eq.s32.totalorder %v2067, 1
        %v2072 = vsel %vm2068, %v2033, 0.0
        %v2073 = vsel %vm2069, %v2035, 0.0
        %v2074 = vsel %vm2070, %v2037, 0.0
        %v2075 = vsel %vm2071, %v2039, 0.0
        %v2076 = vsel %vm2068, %v2041, 0.0
        %v2077 = vsel %vm2069, %v2043, 0.0
        %v2078 = vsel %vm2070, %v2045, 0.0
        %v2079 = vsel %vm2071, %v2047, 0.0
        %v2080 = vsel %vm2068, %v2049, 0.0
        %v2081 = vsel %vm2069, %v2051, 0.0
        %v2082 = vsel %vm2070, %v2053, 0.0
        %v2083 = vsel %vm2071, %v2055, 0.0
        %v2084 = vsel %vm2068, %v2057, 0.0
        %v2085 = vsel %vm2069, %v2059, 0.0
        %v2086 = vsel %vm2070, %v2061, 0.0
        %v2087 = vsel %vm2071, %v2063, 0.0
        %v2089 = vsel %vm1887, %v2072, 0
        %v2092 = vsel %vm1887, %v2073, 0
        %v2095 = vsel %vm1887, %v2074, 0
        %v2098 = vsel %vm1887, %v2075, 0
        %2100 = vmatprep.subr.mxu0 0.0
        %2101 = vmatpush1.msra.mxu0 %v1371
        %2102 = vmatprep.subr.mxu0 0.0
        %2103 = vmatpush1.msra.mxu0 %v1372
        %2104 = vmatprep.subr.mxu0 0.0
        %2105 = vmatpush1.msra.mxu0 %v1373
        %2106 = vmatprep.subr.mxu0 0.0
        %2107 = vmatpush1.msra.mxu0 %v1374
        %2108 = vmatprep.subr.mxu0 0.0
        %2109 = vmatpush1.msra.mxu0 %v1375
        %2110 = vmatprep.subr.mxu0 0.0
        %2111 = vmatpush1.msra.mxu0 %v1376
        %2112 = vmatprep.subr.mxu0 0.0
        %2113 = vmatpush1.msra.mxu0 %v1377
        %2114 = vmatprep.subr.mxu0 0.0
        %2115 = vmatpush1.msra.mxu0 %v1378
        %2116 = vmatprep.subr.mxu0 0.0
        %2117 = vmatpush1.msra.mxu0 0.0
        %2118 = vmatprep.subr.mxu0 0.0
        %2119 = vmatpush1.msra.mxu0 0.0
        %2120 = vmatprep.subr.mxu0 0.0
        %2121 = vmatpush1.msra.mxu0 0.0
        %2122 = vmatprep.subr.mxu0 0.0
        %2123 = vmatpush1.msra.mxu0 0.0
        %2124 = vmatprep.subr.mxu0 0.0
        %2125 = vmatpush1.msra.mxu0 0.0
        %2126 = vmatprep.subr.mxu0 0.0
        %2127 = vmatpush1.msra.mxu0 0.0
        %2128 = vmatprep.subr.mxu0 0.0
        %2129 = vmatpush1.msra.mxu0 0.0
        %2130 = vmatprep.subr.mxu0 0.0
        %2131 = vmatpush1.msra.mxu0 0.0
        %2132 = vmatprep.subr.mxu0 0.0
        %2133 = vmatpush1.msra.mxu0 0.0
        %2134 = vmatprep.subr.mxu0 0.0
        %2135 = vmatpush1.msra.mxu0 0.0
        %2136 = vmatprep.subr.mxu0 0.0
        %2137 = vmatpush1.msra.mxu0 0.0
        %2138 = vmatprep.subr.mxu0 0.0
        %2139 = vmatpush1.msra.mxu0 0.0
        %2140 = vmatprep.subr.mxu0 0.0
        %2141 = vmatpush1.msra.mxu0 0.0
        %2142 = vmatprep.subr.mxu0 0.0
        %2143 = vmatpush1.msra.mxu0 0.0
        %2144 = vmatprep.subr.mxu0 0.0
        %2145 = vmatpush1.msra.mxu0 0.0
        %2146 = vmatprep.subr.mxu0 0.0
        %2147 = vmatpush1.msra.mxu0 0.0
        %2148 = vmatprep.subr.mxu0 0.0
        %2149 = vmatpush1.msra.mxu0 0.0
        %2150 = vmatprep.subr.mxu0 0.0
        %2151 = vmatpush1.msra.mxu0 0.0
        %2152 = vmatprep.subr.mxu0 0.0
        %2153 = vmatpush1.msra.mxu0 0.0
        %2154 = vmatprep.subr.mxu0 0.0
        %2155 = vmatpush1.msra.mxu0 0.0
        %2156 = vmatprep.subr.mxu0 0.0
        %2157 = vmatpush1.msra.mxu0 0.0
        %2158 = vmatprep.subr.mxu0 0.0
        %2159 = vmatpush1.msra.mxu0 0.0
        %2160 = vmatprep.subr.mxu0 0.0
        %2161 = vmatpush1.msra.mxu0 0.0
        %2162 = vmatprep.subr.mxu0 0.0
        %2163 = vmatpush1.msra.mxu0 0.0
        %2164 = vmatprep.mubr.f32.mxu0 0.0
        %2165 = vmatmul.mubr.f32.gmra.mrb[0].mxu0 %v2089
        %v2166 = vpop.f32.mrb[0].mxu0
        %v2167 = vadd.f32 0.0, %v2166
        %v2168 = vpop.f32.mrb[0].mxu0
        %2169 = vmatprep.mubr.f32.mxu0 0.0
        %2170 = vmatmul.mubr.f32.gmra.mrb[0].mxu0 %v2092
        %v2171 = vpop.f32.mrb[0].mxu0
        %v2172 = vadd.f32 0.0, %v2171
        %v2173 = vpop.f32.mrb[0].mxu0
        %2174 = vmatprep.mubr.f32.mxu0 0.0
        %2175 = vmatmul.mubr.f32.gmra.mrb[0].mxu0 %v2095
        %v2176 = vpop.f32.mrb[0].mxu0
        %v2177 = vadd.f32 0.0, %v2176
        %v2178 = vpop.f32.mrb[0].mxu0
        %2179 = vmatprep.mubr.f32.mxu0 0.0
        %2180 = vmatmul.mubr.f32.gmra.mrb[0].mxu0 %v2098
        %v2181 = vpop.f32.mrb[0].mxu0
        %v2182 = vadd.f32 0.0, %v2181
        %v2183 = vpop.f32.mrb[0].mxu0
        %2184 = vdwg.mxu0
        %v2186 = vsel %vm1887, %v2076, 0
        %v2189 = vsel %vm1887, %v2077, 0
        %v2192 = vsel %vm1887, %v2078, 0
        %v2195 = vsel %vm1887, %v2079, 0
        %2197 = vmatprep.subr.mxu0 0.0
        %2198 = vmatpush1.msra.mxu0 %v1379
        %2199 = vmatprep.subr.mxu0 0.0
        %2200 = vmatpush1.msra.mxu0 %v1380
        %2201 = vmatprep.subr.mxu0 0.0
        %2202 = vmatpush1.msra.mxu0 %v1381
        %2203 = vmatprep.subr.mxu0 0.0
        %2204 = vmatpush1.msra.mxu0 %v1382
        %2205 = vmatprep.subr.mxu0 0.0
        %2206 = vmatpush1.msra.mxu0 %v1383
        %2207 = vmatprep.subr.mxu0 0.0
        %2208 = vmatpush1.msra.mxu0 %v1384
        %2209 = vmatprep.subr.mxu0 0.0
        %2210 = vmatpush1.msra.mxu0 %v1385
        %2211 = vmatprep.subr.mxu0 0.0
        %2212 = vmatpush1.msra.mxu0 %v1386
        %2213 = vmatprep.subr.mxu0 0.0
        %2214 = vmatpush1.msra.mxu0 0.0
        %2215 = vmatprep.subr.mxu0 0.0
        %2216 = vmatpush1.msra.mxu0 0.0
        %2217 = vmatprep.subr.mxu0 0.0
        %2218 = vmatpush1.msra.mxu0 0.0
        %2219 = vmatprep.subr.mxu0 0.0
        %2220 = vmatpush1.msra.mxu0 0.0
        %2221 = vmatprep.subr.mxu0 0.0
        %2222 = vmatpush1.msra.mxu0 0.0
        %2223 = vmatprep.subr.mxu0 0.0
        %2224 = vmatpush1.msra.mxu0 0.0
        %2225 = vmatprep.subr.mxu0 0.0
        %2226 = vmatpush1.msra.mxu0 0.0
        %2227 = vmatprep.subr.mxu0 0.0
        %2228 = vmatpush1.msra.mxu0 0.0
        %2229 = vmatprep.subr.mxu0 0.0
        %2230 = vmatpush1.msra.mxu0 0.0
        %2231 = vmatprep.subr.mxu0 0.0
        %2232 = vmatpush1.msra.mxu0 0.0
        %2233 = vmatprep.subr.mxu0 0.0
        %2234 = vmatpush1.msra.mxu0 0.0
        %2235 = vmatprep.subr.mxu0 0.0
        %2236 = vmatpush1.msra.mxu0 0.0
        %2237 = vmatprep.subr.mxu0 0.0
        %2238 = vmatpush1.msra.mxu0 0.0
        %2239 = vmatprep.subr.mxu0 0.0
        %2240 = vmatpush1.msra.mxu0 0.0
        %2241 = vmatprep.subr.mxu0 0.0
        %2242 = vmatpush1.msra.mxu0 0.0
        %2243 = vmatprep.subr.mxu0 0.0
        %2244 = vmatpush1.msra.mxu0 0.0
        %2245 = vmatprep.subr.mxu0 0.0
        %2246 = vmatpush1.msra.mxu0 0.0
        %2247 = vmatprep.subr.mxu0 0.0
        %2248 = vmatpush1.msra.mxu0 0.0
        %2249 = vmatprep.subr.mxu0 0.0
        %2250 = vmatpush1.msra.mxu0 0.0
        %2251 = vmatprep.subr.mxu0 0.0
        %2252 = vmatpush1.msra.mxu0 0.0
        %2253 = vmatprep.subr.mxu0 0.0
        %2254 = vmatpush1.msra.mxu0 0.0
        %2255 = vmatprep.subr.mxu0 0.0
        %2256 = vmatpush1.msra.mxu0 0.0
        %2257 = vmatprep.subr.mxu0 0.0
        %2258 = vmatpush1.msra.mxu0 0.0
        %2259 = vmatprep.subr.mxu0 0.0
        %2260 = vmatpush1.msra.mxu0 0.0
        %2261 = vmatprep.mubr.f32.mxu0 0.0
        %2262 = vmatmul.mubr.f32.gmra.mrb[0].mxu0 %v2186
        %v2263 = vpop.f32.mrb[0].mxu0
        %v2264 = vadd.f32 0.0, %v2263
        %v2265 = vpop.f32.mrb[0].mxu0
        %2266 = vmatprep.mubr.f32.mxu0 0.0
        %2267 = vmatmul.mubr.f32.gmra.mrb[0].mxu0 %v2189
        %v2268 = vpop.f32.mrb[0].mxu0
        %v2269 = vadd.f32 0.0, %v2268
        %v2270 = vpop.f32.mrb[0].mxu0
        %2271 = vmatprep.mubr.f32.mxu0 0.0
        %2272 = vmatmul.mubr.f32.gmra.mrb[0].mxu0 %v2192
        %v2273 = vpop.f32.mrb[0].mxu0
        %v2274 = vadd.f32 0.0, %v2273
        %v2275 = vpop.f32.mrb[0].mxu0
        %2276 = vmatprep.mubr.f32.mxu0 0.0
        %2277 = vmatmul.mubr.f32.gmra.mrb[0].mxu0 %v2195
        %v2278 = vpop.f32.mrb[0].mxu0
        %v2279 = vadd.f32 0.0, %v2278
        %v2280 = vpop.f32.mrb[0].mxu0
        %2281 = vdwg.mxu0
        %v2283 = vsel %vm1887, %v2080, 0
        %v2286 = vsel %vm1887, %v2081, 0
        %v2289 = vsel %vm1887, %v2082, 0
        %v2292 = vsel %vm1887, %v2083, 0
        %2294 = vmatprep.subr.mxu0 0.0
        %2295 = vmatpush1.msra.mxu0 %v1387
        %2296 = vmatprep.subr.mxu0 0.0
        %2297 = vmatpush1.msra.mxu0 %v1388
        %2298 = vmatprep.subr.mxu0 0.0
        %2299 = vmatpush1.msra.mxu0 %v1389
        %2300 = vmatprep.subr.mxu0 0.0
        %2301 = vmatpush1.msra.mxu0 %v1390
        %2302 = vmatprep.subr.mxu0 0.0
        %2303 = vmatpush1.msra.mxu0 %v1391
        %2304 = vmatprep.subr.mxu0 0.0
        %2305 = vmatpush1.msra.mxu0 %v1392
        %2306 = vmatprep.subr.mxu0 0.0
        %2307 = vmatpush1.msra.mxu0 %v1393
        %2308 = vmatprep.subr.mxu0 0.0
        %2309 = vmatpush1.msra.mxu0 %v1394
        %2310 = vmatprep.subr.mxu0 0.0
        %2311 = vmatpush1.msra.mxu0 0.0
        %2312 = vmatprep.subr.mxu0 0.0
        %2313 = vmatpush1.msra.mxu0 0.0
        %2314 = vmatprep.subr.mxu0 0.0
        %2315 = vmatpush1.msra.mxu0 0.0
        %2316 = vmatprep.subr.mxu0 0.0
        %2317 = vmatpush1.msra.mxu0 0.0
        %2318 = vmatprep.subr.mxu0 0.0
        %2319 = vmatpush1.msra.mxu0 0.0
        %2320 = vmatprep.subr.mxu0 0.0
        %2321 = vmatpush1.msra.mxu0 0.0
        %2322 = vmatprep.subr.mxu0 0.0
        %2323 = vmatpush1.msra.mxu0 0.0
        %2324 = vmatprep.subr.mxu0 0.0
        %2325 = vmatpush1.msra.mxu0 0.0
        %2326 = vmatprep.subr.mxu0 0.0
        %2327 = vmatpush1.msra.mxu0 0.0
        %2328 = vmatprep.subr.mxu0 0.0
        %2329 = vmatpush1.msra.mxu0 0.0
        %2330 = vmatprep.subr.mxu0 0.0
        %2331 = vmatpush1.msra.mxu0 0.0
        %2332 = vmatprep.subr.mxu0 0.0
        %2333 = vmatpush1.msra.mxu0 0.0
        %2334 = vmatprep.subr.mxu0 0.0
        %2335 = vmatpush1.msra.mxu0 0.0
        %2336 = vmatprep.subr.mxu0 0.0
        %2337 = vmatpush1.msra.mxu0 0.0
        %2338 = vmatprep.subr.mxu0 0.0
        %2339 = vmatpush1.msra.mxu0 0.0
        %2340 = vmatprep.subr.mxu0 0.0
        %2341 = vmatpush1.msra.mxu0 0.0
        %2342 = vmatprep.subr.mxu0 0.0
        %2343 = vmatpush1.msra.mxu0 0.0
        %2344 = vmatprep.subr.mxu0 0.0
        %2345 = vmatpush1.msra.mxu0 0.0
        %2346 = vmatprep.subr.mxu0 0.0
        %2347 = vmatpush1.msra.mxu0 0.0
        %2348 = vmatprep.subr.mxu0 0.0
        %2349 = vmatpush1.msra.mxu0 0.0
        %2350 = vmatprep.subr.mxu0 0.0
        %2351 = vmatpush1.msra.mxu0 0.0
        %2352 = vmatprep.subr.mxu0 0.0
        %2353 = vmatpush1.msra.mxu0 0.0
        %2354 = vmatprep.subr.mxu0 0.0
        %2355 = vmatpush1.msra.mxu0 0.0
        %2356 = vmatprep.subr.mxu0 0.0
        %2357 = vmatpush1.msra.mxu0 0.0
        %2358 = vmatprep.mubr.f32.mxu0 0.0
        %2359 = vmatmul.mubr.f32.gmra.mrb[0].mxu0 %v2283
        %v2360 = vpop.f32.mrb[0].mxu0
        %v2361 = vadd.f32 0.0, %v2360
        %v2362 = vpop.f32.mrb[0].mxu0
        %2363 = vmatprep.mubr.f32.mxu0 0.0
        %2364 = vmatmul.mubr.f32.gmra.mrb[0].mxu0 %v2286
        %v2365 = vpop.f32.mrb[0].mxu0
        %v2366 = vadd.f32 0.0, %v2365
        %v2367 = vpop.f32.mrb[0].mxu0
        %2368 = vmatprep.mubr.f32.mxu0 0.0
        %2369 = vmatmul.mubr.f32.gmra.mrb[0].mxu0 %v2289
        %v2370 = vpop.f32.mrb[0].mxu0
        %v2371 = vadd.f32 0.0, %v2370
        %v2372 = vpop.f32.mrb[0].mxu0
        %2373 = vmatprep.mubr.f32.mxu0 0.0
        %2374 = vmatmul.mubr.f32.gmra.mrb[0].mxu0 %v2292
        %v2375 = vpop.f32.mrb[0].mxu0
        %v2376 = vadd.f32 0.0, %v2375
        %v2377 = vpop.f32.mrb[0].mxu0
        %2378 = vdwg.mxu0
        %v2380 = vsel %vm1887, %v2084, 0
        %v2383 = vsel %vm1887, %v2085, 0
        %v2386 = vsel %vm1887, %v2086, 0
        %v2389 = vsel %vm1887, %v2087, 0
        %2391 = vmatprep.subr.mxu0 0.0
        %2392 = vmatpush1.msra.mxu0 %v1395
        %2393 = vmatprep.subr.mxu0 0.0
        %2394 = vmatpush1.msra.mxu0 %v1396
        %2395 = vmatprep.subr.mxu0 0.0
        %2396 = vmatpush1.msra.mxu0 %v1397
        %2397 = vmatprep.subr.mxu0 0.0
        %2398 = vmatpush1.msra.mxu0 %v1398
        %2399 = vmatprep.subr.mxu0 0.0
        %2400 = vmatpush1.msra.mxu0 %v1399
        %2401 = vmatprep.subr.mxu0 0.0
        %2402 = vmatpush1.msra.mxu0 %v1400
        %2403 = vmatprep.subr.mxu0 0.0
        %2404 = vmatpush1.msra.mxu0 %v1401
        %2405 = vmatprep.subr.mxu0 0.0
        %2406 = vmatpush1.msra.mxu0 %v1402
        %2407 = vmatprep.subr.mxu0 0.0
        %2408 = vmatpush1.msra.mxu0 0.0
        %2409 = vmatprep.subr.mxu0 0.0
        %2410 = vmatpush1.msra.mxu0 0.0
        %2411 = vmatprep.subr.mxu0 0.0
        %2412 = vmatpush1.msra.mxu0 0.0
        %2413 = vmatprep.subr.mxu0 0.0
        %2414 = vmatpush1.msra.mxu0 0.0
        %2415 = vmatprep.subr.mxu0 0.0
        %2416 = vmatpush1.msra.mxu0 0.0
        %2417 = vmatprep.subr.mxu0 0.0
        %2418 = vmatpush1.msra.mxu0 0.0
        %2419 = vmatprep.subr.mxu0 0.0
        %2420 = vmatpush1.msra.mxu0 0.0
        %2421 = vmatprep.subr.mxu0 0.0
        %2422 = vmatpush1.msra.mxu0 0.0
        %2423 = vmatprep.subr.mxu0 0.0
        %2424 = vmatpush1.msra.mxu0 0.0
        %2425 = vmatprep.subr.mxu0 0.0
        %2426 = vmatpush1.msra.mxu0 0.0
        %2427 = vmatprep.subr.mxu0 0.0
        %2428 = vmatpush1.msra.mxu0 0.0
        %2429 = vmatprep.subr.mxu0 0.0
        %2430 = vmatpush1.msra.mxu0 0.0
        %2431 = vmatprep.subr.mxu0 0.0
        %2432 = vmatpush1.msra.mxu0 0.0
        %2433 = vmatprep.subr.mxu0 0.0
        %2434 = vmatpush1.msra.mxu0 0.0
        %2435 = vmatprep.subr.mxu0 0.0
        %2436 = vmatpush1.msra.mxu0 0.0
        %2437 = vmatprep.subr.mxu0 0.0
        %2438 = vmatpush1.msra.mxu0 0.0
        %2439 = vmatprep.subr.mxu0 0.0
        %2440 = vmatpush1.msra.mxu0 0.0
        %2441 = vmatprep.subr.mxu0 0.0
        %2442 = vmatpush1.msra.mxu0 0.0
        %2443 = vmatprep.subr.mxu0 0.0
        %2444 = vmatpush1.msra.mxu0 0.0
        %2445 = vmatprep.subr.mxu0 0.0
        %2446 = vmatpush1.msra.mxu0 0.0
        %2447 = vmatprep.subr.mxu0 0.0
        %2448 = vmatpush1.msra.mxu0 0.0
        %2449 = vmatprep.subr.mxu0 0.0
        %2450 = vmatpush1.msra.mxu0 0.0
        %2451 = vmatprep.subr.mxu0 0.0
        %2452 = vmatpush1.msra.mxu0 0.0
        %2453 = vmatprep.subr.mxu0 0.0
        %2454 = vmatpush1.msra.mxu0 0.0
        %2455 = vmatprep.mubr.f32.mxu0 0.0
        %2456 = vmatmul.mubr.f32.gmra.mrb[0].mxu0 %v2380
        %v2457 = vpop.f32.mrb[0].mxu0
        %v2458 = vadd.f32 0.0, %v2457
        %v2459 = vpop.f32.mrb[0].mxu0
        %2460 = vmatprep.mubr.f32.mxu0 0.0
        %2461 = vmatmul.mubr.f32.gmra.mrb[0].mxu0 %v2383
        %v2462 = vpop.f32.mrb[0].mxu0
        %v2463 = vadd.f32 0.0, %v2462
        %v2464 = vpop.f32.mrb[0].mxu0
        %2465 = vmatprep.mubr.f32.mxu0 0.0
        %2466 = vmatmul.mubr.f32.gmra.mrb[0].mxu0 %v2386
        %v2467 = vpop.f32.mrb[0].mxu0
        %v2468 = vadd.f32 0.0, %v2467
        %v2469 = vpop.f32.mrb[0].mxu0
        %2470 = vmatprep.mubr.f32.mxu0 0.0
        %2471 = vmatmul.mubr.f32.gmra.mrb[0].mxu0 %v2389
        %v2472 = vpop.f32.mrb[0].mxu0
        %v2473 = vadd.f32 0.0, %v2472
        %v2474 = vpop.f32.mrb[0].mxu0
        %2475 = vdwg.mxu0
        %2476 = vst.msk [vmem:[#allocation5] sm:$0xff] %vm1250, %v2167
        %2477 = vst.msk [vmem:[#allocation5 + $0x8] sm:$0xff] %vm1250, %v2172
        %2478 = vst.msk [vmem:[#allocation5 + $0x10] sm:$0xff] %vm1250, %v2177
        %2479 = vst.msk [vmem:[#allocation5 + $0x18] sm:$0xff] %vm1250, %v2182
        %2484 = vrot.lane.b32.xlu0 %v2264, 8
        %v2485 = vpop.permute.xlu0 %2484
        %2486 = vrot.lane.b32.xlu0 %v2269, 8
        %v2487 = vpop.permute.xlu0 %2486
        %2488 = vrot.lane.b32.xlu0 %v2274, 8
        %v2489 = vpop.permute.xlu0 %2488
        %2490 = vrot.lane.b32.xlu0 %v2279, 8
        %v2491 = vpop.permute.xlu0 %2490
        %vm2496 = vcmask 130112
        %2497 = vst.msk [vmem:[#allocation5] sm:$0xff] %vm2496, %v2485
        %2498 = vst.msk [vmem:[#allocation5 + $0x8] sm:$0xff] %vm2496, %v2487
        %2499 = vst.msk [vmem:[#allocation5 + $0x10] sm:$0xff] %vm2496, %v2489
        %2500 = vst.msk [vmem:[#allocation5 + $0x18] sm:$0xff] %vm2496, %v2491
        %2505 = vrot.lane.b32.xlu0 %v2361, 16
        %v2506 = vpop.permute.xlu0 %2505
        %2507 = vrot.lane.b32.xlu0 %v2366, 16
        %v2508 = vpop.permute.xlu0 %2507
        %2509 = vrot.lane.b32.xlu0 %v2371, 16
        %v2510 = vpop.permute.xlu0 %2509
        %2511 = vrot.lane.b32.xlu0 %v2376, 16
        %v2512 = vpop.permute.xlu0 %2511
        %vm2517 = vcmask 195712
        %2518 = vst.msk [vmem:[#allocation5] sm:$0xff] %vm2517, %v2506
        %2519 = vst.msk [vmem:[#allocation5 + $0x8] sm:$0xff] %vm2517, %v2508
        %2520 = vst.msk [vmem:[#allocation5 + $0x10] sm:$0xff] %vm2517, %v2510
        %2521 = vst.msk [vmem:[#allocation5 + $0x18] sm:$0xff] %vm2517, %v2512
        %2526 = vrot.lane.b32.xlu0 %v2458, 24
        %v2527 = vpop.permute.xlu0 %2526
        %2528 = vrot.lane.b32.xlu0 %v2463, 24
        %v2529 = vpop.permute.xlu0 %2528
        %2530 = vrot.lane.b32.xlu0 %v2468, 24
        %v2531 = vpop.permute.xlu0 %2530
        %2532 = vrot.lane.b32.xlu0 %v2473, 24
        %v2533 = vpop.permute.xlu0 %2532
        %vm2538 = vcmask 261312
        %2539 = vst.msk [vmem:[#allocation5] sm:$0xff] %vm2538, %v2527
        %2540 = vst.msk [vmem:[#allocation5 + $0x8] sm:$0xff] %vm2538, %v2529
        %2541 = vst.msk [vmem:[#allocation5 + $0x10] sm:$0xff] %vm2538, %v2531
        %2542 = vst.msk [vmem:[#allocation5 + $0x18] sm:$0xff] %vm2538, %v2533
        %v2543 = vld [vmem:[#allocation5] sm:$0xff]
        %v2544 = vld [vmem:[#allocation5 + $0x8] sm:$0xff]
        %v2545 = vld [vmem:[#allocation5 + $0x10] sm:$0xff]
        %v2546 = vld [vmem:[#allocation5 + $0x18] sm:$0xff]
        %v2547 = vld [vmem:[#allocation20] sm:$0xff]
        %v2548 = vld [vmem:[#allocation20 + $0x8] sm:$0xff]
        %v2549 = vld [vmem:[#allocation20 + $0x10] sm:$0xff]
        %v2550 = vld [vmem:[#allocation20 + $0x18] sm:$0xff]
        %v2551 = vld [vmem:[#allocation21] sm:$0x1]
        %v2553 = vlaneseq
        %v2554 = vshrl.u32 %v2553, 7
        %v2555 = vsub.s32 0, %v2554
        %v2556 = vrot.slane %v2551, %v2555
        %v2559 = vsel %vm1152, %v2543, 0
        %v2562 = vsel %vm1152, %v2544, 0
        %v2565 = vsel %vm1152, %v2545, 0
        %v2568 = vsel %vm1152, %v2546, 0
        %2570 = vmatprep.subr.mxu0 0.0
        %2571 = vmatpush1.msra.mxu0 %v2547
        %2572 = vmatprep.subr.mxu0 0.0
        %2573 = vmatpush1.msra.mxu0 %v2548
        %2574 = vmatprep.subr.mxu0 0.0
        %2575 = vmatpush1.msra.mxu0 %v2549
        %2576 = vmatprep.subr.mxu0 0.0
        %2577 = vmatpush1.msra.mxu0 %v2550
        %2578 = vmatprep.subr.mxu0 0.0
        %2579 = vmatpush1.msra.mxu0 0.0
        %2580 = vmatprep.subr.mxu0 0.0
        %2581 = vmatpush1.msra.mxu0 0.0
        %2582 = vmatprep.subr.mxu0 0.0
        %2583 = vmatpush1.msra.mxu0 0.0
        %2584 = vmatprep.subr.mxu0 0.0
        %2585 = vmatpush1.msra.mxu0 0.0
        %2586 = vmatprep.subr.mxu0 0.0
        %2587 = vmatpush1.msra.mxu0 0.0
        %2588 = vmatprep.subr.mxu0 0.0
        %2589 = vmatpush1.msra.mxu0 0.0
        %2590 = vmatprep.subr.mxu0 0.0
        %2591 = vmatpush1.msra.mxu0 0.0
        %2592 = vmatprep.subr.mxu0 0.0
        %2593 = vmatpush1.msra.mxu0 0.0
        %2594 = vmatprep.subr.mxu0 0.0
        %2595 = vmatpush1.msra.mxu0 0.0
        %2596 = vmatprep.subr.mxu0 0.0
        %2597 = vmatpush1.msra.mxu0 0.0
        %2598 = vmatprep.subr.mxu0 0.0
        %2599 = vmatpush1.msra.mxu0 0.0
        %2600 = vmatprep.subr.mxu0 0.0
        %2601 = vmatpush1.msra.mxu0 0.0
        %2602 = vmatprep.subr.mxu0 0.0
        %2603 = vmatpush1.msra.mxu0 0.0
        %2604 = vmatprep.subr.mxu0 0.0
        %2605 = vmatpush1.msra.mxu0 0.0
        %2606 = vmatprep.subr.mxu0 0.0
        %2607 = vmatpush1.msra.mxu0 0.0
        %2608 = vmatprep.subr.mxu0 0.0
        %2609 = vmatpush1.msra.mxu0 0.0
        %2610 = vmatprep.subr.mxu0 0.0
        %2611 = vmatpush1.msra.mxu0 0.0
        %2612 = vmatprep.subr.mxu0 0.0
        %2613 = vmatpush1.msra.mxu0 0.0
        %2614 = vmatprep.subr.mxu0 0.0
        %2615 = vmatpush1.msra.mxu0 0.0
        %2616 = vmatprep.subr.mxu0 0.0
        %2617 = vmatpush1.msra.mxu0 0.0
        %2618 = vmatprep.subr.mxu0 0.0
        %2619 = vmatpush1.msra.mxu0 0.0
        %2620 = vmatprep.subr.mxu0 0.0
        %2621 = vmatpush1.msra.mxu0 0.0
        %2622 = vmatprep.subr.mxu0 0.0
        %2623 = vmatpush1.msra.mxu0 0.0
        %2624 = vmatprep.subr.mxu0 0.0
        %2625 = vmatpush1.msra.mxu0 0.0
        %2626 = vmatprep.subr.mxu0 0.0
        %2627 = vmatpush1.msra.mxu0 0.0
        %2628 = vmatprep.subr.mxu0 0.0
        %2629 = vmatpush1.msra.mxu0 0.0
        %2630 = vmatprep.subr.mxu0 0.0
        %2631 = vmatpush1.msra.mxu0 0.0
        %2632 = vmatprep.subr.mxu0 0.0
        %2633 = vmatpush1.msra.mxu0 0.0
        %2634 = vmatprep.mubr.f32.mxu0 0.0
        %2635 = vmatmul.mubr.f32.gmra.mrb[0].mxu0 %v2559
        %v2636 = vpop.f32.mrb[0].mxu0
        %v2637 = vadd.f32 %v2556, %v2636
        %v2638 = vpop.f32.mrb[0].mxu0
        %2639 = vmatprep.mubr.f32.mxu0 0.0
        %2640 = vmatmul.mubr.f32.gmra.mrb[0].mxu0 %v2562
        %v2641 = vpop.f32.mrb[0].mxu0
        %v2642 = vadd.f32 %v2556, %v2641
        %v2643 = vpop.f32.mrb[0].mxu0
        %2644 = vmatprep.mubr.f32.mxu0 0.0
        %2645 = vmatmul.mubr.f32.gmra.mrb[0].mxu0 %v2565
        %v2646 = vpop.f32.mrb[0].mxu0
        %v2647 = vadd.f32 %v2556, %v2646
        %v2648 = vpop.f32.mrb[0].mxu0
        %2649 = vmatprep.mubr.f32.mxu0 0.0
        %2650 = vmatmul.mubr.f32.gmra.mrb[0].mxu0 %v2568
        %v2651 = vpop.f32.mrb[0].mxu0
        %v2652 = vadd.f32 %v2556, %v2651
        %v2653 = vpop.f32.mrb[0].mxu0
        %2654 = vdwg.mxu0
        %2655 = vst.msk [vmem:[%s594] sm:$0xff] %vm1152, %v2637
        %2656 = vst.msk [vmem:[%s594 + $0x8] sm:$0xff] %vm1152, %v2642
        %2657 = vst.msk [vmem:[%s594 + $0x10] sm:$0xff] %vm1152, %v2647
        %2658 = vst.msk [vmem:[%s594 + $0x18] sm:$0xff] %vm1152, %v2652
        %s2659 = sand.u32 %s292, 1
        %s2660 = scalar_lea.sflag [#allocation8], %s2659
        %s2661 = sand.u32 %s292, 1
        %s2662 = smul.addr %s2661, 32
        %s2663 = scalar_lea.vmem [#allocation23], %s2662
        // Predicated region
        $region105: #{tpu_custom_call.1} parent=59 // pred_check
          %p2664 = pneg %p302
        $region106: #{tpu_custom_call.1} parent=59 // pred_check_branch
          %2666 = sbr.rel (%p2664) target = $region108
        $region107: #{tpu_custom_call.1} parent=59 // pred_region
          %s2667 = smul.u32 4, %s41
          %s2669 = ssub.s32 512, 512
          %2670 = vsyncadd %s2660, %s2669
          %s2671 = smul.addr %s40, 8
          %s2672 = sadd.s32 %s2667, %s2671
          %s2673 = smul.addr %s2672, 128
          %s2674 = scalar_lea.hbm %s10, %s2673
          %s2675 = sshll.u32 %s2663, 4
          %s2676 = int_to_ptr.vmem [resolvable:$true] %s2675
          %2681 = dma.vmem_to_hbm [thread:$0]  %s2676, 512, %s2674, %s2660, 128, 128, 8
        $region108: #{tpu_custom_call.1} parent=59 // pred_fallthru
          _
      $region60: #{tpu_custom_call.1} parent=5 // pred_fallthru
        _
      %p2682 = scmp.le.s32.totalorder 2, %s31
      // Predicated region
      $region109: #{tpu_custom_call.1} parent=5 // pred_check
        %p2683 = pneg %p2682
      $region110: #{tpu_custom_call.1} parent=5 // pred_check_branch
        %2685 = sbr.rel (%p2683) target = $region112
      $region111: #{tpu_custom_call.1} parent=5 // pred_region
        %s2686 = ssub.s32 %s31, 2
        // Predicated region
        $region113: #{tpu_custom_call.1} parent=111 // pred_check
          %p2687 = pneg %p308
        $region114: #{tpu_custom_call.1} parent=111 // pred_check_branch
          %2689 = sbr.rel (%p2687) target = $region116
        $region115: #{tpu_custom_call.1} parent=111 // pred_region
          %s2690 = sand.u32 %s293, 1
          %s2691 = scalar_lea.sflag [#allocation8], %s2690
          %s2692 = sand.u32 %s293, 1
          %s2693 = smul.addr %s2692, 32
          %s2694 = scalar_lea.vmem [#allocation23], %s2693
          %2695 = dma.done %s2691, 512
        $region116: #{tpu_custom_call.1} parent=111 // pred_fallthru
          _
      $region112: #{tpu_custom_call.1} parent=5 // pred_fallthru
        _
    $region6: #{tpu_custom_call.1} parent=1 // loop_footer
      %s35 = sadd.s32 1, %s31
    $region7: #{tpu_custom_call.1} parent=1 // loop_footer_branch
      %30 = sbr.rel target = $region3
    $region8: #{tpu_custom_call.1} parent=1 // loop_exit
      _
    %2696 = vsyncpa [#allocation7], 1
    %s2697 = scalar_lea.sflag [#allocation7], 1
    %2698 = vsyncpa %s2697, 1
    %2699 = vsyncpa [#allocation10], 1
    %s2700 = scalar_lea.sflag [#allocation10], 1
    %2701 = vsyncpa %s2700, 1
    %2702 = vsyncpa [#allocation13], 1
    %s2703 = scalar_lea.sflag [#allocation13], 1
    %2704 = vsyncpa %s2703, 1
    %2705 = vsyncpa [#allocation16], 1
    %2706 = vsyncpa [#allocation19], 1
    %2707 = vsyncpa [#allocation22], 1
    %2708 = vsyncpa [#allocation8], 1
    %s2709 = scalar_lea.sflag [#allocation8], 1
    %2710 = vsyncpa %s2709, 1

</llo_original>
